<compile_context>
chip_gen: v6e
topology: v6e:2x2x1
jax: 0.10.0
libtpu: 0.0.40
codegen_flags: <defaults>
</compile_context>

<pallas_src>
import jax
import jax.numpy as jnp
from jax.experimental import pallas as pl
from jax.experimental.pallas import tpu as pltpu

_EPS = 1e-5


def _bn_train(x, gamma, beta):
    """Training-mode BatchNorm over the sublane (spatial) axis, two-pass.

    x: [P, C] f32 (channels on lanes), gamma/beta: [1, C] f32.
    Matches torch BatchNorm2d training forward (biased variance, eps=1e-5).
    """
    mean = jnp.mean(x, axis=0, keepdims=True)              # [1, C]
    d = x - mean
    var = jnp.mean(d * d, axis=0, keepdims=True)           # [1, C] (two-pass, biased)
    scale = gamma * jax.lax.rsqrt(var + _EPS)               # [1, C]
    return d * scale + beta
    # TODO(synk): running_mean/running_var buffer updates (momentum=0.1) of
    # BatchNorm are not reproduced -- only the forward output is required.


def _se_block_kernel(x196_ref, x193_ref, x187_ref,
                     w63t_ref, b63_ref,
                     g40_ref, be40_ref, g41_ref, be41_ref,
                     w64_hbm, w65_hbm,
                     out_ref,
                     w64_vmem, w65_vmem, sems):
    # Kick off both 440x440 weight DMAs immediately; w64 overlaps the gate and
    # the layout flip, w65 additionally overlaps the first matmul + BN + relu.
    w64_cp = pltpu.make_async_copy(w64_hbm, w64_vmem, sems.at[0])
    w65_cp = pltpu.make_async_copy(w65_hbm, w65_vmem, sems.at[1])
    w64_cp.start()
    w65_cp.start()

    # --- conv2d63 (110 -> 440, 1x1, bias) + sigmoid: lane-dense [1,440] gate --
    g = jnp.dot(x196_ref[...], w63t_ref[...],
                preferred_element_type=jnp.float32) + b63_ref[...]     # [1, 440]
    s = jax.nn.sigmoid(g)                                              # [1, 440]

    # --- flip activations to channels-on-lanes [P, C] = [49, 440] ------------
    x193_t = x193_ref[...].T                                           # [49, 440]
    x199 = s * x193_t                                                  # gate bcast over sublanes

    # --- conv2d64 (440 -> 440, 1x1, no bias): X[49,440] @ W[440,440], f32 ----
    w64_cp.wait()
    x200 = jnp.dot(x199, w64_vmem[...], preferred_element_type=jnp.float32)

    # --- batchnorm2d40 (training-mode batch statistics) ----------------------
    x201 = _bn_train(x200, g40_ref[...], be40_ref[...])

    # --- residual add + ReLU --------------------------------------------------
    x187_t = x187_ref[...].T                                           # [49, 440]
    x203 = jnp.maximum(x187_t + x201, 0.0)

    # --- conv2d65 (440 -> 440, 1x1, no bias) ----------------------------------
    w65_cp.wait()
    x204 = jnp.dot(x203, w65_vmem[...], preferred_element_type=jnp.float32)

    # --- batchnorm2d41, then back to channel-major [C, P] for a free NCHW ----
    x205 = _bn_train(x204, g41_ref[...], be41_ref[...])
    out_ref[...] = x205.T                                              # [440, 49]


def se_block_forward(x196, x193, x187, params):
    """x196: [N,110,1,1], x193/x187: [N,440,7,7] (NCHW, f32). Returns [N,440,7,7]."""
    (w63t, b63, w64t, g40, be40, w65t, g41, be41) = params
    N, Csq, _, _ = x196.shape
    _, C, H, W = x193.shape
    assert N == 1, "kernel specialized to N=1 (reference module shapes)"
    P = H * W

    # Free reshapes only (no transposes, no extra HBM round trips).
    x196_row = x196.reshape(1, Csq)        # [1, 110]
    x193_slab = x193.reshape(C, P)         # [440, 49]
    x187_slab = x187.reshape(C, P)         # [440, 49]

    vmem = pl.BlockSpec(memory_space=pltpu.MemorySpace.VMEM)
    hbm = pl.BlockSpec(memory_space=pl.ANY)   # weights: manual async copy in-kernel

    out_slab = pl.pallas_call(
        _se_block_kernel,
        out_shape=jax.ShapeDtypeStruct((C, P), jnp.float32),
        in_specs=[vmem] * 9 + [hbm, hbm],
        out_specs=vmem,
        scratch_shapes=[
            pltpu.VMEM((C, C), jnp.float32),     # w64 landing buffer
            pltpu.VMEM((C, C), jnp.float32),     # w65 landing buffer
            pltpu.SemaphoreType.DMA((2,)),
        ],
    )(x196_row, x193_slab, x187_slab,
      w63t, b63, g40, be40, g41, be41,
      w64t, w65t)

    # Free reshape back to NCHW.
    return out_slab.reshape(N, C, H, W)


def init_params(key, c_sq=110, c=440):
    ks = jax.random.split(key, 8)
    # PyTorch layouts (1x1 kernels squeezed): conv weights [Cout, Cin], f32.
    w63 = jax.random.normal(ks[0], (c, c_sq), jnp.float32) * 0.05
    b63 = jax.random.normal(ks[1], (1, c), jnp.float32) * 0.05
    w64 = jax.random.normal(ks[2], (c, c), jnp.float32) * 0.05
    w65 = jax.random.normal(ks[3], (c, c), jnp.float32) * 0.05
    # BatchNorm affine params as lane-dense [1, C] rows.
    g40 = 1.0 + 0.1 * jax.random.normal(ks[4], (1, c), jnp.float32)
    be40 = 0.1 * jax.random.normal(ks[5], (1, c), jnp.float32)
    g41 = 1.0 + 0.1 * jax.random.normal(ks[6], (1, c), jnp.float32)
    be41 = 0.1 * jax.random.normal(ks[7], (1, c), jnp.float32)
    # Pre-transpose conv weights to [Cin, Cout] so the in-kernel 1x1 convs are
    # X[P, Cin] @ W[Cin, Cout] with lane-dense [P, Cout] outputs.
    return (w63.T, b63, w64.T, g40, be40, w65.T, g41, be41)


def _reference_forward(x196, x193, x187, params):
    """Pure-jnp reference of the fused block (training-mode BN, f32)."""
    (w63t, b63, w64t, g40, be40, w65t, g41, be41) = params
    N, C, H, W = x193.shape
    P = H * W
    hp = jax.lax.Precision.HIGHEST

    def bn(x, gamma, beta):
        mean = jnp.mean(x, axis=0, keepdims=True)
        var = jnp.mean((x - mean) ** 2, axis=0, keepdims=True)
        return (x - mean) * (gamma * jax.lax.rsqrt(var + _EPS)) + beta

    s = jax.nn.sigmoid(jnp.dot(x196.reshape(1, -1), w63t, precision=hp) + b63)
    x199 = x193.reshape(C, P).T * s
    x201 = bn(jnp.dot(x199, w64t, precision=hp), g40, be40)
    x203 = jnp.maximum(x187.reshape(C, P).T + x201, 0.0)
    x205 = bn(jnp.dot(x203, w65t, precision=hp), g41, be41)
    return x205.T.reshape(N, C, H, W)


if __name__ == "__main__":
    key = jax.random.PRNGKey(0)
    k1, k2, k3, kp = jax.random.split(key, 4)

    # Shapes taken directly from the PyTorch module.
    x196 = jax.random.normal(k1, (1, 110, 1, 1), jnp.float32)
    x193 = jax.random.normal(k2, (1, 440, 7, 7), jnp.float32)
    x187 = jax.random.normal(k3, (1, 440, 7, 7), jnp.float32)

    params = init_params(kp)

    fwd = jax.jit(se_block_forward)
    out = fwd(x196, x193, x187, params)
    jax.block_until_ready(out)
    assert out.shape == (1, 440, 7, 7)

    ref = _reference_forward(x196, x193, x187, params)
    max_err = float(jnp.max(jnp.abs(out - ref)))
    assert max_err < 5e-2, f"max abs error vs reference: {max_err}"

    print("KERNEL_OK")
</pallas_src>

<mosaic_0001>
module attributes {stable_mosaic.version = 11 : i64} {
  func.func @_se_block_kernel(%arg0: memref<1x110xf32, #tpu.memory_space<vmem>>, %arg1: memref<440x49xf32, #tpu.memory_space<vmem>>, %arg2: memref<440x49xf32, #tpu.memory_space<vmem>>, %arg3: memref<110x440xf32, #tpu.memory_space<vmem>>, %arg4: memref<1x440xf32, #tpu.memory_space<vmem>>, %arg5: memref<1x440xf32, #tpu.memory_space<vmem>>, %arg6: memref<1x440xf32, #tpu.memory_space<vmem>>, %arg7: memref<1x440xf32, #tpu.memory_space<vmem>>, %arg8: memref<1x440xf32, #tpu.memory_space<vmem>>, %arg9: memref<440x440xf32, #tpu.memory_space<any>>, %arg10: memref<440x440xf32, #tpu.memory_space<any>>, %arg11: memref<440x49xf32, #tpu.memory_space<vmem>>, %arg12: memref<440x440xf32, #tpu.memory_space<vmem>>, %arg13: memref<440x440xf32, #tpu.memory_space<vmem>>, %arg14: memref<2x!tpu.dma_semaphore, #tpu.memory_space<semaphore_mem>>) attributes {dimension_semantics = [], scalar_prefetch = 0 : i64, scratch_operands = 3 : i64, tpu.core_type = #tpu.core_type<tc>} {
    %c0_i32 = arith.constant 0 : i32
    %0 = tpu.memref_slice %arg14[%c0_i32] : memref<2x!tpu.dma_semaphore, #tpu.memory_space<semaphore_mem>> -> memref<1x!tpu.dma_semaphore, #tpu.memory_space<semaphore_mem>>
    %1 = tpu.memref_squeeze %0 : memref<1x!tpu.dma_semaphore, #tpu.memory_space<semaphore_mem>> -> memref<!tpu.dma_semaphore, #tpu.memory_space<semaphore_mem>>
    tpu.enqueue_dma source(%arg9 : memref<440x440xf32, #tpu.memory_space<any>>) target(%arg12 : memref<440x440xf32, #tpu.memory_space<vmem>>) target_semaphore(%1 : memref<!tpu.dma_semaphore, #tpu.memory_space<semaphore_mem>>)
    %c1_i32 = arith.constant 1 : i32
    %2 = tpu.memref_slice %arg14[%c1_i32] : memref<2x!tpu.dma_semaphore, #tpu.memory_space<semaphore_mem>> -> memref<1x!tpu.dma_semaphore, #tpu.memory_space<semaphore_mem>>
    %3 = tpu.memref_squeeze %2 : memref<1x!tpu.dma_semaphore, #tpu.memory_space<semaphore_mem>> -> memref<!tpu.dma_semaphore, #tpu.memory_space<semaphore_mem>>
    tpu.enqueue_dma source(%arg10 : memref<440x440xf32, #tpu.memory_space<any>>) target(%arg13 : memref<440x440xf32, #tpu.memory_space<vmem>>) target_semaphore(%3 : memref<!tpu.dma_semaphore, #tpu.memory_space<semaphore_mem>>)
    %c0 = arith.constant 0 : index
    %c0_0 = arith.constant 0 : index
    %4 = vector.load %arg0[%c0, %c0_0] : memref<1x110xf32, #tpu.memory_space<vmem>>, vector<1x110xf32>
    %c0_1 = arith.constant 0 : index
    %c0_2 = arith.constant 0 : index
    %5 = vector.load %arg3[%c0_1, %c0_2] : memref<110x440xf32, #tpu.memory_space<vmem>>, vector<110x440xf32>
    %cst = arith.constant dense<0.000000e+00> : vector<1x440xf32>
    %6 = tpu.matmul %4, %5, %cst {dimension_numbers = #tpu.dot_dimension_numbers<[1], [0], [0], [1], [0, 0, 1, 1], [], []>} : vector<1x110xf32>, vector<110x440xf32>, vector<1x440xf32> -> vector<1x440xf32>
    %c0_3 = arith.constant 0 : index
    %c0_4 = arith.constant 0 : index
    %7 = vector.load %arg4[%c0_3, %c0_4] : memref<1x440xf32, #tpu.memory_space<vmem>>, vector<1x440xf32>
    %8 = arith.addf %6, %7 : vector<1x440xf32>
    %9 = arith.negf %8 : vector<1x440xf32>
    %10 = math.exp %9 : vector<1x440xf32>
    %cst_5 = arith.constant 1.000000e+00 : f32
    %11 = vector.broadcast %cst_5 : f32 to vector<1x440xf32>
    %12 = arith.addf %11, %10 : vector<1x440xf32>
    %13 = arith.divf %11, %12 : vector<1x440xf32>
    %c0_6 = arith.constant 0 : index
    %c0_7 = arith.constant 0 : index
    %14 = vector.load %arg1[%c0_6, %c0_7] : memref<440x49xf32, #tpu.memory_space<vmem>>, vector<440x49xf32>
    %15 = tpu.transpose %14, [1, 0] : vector<440x49xf32> -> vector<49x440xf32>
    %16 = vector.broadcast %13 : vector<1x440xf32> to vector<49x440xf32>
    %17 = arith.mulf %16, %15 : vector<49x440xf32>
    %c0_i32_8 = arith.constant 0 : i32
    %18 = tpu.memref_slice %arg14[%c0_i32_8] : memref<2x!tpu.dma_semaphore, #tpu.memory_space<semaphore_mem>> -> memref<1x!tpu.dma_semaphore, #tpu.memory_space<semaphore_mem>>
    %19 = tpu.memref_squeeze %18 : memref<1x!tpu.dma_semaphore, #tpu.memory_space<semaphore_mem>> -> memref<!tpu.dma_semaphore, #tpu.memory_space<semaphore_mem>>
    tpu.wait_dma2 semaphore(%19 : memref<!tpu.dma_semaphore, #tpu.memory_space<semaphore_mem>>) src(%arg9 : memref<440x440xf32, #tpu.memory_space<any>>) dst(%arg12 : memref<440x440xf32, #tpu.memory_space<vmem>>)
    %c0_9 = arith.constant 0 : index
    %c0_10 = arith.constant 0 : index
    %20 = vector.load %arg12[%c0_9, %c0_10] : memref<440x440xf32, #tpu.memory_space<vmem>>, vector<440x440xf32>
    %cst_11 = arith.constant dense<0.000000e+00> : vector<49x440xf32>
    %21 = tpu.matmul %17, %20, %cst_11 {dimension_numbers = #tpu.dot_dimension_numbers<[1], [0], [0], [1], [0, 0, 1, 1], [], []>} : vector<49x440xf32>, vector<440x440xf32>, vector<49x440xf32> -> vector<49x440xf32>
    %c0_12 = arith.constant 0 : index
    %c0_13 = arith.constant 0 : index
    %22 = vector.load %arg5[%c0_12, %c0_13] : memref<1x440xf32, #tpu.memory_space<vmem>>, vector<1x440xf32>
    %c0_14 = arith.constant 0 : index
    %c0_15 = arith.constant 0 : index
    %23 = vector.load %arg6[%c0_14, %c0_15] : memref<1x440xf32, #tpu.memory_space<vmem>>, vector<1x440xf32>
    %cst_16 = arith.constant dense<0.000000e+00> : vector<440xf32>
    %24 = vector.multi_reduction <add>, %21, %cst_16 [0] : vector<49x440xf32> to vector<440xf32>
    %25 = vector.shape_cast %24 : vector<440xf32> to vector<1x440xf32>
    %cst_17 = arith.constant 4.900000e+01 : f32
    %26 = vector.broadcast %cst_17 : f32 to vector<1x440xf32>
    %27 = arith.divf %25, %26 : vector<1x440xf32>
    %28 = vector.broadcast %27 : vector<1x440xf32> to vector<49x440xf32>
    %29 = arith.subf %21, %28 : vector<49x440xf32>
    %30 = arith.mulf %29, %29 : vector<49x440xf32>
    %cst_18 = arith.constant dense<0.000000e+00> : vector<440xf32>
    %31 = vector.multi_reduction <add>, %30, %cst_18 [0] : vector<49x440xf32> to vector<440xf32>
    %32 = vector.shape_cast %31 : vector<440xf32> to vector<1x440xf32>
    %cst_19 = arith.constant 4.900000e+01 : f32
    %33 = vector.broadcast %cst_19 : f32 to vector<1x440xf32>
    %34 = arith.divf %32, %33 : vector<1x440xf32>
    %cst_20 = arith.constant 9.99999974E-6 : f32
    %35 = vector.broadcast %cst_20 : f32 to vector<1x440xf32>
    %36 = arith.addf %34, %35 : vector<1x440xf32>
    %37 = math.rsqrt %36 : vector<1x440xf32>
    %38 = arith.mulf %22, %37 : vector<1x440xf32>
    %39 = vector.broadcast %38 : vector<1x440xf32> to vector<49x440xf32>
    %40 = arith.mulf %29, %39 : vector<49x440xf32>
    %41 = vector.broadcast %23 : vector<1x440xf32> to vector<49x440xf32>
    %42 = arith.addf %40, %41 : vector<49x440xf32>
    %c0_21 = arith.constant 0 : index
    %c0_22 = arith.constant 0 : index
    %43 = vector.load %arg2[%c0_21, %c0_22] : memref<440x49xf32, #tpu.memory_space<vmem>>, vector<440x49xf32>
    %44 = tpu.transpose %43, [1, 0] : vector<440x49xf32> -> vector<49x440xf32>
    %45 = arith.addf %44, %42 : vector<49x440xf32>
    %cst_23 = arith.constant 0.000000e+00 : f32
    %46 = vector.broadcast %cst_23 : f32 to vector<49x440xf32>
    %47 = arith.maximumf %45, %46 : vector<49x440xf32>
    %c1_i32_24 = arith.constant 1 : i32
    %48 = tpu.memref_slice %arg14[%c1_i32_24] : memref<2x!tpu.dma_semaphore, #tpu.memory_space<semaphore_mem>> -> memref<1x!tpu.dma_semaphore, #tpu.memory_space<semaphore_mem>>
    %49 = tpu.memref_squeeze %48 : memref<1x!tpu.dma_semaphore, #tpu.memory_space<semaphore_mem>> -> memref<!tpu.dma_semaphore, #tpu.memory_space<semaphore_mem>>
    tpu.wait_dma2 semaphore(%49 : memref<!tpu.dma_semaphore, #tpu.memory_space<semaphore_mem>>) src(%arg10 : memref<440x440xf32, #tpu.memory_space<any>>) dst(%arg13 : memref<440x440xf32, #tpu.memory_space<vmem>>)
    %c0_25 = arith.constant 0 : index
    %c0_26 = arith.constant 0 : index
    %50 = vector.load %arg13[%c0_25, %c0_26] : memref<440x440xf32, #tpu.memory_space<vmem>>, vector<440x440xf32>
    %cst_27 = arith.constant dense<0.000000e+00> : vector<49x440xf32>
    %51 = tpu.matmul %47, %50, %cst_27 {dimension_numbers = #tpu.dot_dimension_numbers<[1], [0], [0], [1], [0, 0, 1, 1], [], []>} : vector<49x440xf32>, vector<440x440xf32>, vector<49x440xf32> -> vector<49x440xf32>
    %c0_28 = arith.constant 0 : index
    %c0_29 = arith.constant 0 : index
    %52 = vector.load %arg7[%c0_28, %c0_29] : memref<1x440xf32, #tpu.memory_space<vmem>>, vector<1x440xf32>
    %c0_30 = arith.constant 0 : index
    %c0_31 = arith.constant 0 : index
    %53 = vector.load %arg8[%c0_30, %c0_31] : memref<1x440xf32, #tpu.memory_space<vmem>>, vector<1x440xf32>
    %cst_32 = arith.constant dense<0.000000e+00> : vector<440xf32>
    %54 = vector.multi_reduction <add>, %51, %cst_32 [0] : vector<49x440xf32> to vector<440xf32>
    %55 = vector.shape_cast %54 : vector<440xf32> to vector<1x440xf32>
    %cst_33 = arith.constant 4.900000e+01 : f32
    %56 = vector.broadcast %cst_33 : f32 to vector<1x440xf32>
    %57 = arith.divf %55, %56 : vector<1x440xf32>
    %58 = vector.broadcast %57 : vector<1x440xf32> to vector<49x440xf32>
    %59 = arith.subf %51, %58 : vector<49x440xf32>
    %60 = arith.mulf %59, %59 : vector<49x440xf32>
    %cst_34 = arith.constant dense<0.000000e+00> : vector<440xf32>
    %61 = vector.multi_reduction <add>, %60, %cst_34 [0] : vector<49x440xf32> to vector<440xf32>
    %62 = vector.shape_cast %61 : vector<440xf32> to vector<1x440xf32>
    %cst_35 = arith.constant 4.900000e+01 : f32
    %63 = vector.broadcast %cst_35 : f32 to vector<1x440xf32>
    %64 = arith.divf %62, %63 : vector<1x440xf32>
    %cst_36 = arith.constant 9.99999974E-6 : f32
    %65 = vector.broadcast %cst_36 : f32 to vector<1x440xf32>
    %66 = arith.addf %64, %65 : vector<1x440xf32>
    %67 = math.rsqrt %66 : vector<1x440xf32>
    %68 = arith.mulf %52, %67 : vector<1x440xf32>
    %69 = vector.broadcast %68 : vector<1x440xf32> to vector<49x440xf32>
    %70 = arith.mulf %59, %69 : vector<49x440xf32>
    %71 = vector.broadcast %53 : vector<1x440xf32> to vector<49x440xf32>
    %72 = arith.addf %70, %71 : vector<49x440xf32>
    %73 = tpu.transpose %72, [1, 0] : vector<49x440xf32> -> vector<440x49xf32>
    %c0_37 = arith.constant 0 : index
    %c0_38 = arith.constant 0 : index
    %74 = vector.load %arg11[%c0_37, %c0_38] : memref<440x49xf32, #tpu.memory_space<vmem>>, vector<440x49xf32>
    tpu.vector_store %arg11[%c0_37, %c0_38], %73 {strides = array<i32>} : memref<440x49xf32, #tpu.memory_space<vmem>>, vector<440x49xf32>,
    return
  }
}

</mosaic_0001>

<llo_original>
// kernel: se_block_forward.1
$region0: #{se_block_forward.1}
  #allocation0 [shape = 'u32[]', space=smem, size = 0x4, offset = 0x4, fixed_abs, tag = 'smem constant byte address 0x4 - core index']
  #allocation1 [shape = 'u32[144,128]{1,0:T(1,128)}', space=vmem, size = 0x12000, scoped, tag = 'internal scratch']
  #allocation2 [shape = 'f32[440,440]{1,0:T(8,128)}', space=vmem, size = 0xdc000, scoped, tag = 'scratch operand']
  #allocation3 [shape = 'f32[440,440]{1,0:T(8,128)}', space=vmem, size = 0xdc000, scoped, tag = 'scratch operand']
  #allocation4 [shape = 's32[2]{0}', space=sflag, size = 0x8, scoped, tag = 'scratch operand']
  #allocation5 [shape = 's32[]', space=sflag, size = 0x4, offset = 0, fixed_abs, tag = 'sflag constant byte address 0x0 - dummy sync flag']
  #allocation6 [shape = 's32[]', space=sflag, size = 0x4, offset = 0, fixed_abs, tag = 'sflag constant byte address 0x0 - dummy sync flag']
  %s0 = inlined_call_operand.vmem [shape: f32[1,110], index: 0, kind: input, shape index: {}]
  %s1 = inlined_call_operand.vmem [shape: f32[440,49], index: 1, kind: input, shape index: {}]
  %s2 = inlined_call_operand.vmem [shape: f32[440,49], index: 2, kind: input, shape index: {}]
  %s3 = inlined_call_operand.vmem [shape: f32[110,440], index: 3, kind: input, shape index: {}]
  %s4 = inlined_call_operand.vmem [shape: f32[1,440], index: 4, kind: input, shape index: {}]
  %s5 = inlined_call_operand.vmem [shape: f32[1,440], index: 5, kind: input, shape index: {}]
  %s6 = inlined_call_operand.vmem [shape: f32[1,440], index: 6, kind: input, shape index: {}]
  %s7 = inlined_call_operand.vmem [shape: f32[1,440], index: 7, kind: input, shape index: {}]
  %s8 = inlined_call_operand.vmem [shape: f32[1,440], index: 8, kind: input, shape index: {}]
  %s9 = inlined_call_operand.vmem [shape: f32[440,440], index: 9, kind: input, shape index: {}]
  %s10 = inlined_call_operand.vmem [shape: f32[440,440], index: 10, kind: input, shape index: {}]
  %s11 = inlined_call_operand.vmem [shape: f32[440,49], index: 11, kind: output, shape index: {}]
  %s12 = sld [smem:[#allocation0]]
  $region114: #{se_block_forward.1} parent=0
    _
  %s14 = ssub.s32 1, %s12
  %s15 = scalar_select 0, %s14, %s12
  // Predicated region
  $region2: #{se_block_forward.1} parent=0 // pred_check
    _
  $region3: #{se_block_forward.1} parent=0 // pred_check_branch
    %17 = sbr.rel (0) target = $region5
  $region4: #{se_block_forward.1} parent=0 // pred_region
    _
  $region5: #{se_block_forward.1} parent=0 // pred_fallthru
    _
  // Predicated region
  $region6: #{se_block_forward.1} parent=0 // pred_check
    _
  $region7: #{se_block_forward.1} parent=0 // pred_check_branch
    %19 = sbr.rel (0) target = $region9
  $region8: #{se_block_forward.1} parent=0 // pred_region
    _
  $region9: #{se_block_forward.1} parent=0 // pred_fallthru
    _
  // Predicated region
  $region10: #{se_block_forward.1} parent=0 // pred_check
    _
  $region11: #{se_block_forward.1} parent=0 // pred_check_branch
    %21 = sbr.rel (0) target = $region13
  $region12: #{se_block_forward.1} parent=0 // pred_region
    _
  $region13: #{se_block_forward.1} parent=0 // pred_fallthru
    _
  // Predicated region
  $region14: #{se_block_forward.1} parent=0 // pred_check
    _
  $region15: #{se_block_forward.1} parent=0 // pred_check_branch
    %23 = sbr.rel (0) target = $region17
  $region16: #{se_block_forward.1} parent=0 // pred_region
    _
  $region17: #{se_block_forward.1} parent=0 // pred_fallthru
    _
  // Predicated region
  $region18: #{se_block_forward.1} parent=0 // pred_check
    _
  $region19: #{se_block_forward.1} parent=0 // pred_check_branch
    %25 = sbr.rel (0) target = $region21
  $region20: #{se_block_forward.1} parent=0 // pred_region
    _
  $region21: #{se_block_forward.1} parent=0 // pred_fallthru
    _
  // Predicated region
  $region22: #{se_block_forward.1} parent=0 // pred_check
    _
  $region23: #{se_block_forward.1} parent=0 // pred_check_branch
    %27 = sbr.rel (0) target = $region25
  $region24: #{se_block_forward.1} parent=0 // pred_region
    _
  $region25: #{se_block_forward.1} parent=0 // pred_fallthru
    _
  // Predicated region
  $region26: #{se_block_forward.1} parent=0 // pred_check
    _
  $region27: #{se_block_forward.1} parent=0 // pred_check_branch
    %29 = sbr.rel (0) target = $region29
  $region28: #{se_block_forward.1} parent=0 // pred_region
    _
  $region29: #{se_block_forward.1} parent=0 // pred_fallthru
    _
  // Predicated region
  $region30: #{se_block_forward.1} parent=0 // pred_check
    _
  $region31: #{se_block_forward.1} parent=0 // pred_check_branch
    %31 = sbr.rel (0) target = $region33
  $region32: #{se_block_forward.1} parent=0 // pred_region
    _
  $region33: #{se_block_forward.1} parent=0 // pred_fallthru
    _
  // Predicated region
  $region34: #{se_block_forward.1} parent=0 // pred_check
    _
  $region35: #{se_block_forward.1} parent=0 // pred_check_branch
    %33 = sbr.rel (0) target = $region37
  $region36: #{se_block_forward.1} parent=0 // pred_region
    _
  $region37: #{se_block_forward.1} parent=0 // pred_fallthru
    _
  %p35 = scmp.lt.u32.totalorder 1760, 8
  %p36 = pneg %p35
  // Predicated region
  $region38: #{se_block_forward.1} parent=0 // pred_check
    _
  $region39: #{se_block_forward.1} parent=0 // pred_check_branch
    %38 = sbr.rel (%p35) target = $region41
  $region40: #{se_block_forward.1} parent=0 // pred_region
    %s54 = sand.u32 1760, 7
    %p55 = scmp.eq.s32.totalorder %s54, 0
    // Predicated region
    $region53: #{se_block_forward.1} parent=40 // pred_check
      %p56 = pneg %p55
    $region54: #{se_block_forward.1} parent=40 // pred_check_branch
      %58 = sbr.rel (%p56) target = $region56
    $region55: #{se_block_forward.1} parent=40 // pred_region
      loop: start=0, step=1, limit=1
      $region57: #{se_block_forward.1} parent=55 // loop_pre_header
        _
      $region58: #{se_block_forward.1} parent=55 // loop_header
        %s60 = sphi 0, %s64
        %p61 = scmp.ge.s32.totalorder %s60, 1
        %s65 = sphi %s9, %s9
        %s66 = sphi [#allocation2], [#allocation2]
      $region59: #{se_block_forward.1} parent=55 // loop_header_branch
        %63 = sbr.rel (%p61) target = $region63
      $region60: #{se_block_forward.1} parent=55 // loop_body
        %v67 = vld [vmem:[%s65] sm:$0xff]
        %68 = vst [vmem:[%s66] sm:$0xff] %v67
        %v69 = vld [vmem:[%s65 + $0x8] sm:$0xff]
        %70 = vst [vmem:[%s66 + $0x8] sm:$0xff] %v69
        %v71 = vld [vmem:[%s65 + $0x10] sm:$0xff]
        %72 = vst [vmem:[%s66 + $0x10] sm:$0xff] %v71
        %v73 = vld [vmem:[%s65 + $0x18] sm:$0xff]
        %74 = vst [vmem:[%s66 + $0x18] sm:$0xff] %v73
        %v75 = vld [vmem:[%s65 + $0x20] sm:$0xff]
        %76 = vst [vmem:[%s66 + $0x20] sm:$0xff] %v75
        %v77 = vld [vmem:[%s65 + $0x28] sm:$0xff]
        %78 = vst [vmem:[%s66 + $0x28] sm:$0xff] %v77
        %v79 = vld [vmem:[%s65 + $0x30] sm:$0xff]
        %80 = vst [vmem:[%s66 + $0x30] sm:$0xff] %v79
        %v81 = vld [vmem:[%s65 + $0x38] sm:$0xff]
        %82 = vst [vmem:[%s66 + $0x38] sm:$0xff] %v81
        %v83 = vld [vmem:[%s65 + $0x40] sm:$0xff]
        %84 = vst [vmem:[%s66 + $0x40] sm:$0xff] %v83
        %v85 = vld [vmem:[%s65 + $0x48] sm:$0xff]
        %86 = vst [vmem:[%s66 + $0x48] sm:$0xff] %v85
        %v87 = vld [vmem:[%s65 + $0x50] sm:$0xff]
        %88 = vst [vmem:[%s66 + $0x50] sm:$0xff] %v87
        %v89 = vld [vmem:[%s65 + $0x58] sm:$0xff]
        %90 = vst [vmem:[%s66 + $0x58] sm:$0xff] %v89
        %v91 = vld [vmem:[%s65 + $0x60] sm:$0xff]
        %92 = vst [vmem:[%s66 + $0x60] sm:$0xff] %v91
        %v93 = vld [vmem:[%s65 + $0x68] sm:$0xff]
        %94 = vst [vmem:[%s66 + $0x68] sm:$0xff] %v93
        %v95 = vld [vmem:[%s65 + $0x70] sm:$0xff]
        %96 = vst [vmem:[%s66 + $0x70] sm:$0xff] %v95
        %v97 = vld [vmem:[%s65 + $0x78] sm:$0xff]
        %98 = vst [vmem:[%s66 + $0x78] sm:$0xff] %v97
        %v99 = vld [vmem:[%s65 + $0x80] sm:$0xff]
        %100 = vst [vmem:[%s66 + $0x80] sm:$0xff] %v99
        %v101 = vld [vmem:[%s65 + $0x88] sm:$0xff]
        %102 = vst [vmem:[%s66 + $0x88] sm:$0xff] %v101
        %v103 = vld [vmem:[%s65 + $0x90] sm:$0xff]
        %104 = vst [vmem:[%s66 + $0x90] sm:$0xff] %v103
        %v105 = vld [vmem:[%s65 + $0x98] sm:$0xff]
        %106 = vst [vmem:[%s66 + $0x98] sm:$0xff] %v105
        %v107 = vld [vmem:[%s65 + $0xa0] sm:$0xff]
        %108 = vst [vmem:[%s66 + $0xa0] sm:$0xff] %v107
        %v109 = vld [vmem:[%s65 + $0xa8] sm:$0xff]
        %110 = vst [vmem:[%s66 + $0xa8] sm:$0xff] %v109
        %v111 = vld [vmem:[%s65 + $0xb0] sm:$0xff]
        %112 = vst [vmem:[%s66 + $0xb0] sm:$0xff] %v111
        %v113 = vld [vmem:[%s65 + $0xb8] sm:$0xff]
        %114 = vst [vmem:[%s66 + $0xb8] sm:$0xff] %v113
        %v115 = vld [vmem:[%s65 + $0xc0] sm:$0xff]
        %116 = vst [vmem:[%s66 + $0xc0] sm:$0xff] %v115
        %v117 = vld [vmem:[%s65 + $0xc8] sm:$0xff]
        %118 = vst [vmem:[%s66 + $0xc8] sm:$0xff] %v117
        %v119 = vld [vmem:[%s65 + $0xd0] sm:$0xff]
        %120 = vst [vmem:[%s66 + $0xd0] sm:$0xff] %v119
        %v121 = vld [vmem:[%s65 + $0xd8] sm:$0xff]
        %122 = vst [vmem:[%s66 + $0xd8] sm:$0xff] %v121
        %v123 = vld [vmem:[%s65 + $0xe0] sm:$0xff]
        %124 = vst [vmem:[%s66 + $0xe0] sm:$0xff] %v123
        %v125 = vld [vmem:[%s65 + $0xe8] sm:$0xff]
        %126 = vst [vmem:[%s66 + $0xe8] sm:$0xff] %v125
        %v127 = vld [vmem:[%s65 + $0xf0] sm:$0xff]
        %128 = vst [vmem:[%s66 + $0xf0] sm:$0xff] %v127
        %v129 = vld [vmem:[%s65 + $0xf8] sm:$0xff]
        %130 = vst [vmem:[%s66 + $0xf8] sm:$0xff] %v129
        %v131 = vld [vmem:[%s65 + $0x100] sm:$0xff]
        %132 = vst [vmem:[%s66 + $0x100] sm:$0xff] %v131
        %v133 = vld [vmem:[%s65 + $0x108] sm:$0xff]
        %134 = vst [vmem:[%s66 + $0x108] sm:$0xff] %v133
        %v135 = vld [vmem:[%s65 + $0x110] sm:$0xff]
        %136 = vst [vmem:[%s66 + $0x110] sm:$0xff] %v135
        %v137 = vld [vmem:[%s65 + $0x118] sm:$0xff]
        %138 = vst [vmem:[%s66 + $0x118] sm:$0xff] %v137
        %v139 = vld [vmem:[%s65 + $0x120] sm:$0xff]
        %140 = vst [vmem:[%s66 + $0x120] sm:$0xff] %v139
        %v141 = vld [vmem:[%s65 + $0x128] sm:$0xff]
        %142 = vst [vmem:[%s66 + $0x128] sm:$0xff] %v141
        %v143 = vld [vmem:[%s65 + $0x130] sm:$0xff]
        %144 = vst [vmem:[%s66 + $0x130] sm:$0xff] %v143
        %v145 = vld [vmem:[%s65 + $0x138] sm:$0xff]
        %146 = vst [vmem:[%s66 + $0x138] sm:$0xff] %v145
        %v147 = vld [vmem:[%s65 + $0x140] sm:$0xff]
        %148 = vst [vmem:[%s66 + $0x140] sm:$0xff] %v147
        %v149 = vld [vmem:[%s65 + $0x148] sm:$0xff]
        %150 = vst [vmem:[%s66 + $0x148] sm:$0xff] %v149
        %v151 = vld [vmem:[%s65 + $0x150] sm:$0xff]
        %152 = vst [vmem:[%s66 + $0x150] sm:$0xff] %v151
        %v153 = vld [vmem:[%s65 + $0x158] sm:$0xff]
        %154 = vst [vmem:[%s66 + $0x158] sm:$0xff] %v153
        %v155 = vld [vmem:[%s65 + $0x160] sm:$0xff]
        %156 = vst [vmem:[%s66 + $0x160] sm:$0xff] %v155
        %v157 = vld [vmem:[%s65 + $0x168] sm:$0xff]
        %158 = vst [vmem:[%s66 + $0x168] sm:$0xff] %v157
        %v159 = vld [vmem:[%s65 + $0x170] sm:$0xff]
        %160 = vst [vmem:[%s66 + $0x170] sm:$0xff] %v159
        %v161 = vld [vmem:[%s65 + $0x178] sm:$0xff]
        %162 = vst [vmem:[%s66 + $0x178] sm:$0xff] %v161
        %v163 = vld [vmem:[%s65 + $0x180] sm:$0xff]
        %164 = vst [vmem:[%s66 + $0x180] sm:$0xff] %v163
        %v165 = vld [vmem:[%s65 + $0x188] sm:$0xff]
        %166 = vst [vmem:[%s66 + $0x188] sm:$0xff] %v165
        %v167 = vld [vmem:[%s65 + $0x190] sm:$0xff]
        %168 = vst [vmem:[%s66 + $0x190] sm:$0xff] %v167
        %v169 = vld [vmem:[%s65 + $0x198] sm:$0xff]
        %170 = vst [vmem:[%s66 + $0x198] sm:$0xff] %v169
        %v171 = vld [vmem:[%s65 + $0x1a0] sm:$0xff]
        %172 = vst [vmem:[%s66 + $0x1a0] sm:$0xff] %v171
        %v173 = vld [vmem:[%s65 + $0x1a8] sm:$0xff]
        %174 = vst [vmem:[%s66 + $0x1a8] sm:$0xff] %v173
        %v175 = vld [vmem:[%s65 + $0x1b0] sm:$0xff]
        %176 = vst [vmem:[%s66 + $0x1b0] sm:$0xff] %v175
        %v177 = vld [vmem:[%s65 + $0x1b8] sm:$0xff]
        %178 = vst [vmem:[%s66 + $0x1b8] sm:$0xff] %v177
        %v179 = vld [vmem:[%s65 + $0x1c0] sm:$0xff]
        %180 = vst [vmem:[%s66 + $0x1c0] sm:$0xff] %v179
        %v181 = vld [vmem:[%s65 + $0x1c8] sm:$0xff]
        %182 = vst [vmem:[%s66 + $0x1c8] sm:$0xff] %v181
        %v183 = vld [vmem:[%s65 + $0x1d0] sm:$0xff]
        %184 = vst [vmem:[%s66 + $0x1d0] sm:$0xff] %v183
        %v185 = vld [vmem:[%s65 + $0x1d8] sm:$0xff]
        %186 = vst [vmem:[%s66 + $0x1d8] sm:$0xff] %v185
        %v187 = vld [vmem:[%s65 + $0x1e0] sm:$0xff]
        %188 = vst [vmem:[%s66 + $0x1e0] sm:$0xff] %v187
        %v189 = vld [vmem:[%s65 + $0x1e8] sm:$0xff]
        %190 = vst [vmem:[%s66 + $0x1e8] sm:$0xff] %v189
        %v191 = vld [vmem:[%s65 + $0x1f0] sm:$0xff]
        %192 = vst [vmem:[%s66 + $0x1f0] sm:$0xff] %v191
        %v193 = vld [vmem:[%s65 + $0x1f8] sm:$0xff]
        %194 = vst [vmem:[%s66 + $0x1f8] sm:$0xff] %v193
        %v195 = vld [vmem:[%s65 + $0x200] sm:$0xff]
        %196 = vst [vmem:[%s66 + $0x200] sm:$0xff] %v195
        %v197 = vld [vmem:[%s65 + $0x208] sm:$0xff]
        %198 = vst [vmem:[%s66 + $0x208] sm:$0xff] %v197
        %v199 = vld [vmem:[%s65 + $0x210] sm:$0xff]
        %200 = vst [vmem:[%s66 + $0x210] sm:$0xff] %v199
        %v201 = vld [vmem:[%s65 + $0x218] sm:$0xff]
        %202 = vst [vmem:[%s66 + $0x218] sm:$0xff] %v201
        %v203 = vld [vmem:[%s65 + $0x220] sm:$0xff]
        %204 = vst [vmem:[%s66 + $0x220] sm:$0xff] %v203
        %v205 = vld [vmem:[%s65 + $0x228] sm:$0xff]
        %206 = vst [vmem:[%s66 + $0x228] sm:$0xff] %v205
        %v207 = vld [vmem:[%s65 + $0x230] sm:$0xff]
        %208 = vst [vmem:[%s66 + $0x230] sm:$0xff] %v207
        %v209 = vld [vmem:[%s65 + $0x238] sm:$0xff]
        %210 = vst [vmem:[%s66 + $0x238] sm:$0xff] %v209
        %v211 = vld [vmem:[%s65 + $0x240] sm:$0xff]
        %212 = vst [vmem:[%s66 + $0x240] sm:$0xff] %v211
        %v213 = vld [vmem:[%s65 + $0x248] sm:$0xff]
        %214 = vst [vmem:[%s66 + $0x248] sm:$0xff] %v213
        %v215 = vld [vmem:[%s65 + $0x250] sm:$0xff]
        %216 = vst [vmem:[%s66 + $0x250] sm:$0xff] %v215
        %v217 = vld [vmem:[%s65 + $0x258] sm:$0xff]
        %218 = vst [vmem:[%s66 + $0x258] sm:$0xff] %v217
        %v219 = vld [vmem:[%s65 + $0x260] sm:$0xff]
        %220 = vst [vmem:[%s66 + $0x260] sm:$0xff] %v219
        %v221 = vld [vmem:[%s65 + $0x268] sm:$0xff]
        %222 = vst [vmem:[%s66 + $0x268] sm:$0xff] %v221
        %v223 = vld [vmem:[%s65 + $0x270] sm:$0xff]
        %224 = vst [vmem:[%s66 + $0x270] sm:$0xff] %v223
        %v225 = vld [vmem:[%s65 + $0x278] sm:$0xff]
        %226 = vst [vmem:[%s66 + $0x278] sm:$0xff] %v225
        %v227 = vld [vmem:[%s65 + $0x280] sm:$0xff]
        %228 = vst [vmem:[%s66 + $0x280] sm:$0xff] %v227
        %v229 = vld [vmem:[%s65 + $0x288] sm:$0xff]
        %230 = vst [vmem:[%s66 + $0x288] sm:$0xff] %v229
        %v231 = vld [vmem:[%s65 + $0x290] sm:$0xff]
        %232 = vst [vmem:[%s66 + $0x290] sm:$0xff] %v231
        %v233 = vld [vmem:[%s65 + $0x298] sm:$0xff]
        %234 = vst [vmem:[%s66 + $0x298] sm:$0xff] %v233
        %v235 = vld [vmem:[%s65 + $0x2a0] sm:$0xff]
        %236 = vst [vmem:[%s66 + $0x2a0] sm:$0xff] %v235
        %v237 = vld [vmem:[%s65 + $0x2a8] sm:$0xff]
        %238 = vst [vmem:[%s66 + $0x2a8] sm:$0xff] %v237
        %v239 = vld [vmem:[%s65 + $0x2b0] sm:$0xff]
        %240 = vst [vmem:[%s66 + $0x2b0] sm:$0xff] %v239
        %v241 = vld [vmem:[%s65 + $0x2b8] sm:$0xff]
        %242 = vst [vmem:[%s66 + $0x2b8] sm:$0xff] %v241
        %v243 = vld [vmem:[%s65 + $0x2c0] sm:$0xff]
        %244 = vst [vmem:[%s66 + $0x2c0] sm:$0xff] %v243
        %v245 = vld [vmem:[%s65 + $0x2c8] sm:$0xff]
        %246 = vst [vmem:[%s66 + $0x2c8] sm:$0xff] %v245
        %v247 = vld [vmem:[%s65 + $0x2d0] sm:$0xff]
        %248 = vst [vmem:[%s66 + $0x2d0] sm:$0xff] %v247
        %v249 = vld [vmem:[%s65 + $0x2d8] sm:$0xff]
        %250 = vst [vmem:[%s66 + $0x2d8] sm:$0xff] %v249
        %v251 = vld [vmem:[%s65 + $0x2e0] sm:$0xff]
        %252 = vst [vmem:[%s66 + $0x2e0] sm:$0xff] %v251
        %v253 = vld [vmem:[%s65 + $0x2e8] sm:$0xff]
        %254 = vst [vmem:[%s66 + $0x2e8] sm:$0xff] %v253
        %v255 = vld [vmem:[%s65 + $0x2f0] sm:$0xff]
        %256 = vst [vmem:[%s66 + $0x2f0] sm:$0xff] %v255
        %v257 = vld [vmem:[%s65 + $0x2f8] sm:$0xff]
        %258 = vst [vmem:[%s66 + $0x2f8] sm:$0xff] %v257
        %v259 = vld [vmem:[%s65 + $0x300] sm:$0xff]
        %260 = vst [vmem:[%s66 + $0x300] sm:$0xff] %v259
        %v261 = vld [vmem:[%s65 + $0x308] sm:$0xff]
        %262 = vst [vmem:[%s66 + $0x308] sm:$0xff] %v261
        %v263 = vld [vmem:[%s65 + $0x310] sm:$0xff]
        %264 = vst [vmem:[%s66 + $0x310] sm:$0xff] %v263
        %v265 = vld [vmem:[%s65 + $0x318] sm:$0xff]
        %266 = vst [vmem:[%s66 + $0x318] sm:$0xff] %v265
        %v267 = vld [vmem:[%s65 + $0x320] sm:$0xff]
        %268 = vst [vmem:[%s66 + $0x320] sm:$0xff] %v267
        %v269 = vld [vmem:[%s65 + $0x328] sm:$0xff]
        %270 = vst [vmem:[%s66 + $0x328] sm:$0xff] %v269
        %v271 = vld [vmem:[%s65 + $0x330] sm:$0xff]
        %272 = vst [vmem:[%s66 + $0x330] sm:$0xff] %v271
        %v273 = vld [vmem:[%s65 + $0x338] sm:$0xff]
        %274 = vst [vmem:[%s66 + $0x338] sm:$0xff] %v273
        %v275 = vld [vmem:[%s65 + $0x340] sm:$0xff]
        %276 = vst [vmem:[%s66 + $0x340] sm:$0xff] %v275
        %v277 = vld [vmem:[%s65 + $0x348] sm:$0xff]
        %278 = vst [vmem:[%s66 + $0x348] sm:$0xff] %v277
        %v279 = vld [vmem:[%s65 + $0x350] sm:$0xff]
        %280 = vst [vmem:[%s66 + $0x350] sm:$0xff] %v279
        %v281 = vld [vmem:[%s65 + $0x358] sm:$0xff]
        %282 = vst [vmem:[%s66 + $0x358] sm:$0xff] %v281
        %v283 = vld [vmem:[%s65 + $0x360] sm:$0xff]
        %284 = vst [vmem:[%s66 + $0x360] sm:$0xff] %v283
        %v285 = vld [vmem:[%s65 + $0x368] sm:$0xff]
        %286 = vst [vmem:[%s66 + $0x368] sm:$0xff] %v285
        %v287 = vld [vmem:[%s65 + $0x370] sm:$0xff]
        %288 = vst [vmem:[%s66 + $0x370] sm:$0xff] %v287
        %v289 = vld [vmem:[%s65 + $0x378] sm:$0xff]
        %290 = vst [vmem:[%s66 + $0x378] sm:$0xff] %v289
        %v291 = vld [vmem:[%s65 + $0x380] sm:$0xff]
        %292 = vst [vmem:[%s66 + $0x380] sm:$0xff] %v291
        %v293 = vld [vmem:[%s65 + $0x388] sm:$0xff]
        %294 = vst [vmem:[%s66 + $0x388] sm:$0xff] %v293
        %v295 = vld [vmem:[%s65 + $0x390] sm:$0xff]
        %296 = vst [vmem:[%s66 + $0x390] sm:$0xff] %v295
        %v297 = vld [vmem:[%s65 + $0x398] sm:$0xff]
        %298 = vst [vmem:[%s66 + $0x398] sm:$0xff] %v297
        %v299 = vld [vmem:[%s65 + $0x3a0] sm:$0xff]
        %300 = vst [vmem:[%s66 + $0x3a0] sm:$0xff] %v299
        %v301 = vld [vmem:[%s65 + $0x3a8] sm:$0xff]
        %302 = vst [vmem:[%s66 + $0x3a8] sm:$0xff] %v301
        %v303 = vld [vmem:[%s65 + $0x3b0] sm:$0xff]
        %304 = vst [vmem:[%s66 + $0x3b0] sm:$0xff] %v303
        %v305 = vld [vmem:[%s65 + $0x3b8] sm:$0xff]
        %306 = vst [vmem:[%s66 + $0x3b8] sm:$0xff] %v305
        %v307 = vld [vmem:[%s65 + $0x3c0] sm:$0xff]
        %308 = vst [vmem:[%s66 + $0x3c0] sm:$0xff] %v307
        %v309 = vld [vmem:[%s65 + $0x3c8] sm:$0xff]
        %310 = vst [vmem:[%s66 + $0x3c8] sm:$0xff] %v309
        %v311 = vld [vmem:[%s65 + $0x3d0] sm:$0xff]
        %312 = vst [vmem:[%s66 + $0x3d0] sm:$0xff] %v311
        %v313 = vld [vmem:[%s65 + $0x3d8] sm:$0xff]
        %314 = vst [vmem:[%s66 + $0x3d8] sm:$0xff] %v313
        %v315 = vld [vmem:[%s65 + $0x3e0] sm:$0xff]
        %316 = vst [vmem:[%s66 + $0x3e0] sm:$0xff] %v315
        %v317 = vld [vmem:[%s65 + $0x3e8] sm:$0xff]
        %318 = vst [vmem:[%s66 + $0x3e8] sm:$0xff] %v317
        %v319 = vld [vmem:[%s65 + $0x3f0] sm:$0xff]
        %320 = vst [vmem:[%s66 + $0x3f0] sm:$0xff] %v319
        %v321 = vld [vmem:[%s65 + $0x3f8] sm:$0xff]
        %322 = vst [vmem:[%s66 + $0x3f8] sm:$0xff] %v321
        %v323 = vld [vmem:[%s65 + $0x400] sm:$0xff]
        %324 = vst [vmem:[%s66 + $0x400] sm:$0xff] %v323
        %v325 = vld [vmem:[%s65 + $0x408] sm:$0xff]
        %326 = vst [vmem:[%s66 + $0x408] sm:$0xff] %v325
        %v327 = vld [vmem:[%s65 + $0x410] sm:$0xff]
        %328 = vst [vmem:[%s66 + $0x410] sm:$0xff] %v327
        %v329 = vld [vmem:[%s65 + $0x418] sm:$0xff]
        %330 = vst [vmem:[%s66 + $0x418] sm:$0xff] %v329
        %v331 = vld [vmem:[%s65 + $0x420] sm:$0xff]
        %332 = vst [vmem:[%s66 + $0x420] sm:$0xff] %v331
        %v333 = vld [vmem:[%s65 + $0x428] sm:$0xff]
        %334 = vst [vmem:[%s66 + $0x428] sm:$0xff] %v333
        %v335 = vld [vmem:[%s65 + $0x430] sm:$0xff]
        %336 = vst [vmem:[%s66 + $0x430] sm:$0xff] %v335
        %v337 = vld [vmem:[%s65 + $0x438] sm:$0xff]
        %338 = vst [vmem:[%s66 + $0x438] sm:$0xff] %v337
        %v339 = vld [vmem:[%s65 + $0x440] sm:$0xff]
        %340 = vst [vmem:[%s66 + $0x440] sm:$0xff] %v339
        %v341 = vld [vmem:[%s65 + $0x448] sm:$0xff]
        %342 = vst [vmem:[%s66 + $0x448] sm:$0xff] %v341
        %v343 = vld [vmem:[%s65 + $0x450] sm:$0xff]
        %344 = vst [vmem:[%s66 + $0x450] sm:$0xff] %v343
        %v345 = vld [vmem:[%s65 + $0x458] sm:$0xff]
        %346 = vst [vmem:[%s66 + $0x458] sm:$0xff] %v345
        %v347 = vld [vmem:[%s65 + $0x460] sm:$0xff]
        %348 = vst [vmem:[%s66 + $0x460] sm:$0xff] %v347
        %v349 = vld [vmem:[%s65 + $0x468] sm:$0xff]
        %350 = vst [vmem:[%s66 + $0x468] sm:$0xff] %v349
        %v351 = vld [vmem:[%s65 + $0x470] sm:$0xff]
        %352 = vst [vmem:[%s66 + $0x470] sm:$0xff] %v351
        %v353 = vld [vmem:[%s65 + $0x478] sm:$0xff]
        %354 = vst [vmem:[%s66 + $0x478] sm:$0xff] %v353
        %v355 = vld [vmem:[%s65 + $0x480] sm:$0xff]
        %356 = vst [vmem:[%s66 + $0x480] sm:$0xff] %v355
        %v357 = vld [vmem:[%s65 + $0x488] sm:$0xff]
        %358 = vst [vmem:[%s66 + $0x488] sm:$0xff] %v357
        %v359 = vld [vmem:[%s65 + $0x490] sm:$0xff]
        %360 = vst [vmem:[%s66 + $0x490] sm:$0xff] %v359
        %v361 = vld [vmem:[%s65 + $0x498] sm:$0xff]
        %362 = vst [vmem:[%s66 + $0x498] sm:$0xff] %v361
        %v363 = vld [vmem:[%s65 + $0x4a0] sm:$0xff]
        %364 = vst [vmem:[%s66 + $0x4a0] sm:$0xff] %v363
        %v365 = vld [vmem:[%s65 + $0x4a8] sm:$0xff]
        %366 = vst [vmem:[%s66 + $0x4a8] sm:$0xff] %v365
        %v367 = vld [vmem:[%s65 + $0x4b0] sm:$0xff]
        %368 = vst [vmem:[%s66 + $0x4b0] sm:$0xff] %v367
        %v369 = vld [vmem:[%s65 + $0x4b8] sm:$0xff]
        %370 = vst [vmem:[%s66 + $0x4b8] sm:$0xff] %v369
        %v371 = vld [vmem:[%s65 + $0x4c0] sm:$0xff]
        %372 = vst [vmem:[%s66 + $0x4c0] sm:$0xff] %v371
        %v373 = vld [vmem:[%s65 + $0x4c8] sm:$0xff]
        %374 = vst [vmem:[%s66 + $0x4c8] sm:$0xff] %v373
        %v375 = vld [vmem:[%s65 + $0x4d0] sm:$0xff]
        %376 = vst [vmem:[%s66 + $0x4d0] sm:$0xff] %v375
        %v377 = vld [vmem:[%s65 + $0x4d8] sm:$0xff]
        %378 = vst [vmem:[%s66 + $0x4d8] sm:$0xff] %v377
        %v379 = vld [vmem:[%s65 + $0x4e0] sm:$0xff]
        %380 = vst [vmem:[%s66 + $0x4e0] sm:$0xff] %v379
        %v381 = vld [vmem:[%s65 + $0x4e8] sm:$0xff]
        %382 = vst [vmem:[%s66 + $0x4e8] sm:$0xff] %v381
        %v383 = vld [vmem:[%s65 + $0x4f0] sm:$0xff]
        %384 = vst [vmem:[%s66 + $0x4f0] sm:$0xff] %v383
        %v385 = vld [vmem:[%s65 + $0x4f8] sm:$0xff]
        %386 = vst [vmem:[%s66 + $0x4f8] sm:$0xff] %v385
        %v387 = vld [vmem:[%s65 + $0x500] sm:$0xff]
        %388 = vst [vmem:[%s66 + $0x500] sm:$0xff] %v387
        %v389 = vld [vmem:[%s65 + $0x508] sm:$0xff]
        %390 = vst [vmem:[%s66 + $0x508] sm:$0xff] %v389
        %v391 = vld [vmem:[%s65 + $0x510] sm:$0xff]
        %392 = vst [vmem:[%s66 + $0x510] sm:$0xff] %v391
        %v393 = vld [vmem:[%s65 + $0x518] sm:$0xff]
        %394 = vst [vmem:[%s66 + $0x518] sm:$0xff] %v393
        %v395 = vld [vmem:[%s65 + $0x520] sm:$0xff]
        %396 = vst [vmem:[%s66 + $0x520] sm:$0xff] %v395
        %v397 = vld [vmem:[%s65 + $0x528] sm:$0xff]
        %398 = vst [vmem:[%s66 + $0x528] sm:$0xff] %v397
        %v399 = vld [vmem:[%s65 + $0x530] sm:$0xff]
        %400 = vst [vmem:[%s66 + $0x530] sm:$0xff] %v399
        %v401 = vld [vmem:[%s65 + $0x538] sm:$0xff]
        %402 = vst [vmem:[%s66 + $0x538] sm:$0xff] %v401
        %v403 = vld [vmem:[%s65 + $0x540] sm:$0xff]
        %404 = vst [vmem:[%s66 + $0x540] sm:$0xff] %v403
        %v405 = vld [vmem:[%s65 + $0x548] sm:$0xff]
        %406 = vst [vmem:[%s66 + $0x548] sm:$0xff] %v405
        %v407 = vld [vmem:[%s65 + $0x550] sm:$0xff]
        %408 = vst [vmem:[%s66 + $0x550] sm:$0xff] %v407
        %v409 = vld [vmem:[%s65 + $0x558] sm:$0xff]
        %410 = vst [vmem:[%s66 + $0x558] sm:$0xff] %v409
        %v411 = vld [vmem:[%s65 + $0x560] sm:$0xff]
        %412 = vst [vmem:[%s66 + $0x560] sm:$0xff] %v411
        %v413 = vld [vmem:[%s65 + $0x568] sm:$0xff]
        %414 = vst [vmem:[%s66 + $0x568] sm:$0xff] %v413
        %v415 = vld [vmem:[%s65 + $0x570] sm:$0xff]
        %416 = vst [vmem:[%s66 + $0x570] sm:$0xff] %v415
        %v417 = vld [vmem:[%s65 + $0x578] sm:$0xff]
        %418 = vst [vmem:[%s66 + $0x578] sm:$0xff] %v417
        %v419 = vld [vmem:[%s65 + $0x580] sm:$0xff]
        %420 = vst [vmem:[%s66 + $0x580] sm:$0xff] %v419
        %v421 = vld [vmem:[%s65 + $0x588] sm:$0xff]
        %422 = vst [vmem:[%s66 + $0x588] sm:$0xff] %v421
        %v423 = vld [vmem:[%s65 + $0x590] sm:$0xff]
        %424 = vst [vmem:[%s66 + $0x590] sm:$0xff] %v423
        %v425 = vld [vmem:[%s65 + $0x598] sm:$0xff]
        %426 = vst [vmem:[%s66 + $0x598] sm:$0xff] %v425
        %v427 = vld [vmem:[%s65 + $0x5a0] sm:$0xff]
        %428 = vst [vmem:[%s66 + $0x5a0] sm:$0xff] %v427
        %v429 = vld [vmem:[%s65 + $0x5a8] sm:$0xff]
        %430 = vst [vmem:[%s66 + $0x5a8] sm:$0xff] %v429
        %v431 = vld [vmem:[%s65 + $0x5b0] sm:$0xff]
        %432 = vst [vmem:[%s66 + $0x5b0] sm:$0xff] %v431
        %v433 = vld [vmem:[%s65 + $0x5b8] sm:$0xff]
        %434 = vst [vmem:[%s66 + $0x5b8] sm:$0xff] %v433
        %v435 = vld [vmem:[%s65 + $0x5c0] sm:$0xff]
        %436 = vst [vmem:[%s66 + $0x5c0] sm:$0xff] %v435
        %v437 = vld [vmem:[%s65 + $0x5c8] sm:$0xff]
        %438 = vst [vmem:[%s66 + $0x5c8] sm:$0xff] %v437
        %v439 = vld [vmem:[%s65 + $0x5d0] sm:$0xff]
        %440 = vst [vmem:[%s66 + $0x5d0] sm:$0xff] %v439
        %v441 = vld [vmem:[%s65 + $0x5d8] sm:$0xff]
        %442 = vst [vmem:[%s66 + $0x5d8] sm:$0xff] %v441
        %v443 = vld [vmem:[%s65 + $0x5e0] sm:$0xff]
        %444 = vst [vmem:[%s66 + $0x5e0] sm:$0xff] %v443
        %v445 = vld [vmem:[%s65 + $0x5e8] sm:$0xff]
        %446 = vst [vmem:[%s66 + $0x5e8] sm:$0xff] %v445
        %v447 = vld [vmem:[%s65 + $0x5f0] sm:$0xff]
        %448 = vst [vmem:[%s66 + $0x5f0] sm:$0xff] %v447
        %v449 = vld [vmem:[%s65 + $0x5f8] sm:$0xff]
        %450 = vst [vmem:[%s66 + $0x5f8] sm:$0xff] %v449
        %v451 = vld [vmem:[%s65 + $0x600] sm:$0xff]
        %452 = vst [vmem:[%s66 + $0x600] sm:$0xff] %v451
        %v453 = vld [vmem:[%s65 + $0x608] sm:$0xff]
        %454 = vst [vmem:[%s66 + $0x608] sm:$0xff] %v453
        %v455 = vld [vmem:[%s65 + $0x610] sm:$0xff]
        %456 = vst [vmem:[%s66 + $0x610] sm:$0xff] %v455
        %v457 = vld [vmem:[%s65 + $0x618] sm:$0xff]
        %458 = vst [vmem:[%s66 + $0x618] sm:$0xff] %v457
        %v459 = vld [vmem:[%s65 + $0x620] sm:$0xff]
        %460 = vst [vmem:[%s66 + $0x620] sm:$0xff] %v459
        %v461 = vld [vmem:[%s65 + $0x628] sm:$0xff]
        %462 = vst [vmem:[%s66 + $0x628] sm:$0xff] %v461
        %v463 = vld [vmem:[%s65 + $0x630] sm:$0xff]
        %464 = vst [vmem:[%s66 + $0x630] sm:$0xff] %v463
        %v465 = vld [vmem:[%s65 + $0x638] sm:$0xff]
        %466 = vst [vmem:[%s66 + $0x638] sm:$0xff] %v465
        %v467 = vld [vmem:[%s65 + $0x640] sm:$0xff]
        %468 = vst [vmem:[%s66 + $0x640] sm:$0xff] %v467
        %v469 = vld [vmem:[%s65 + $0x648] sm:$0xff]
        %470 = vst [vmem:[%s66 + $0x648] sm:$0xff] %v469
        %v471 = vld [vmem:[%s65 + $0x650] sm:$0xff]
        %472 = vst [vmem:[%s66 + $0x650] sm:$0xff] %v471
        %v473 = vld [vmem:[%s65 + $0x658] sm:$0xff]
        %474 = vst [vmem:[%s66 + $0x658] sm:$0xff] %v473
        %v475 = vld [vmem:[%s65 + $0x660] sm:$0xff]
        %476 = vst [vmem:[%s66 + $0x660] sm:$0xff] %v475
        %v477 = vld [vmem:[%s65 + $0x668] sm:$0xff]
        %478 = vst [vmem:[%s66 + $0x668] sm:$0xff] %v477
        %v479 = vld [vmem:[%s65 + $0x670] sm:$0xff]
        %480 = vst [vmem:[%s66 + $0x670] sm:$0xff] %v479
        %v481 = vld [vmem:[%s65 + $0x678] sm:$0xff]
        %482 = vst [vmem:[%s66 + $0x678] sm:$0xff] %v481
        %v483 = vld [vmem:[%s65 + $0x680] sm:$0xff]
        %484 = vst [vmem:[%s66 + $0x680] sm:$0xff] %v483
        %v485 = vld [vmem:[%s65 + $0x688] sm:$0xff]
        %486 = vst [vmem:[%s66 + $0x688] sm:$0xff] %v485
        %v487 = vld [vmem:[%s65 + $0x690] sm:$0xff]
        %488 = vst [vmem:[%s66 + $0x690] sm:$0xff] %v487
        %v489 = vld [vmem:[%s65 + $0x698] sm:$0xff]
        %490 = vst [vmem:[%s66 + $0x698] sm:$0xff] %v489
        %v491 = vld [vmem:[%s65 + $0x6a0] sm:$0xff]
        %492 = vst [vmem:[%s66 + $0x6a0] sm:$0xff] %v491
        %v493 = vld [vmem:[%s65 + $0x6a8] sm:$0xff]
        %494 = vst [vmem:[%s66 + $0x6a8] sm:$0xff] %v493
        %v495 = vld [vmem:[%s65 + $0x6b0] sm:$0xff]
        %496 = vst [vmem:[%s66 + $0x6b0] sm:$0xff] %v495
        %v497 = vld [vmem:[%s65 + $0x6b8] sm:$0xff]
        %498 = vst [vmem:[%s66 + $0x6b8] sm:$0xff] %v497
        %v499 = vld [vmem:[%s65 + $0x6c0] sm:$0xff]
        %500 = vst [vmem:[%s66 + $0x6c0] sm:$0xff] %v499
        %v501 = vld [vmem:[%s65 + $0x6c8] sm:$0xff]
        %502 = vst [vmem:[%s66 + $0x6c8] sm:$0xff] %v501
        %v503 = vld [vmem:[%s65 + $0x6d0] sm:$0xff]
        %504 = vst [vmem:[%s66 + $0x6d0] sm:$0xff] %v503
        %v505 = vld [vmem:[%s65 + $0x6d8] sm:$0xff]
        %506 = vst [vmem:[%s66 + $0x6d8] sm:$0xff] %v505
      $region61: #{se_block_forward.1} parent=55 // loop_footer
        %s64 = sadd.s32 1, %s60
      $region62: #{se_block_forward.1} parent=55 // loop_footer_branch
        %59 = sbr.rel target = $region58
      $region63: #{se_block_forward.1} parent=55 // loop_exit
        _
    $region56: #{se_block_forward.1} parent=40 // pred_fallthru
      _
    %p507 = pneg %p55
    // Predicated region
    $region64: #{se_block_forward.1} parent=40 // pred_check
      _
    $region65: #{se_block_forward.1} parent=40 // pred_check_branch
      %509 = sbr.rel (%p55) target = $region67
    $region66: #{se_block_forward.1} parent=40 // pred_region
      %s510 = sand.u32 1760, 7
    $region67: #{se_block_forward.1} parent=40 // pred_fallthru
      _
  $region41: #{se_block_forward.1} parent=0 // pred_fallthru
    _
  // Predicated region
  $region42: #{se_block_forward.1} parent=0 // pred_check
    %p39 = pneg %p35
  $region43: #{se_block_forward.1} parent=0 // pred_check_branch
    %41 = sbr.rel (%p39) target = $region45
  $region44: #{se_block_forward.1} parent=0 // pred_region
    %s42 = sshll.u32 1, 1760
    %s43 = ssub.s32 %s42, 1
    loop: start=0, step=1, limit=1
    $region46: #{se_block_forward.1} parent=44 // loop_pre_header
      _
    $region47: #{se_block_forward.1} parent=44 // loop_header
      %s45 = sphi 0, %s49
      %p46 = scmp.ge.s32.totalorder %s45, 1
      %s50 = sphi %s9, %s9
      %s51 = sphi [#allocation2], [#allocation2]
    $region48: #{se_block_forward.1} parent=44 // loop_header_branch
      %48 = sbr.rel (%p46) target = $region52
    $region49: #{se_block_forward.1} parent=44 // loop_body
      %v52 = vld [vmem:[%s50] sm:%s43]
      %53 = vst [vmem:[%s51] sm:%s43] %v52
    $region50: #{se_block_forward.1} parent=44 // loop_footer
      %s49 = sadd.s32 1, %s45
    $region51: #{se_block_forward.1} parent=44 // loop_footer_branch
      %44 = sbr.rel target = $region47
    $region52: #{se_block_forward.1} parent=44 // loop_exit
      _
  $region45: #{se_block_forward.1} parent=0 // pred_fallthru
    _
  // Predicated region
  $region68: #{se_block_forward.1} parent=0 // pred_check
    _
  $region69: #{se_block_forward.1} parent=0 // pred_check_branch
    %513 = sbr.rel (0) target = $region71
  $region70: #{se_block_forward.1} parent=0 // pred_region
    %514 = vsyncadd [#allocation4], 28160
  $region71: #{se_block_forward.1} parent=0 // pred_fallthru
    _
  %s515 = scalar_lea.sflag [#allocation4], 1
  %p517 = scmp.lt.u32.totalorder 1760, 8
  %p518 = pneg %p517
  // Predicated region
  $region72: #{se_block_forward.1} parent=0 // pred_check
    _
  $region73: #{se_block_forward.1} parent=0 // pred_check_branch
    %520 = sbr.rel (%p517) target = $region75
  $region74: #{se_block_forward.1} parent=0 // pred_region
    %s536 = sand.u32 1760, 7
    %p537 = scmp.eq.s32.totalorder %s536, 0
    // Predicated region
    $region87: #{se_block_forward.1} parent=74 // pred_check
      %p538 = pneg %p537
    $region88: #{se_block_forward.1} parent=74 // pred_check_branch
      %540 = sbr.rel (%p538) target = $region90
    $region89: #{se_block_forward.1} parent=74 // pred_region
      loop: start=0, step=1, limit=1
      $region91: #{se_block_forward.1} parent=89 // loop_pre_header
        _
      $region92: #{se_block_forward.1} parent=89 // loop_header
        %s542 = sphi 0, %s546
        %p543 = scmp.ge.s32.totalorder %s542, 1
        %s547 = sphi %s10, %s10
        %s548 = sphi [#allocation3], [#allocation3]
      $region93: #{se_block_forward.1} parent=89 // loop_header_branch
        %545 = sbr.rel (%p543) target = $region97
      $region94: #{se_block_forward.1} parent=89 // loop_body
        %v549 = vld [vmem:[%s547] sm:$0xff]
        %550 = vst [vmem:[%s548] sm:$0xff] %v549
        %v551 = vld [vmem:[%s547 + $0x8] sm:$0xff]
        %552 = vst [vmem:[%s548 + $0x8] sm:$0xff] %v551
        %v553 = vld [vmem:[%s547 + $0x10] sm:$0xff]
        %554 = vst [vmem:[%s548 + $0x10] sm:$0xff] %v553
        %v555 = vld [vmem:[%s547 + $0x18] sm:$0xff]
        %556 = vst [vmem:[%s548 + $0x18] sm:$0xff] %v555
        %v557 = vld [vmem:[%s547 + $0x20] sm:$0xff]
        %558 = vst [vmem:[%s548 + $0x20] sm:$0xff] %v557
        %v559 = vld [vmem:[%s547 + $0x28] sm:$0xff]
        %560 = vst [vmem:[%s548 + $0x28] sm:$0xff] %v559
        %v561 = vld [vmem:[%s547 + $0x30] sm:$0xff]
        %562 = vst [vmem:[%s548 + $0x30] sm:$0xff] %v561
        %v563 = vld [vmem:[%s547 + $0x38] sm:$0xff]
        %564 = vst [vmem:[%s548 + $0x38] sm:$0xff] %v563
        %v565 = vld [vmem:[%s547 + $0x40] sm:$0xff]
        %566 = vst [vmem:[%s548 + $0x40] sm:$0xff] %v565
        %v567 = vld [vmem:[%s547 + $0x48] sm:$0xff]
        %568 = vst [vmem:[%s548 + $0x48] sm:$0xff] %v567
        %v569 = vld [vmem:[%s547 + $0x50] sm:$0xff]
        %570 = vst [vmem:[%s548 + $0x50] sm:$0xff] %v569
        %v571 = vld [vmem:[%s547 + $0x58] sm:$0xff]
        %572 = vst [vmem:[%s548 + $0x58] sm:$0xff] %v571
        %v573 = vld [vmem:[%s547 + $0x60] sm:$0xff]
        %574 = vst [vmem:[%s548 + $0x60] sm:$0xff] %v573
        %v575 = vld [vmem:[%s547 + $0x68] sm:$0xff]
        %576 = vst [vmem:[%s548 + $0x68] sm:$0xff] %v575
        %v577 = vld [vmem:[%s547 + $0x70] sm:$0xff]
        %578 = vst [vmem:[%s548 + $0x70] sm:$0xff] %v577
        %v579 = vld [vmem:[%s547 + $0x78] sm:$0xff]
        %580 = vst [vmem:[%s548 + $0x78] sm:$0xff] %v579
        %v581 = vld [vmem:[%s547 + $0x80] sm:$0xff]
        %582 = vst [vmem:[%s548 + $0x80] sm:$0xff] %v581
        %v583 = vld [vmem:[%s547 + $0x88] sm:$0xff]
        %584 = vst [vmem:[%s548 + $0x88] sm:$0xff] %v583
        %v585 = vld [vmem:[%s547 + $0x90] sm:$0xff]
        %586 = vst [vmem:[%s548 + $0x90] sm:$0xff] %v585
        %v587 = vld [vmem:[%s547 + $0x98] sm:$0xff]
        %588 = vst [vmem:[%s548 + $0x98] sm:$0xff] %v587
        %v589 = vld [vmem:[%s547 + $0xa0] sm:$0xff]
        %590 = vst [vmem:[%s548 + $0xa0] sm:$0xff] %v589
        %v591 = vld [vmem:[%s547 + $0xa8] sm:$0xff]
        %592 = vst [vmem:[%s548 + $0xa8] sm:$0xff] %v591
        %v593 = vld [vmem:[%s547 + $0xb0] sm:$0xff]
        %594 = vst [vmem:[%s548 + $0xb0] sm:$0xff] %v593
        %v595 = vld [vmem:[%s547 + $0xb8] sm:$0xff]
        %596 = vst [vmem:[%s548 + $0xb8] sm:$0xff] %v595
        %v597 = vld [vmem:[%s547 + $0xc0] sm:$0xff]
        %598 = vst [vmem:[%s548 + $0xc0] sm:$0xff] %v597
        %v599 = vld [vmem:[%s547 + $0xc8] sm:$0xff]
        %600 = vst [vmem:[%s548 + $0xc8] sm:$0xff] %v599
        %v601 = vld [vmem:[%s547 + $0xd0] sm:$0xff]
        %602 = vst [vmem:[%s548 + $0xd0] sm:$0xff] %v601
        %v603 = vld [vmem:[%s547 + $0xd8] sm:$0xff]
        %604 = vst [vmem:[%s548 + $0xd8] sm:$0xff] %v603
        %v605 = vld [vmem:[%s547 + $0xe0] sm:$0xff]
        %606 = vst [vmem:[%s548 + $0xe0] sm:$0xff] %v605
        %v607 = vld [vmem:[%s547 + $0xe8] sm:$0xff]
        %608 = vst [vmem:[%s548 + $0xe8] sm:$0xff] %v607
        %v609 = vld [vmem:[%s547 + $0xf0] sm:$0xff]
        %610 = vst [vmem:[%s548 + $0xf0] sm:$0xff] %v609
        %v611 = vld [vmem:[%s547 + $0xf8] sm:$0xff]
        %612 = vst [vmem:[%s548 + $0xf8] sm:$0xff] %v611
        %v613 = vld [vmem:[%s547 + $0x100] sm:$0xff]
        %614 = vst [vmem:[%s548 + $0x100] sm:$0xff] %v613
        %v615 = vld [vmem:[%s547 + $0x108] sm:$0xff]
        %616 = vst [vmem:[%s548 + $0x108] sm:$0xff] %v615
        %v617 = vld [vmem:[%s547 + $0x110] sm:$0xff]
        %618 = vst [vmem:[%s548 + $0x110] sm:$0xff] %v617
        %v619 = vld [vmem:[%s547 + $0x118] sm:$0xff]
        %620 = vst [vmem:[%s548 + $0x118] sm:$0xff] %v619
        %v621 = vld [vmem:[%s547 + $0x120] sm:$0xff]
        %622 = vst [vmem:[%s548 + $0x120] sm:$0xff] %v621
        %v623 = vld [vmem:[%s547 + $0x128] sm:$0xff]
        %624 = vst [vmem:[%s548 + $0x128] sm:$0xff] %v623
        %v625 = vld [vmem:[%s547 + $0x130] sm:$0xff]
        %626 = vst [vmem:[%s548 + $0x130] sm:$0xff] %v625
        %v627 = vld [vmem:[%s547 + $0x138] sm:$0xff]
        %628 = vst [vmem:[%s548 + $0x138] sm:$0xff] %v627
        %v629 = vld [vmem:[%s547 + $0x140] sm:$0xff]
        %630 = vst [vmem:[%s548 + $0x140] sm:$0xff] %v629
        %v631 = vld [vmem:[%s547 + $0x148] sm:$0xff]
        %632 = vst [vmem:[%s548 + $0x148] sm:$0xff] %v631
        %v633 = vld [vmem:[%s547 + $0x150] sm:$0xff]
        %634 = vst [vmem:[%s548 + $0x150] sm:$0xff] %v633
        %v635 = vld [vmem:[%s547 + $0x158] sm:$0xff]
        %636 = vst [vmem:[%s548 + $0x158] sm:$0xff] %v635
        %v637 = vld [vmem:[%s547 + $0x160] sm:$0xff]
        %638 = vst [vmem:[%s548 + $0x160] sm:$0xff] %v637
        %v639 = vld [vmem:[%s547 + $0x168] sm:$0xff]
        %640 = vst [vmem:[%s548 + $0x168] sm:$0xff] %v639
        %v641 = vld [vmem:[%s547 + $0x170] sm:$0xff]
        %642 = vst [vmem:[%s548 + $0x170] sm:$0xff] %v641
        %v643 = vld [vmem:[%s547 + $0x178] sm:$0xff]
        %644 = vst [vmem:[%s548 + $0x178] sm:$0xff] %v643
        %v645 = vld [vmem:[%s547 + $0x180] sm:$0xff]
        %646 = vst [vmem:[%s548 + $0x180] sm:$0xff] %v645
        %v647 = vld [vmem:[%s547 + $0x188] sm:$0xff]
        %648 = vst [vmem:[%s548 + $0x188] sm:$0xff] %v647
        %v649 = vld [vmem:[%s547 + $0x190] sm:$0xff]
        %650 = vst [vmem:[%s548 + $0x190] sm:$0xff] %v649
        %v651 = vld [vmem:[%s547 + $0x198] sm:$0xff]
        %652 = vst [vmem:[%s548 + $0x198] sm:$0xff] %v651
        %v653 = vld [vmem:[%s547 + $0x1a0] sm:$0xff]
        %654 = vst [vmem:[%s548 + $0x1a0] sm:$0xff] %v653
        %v655 = vld [vmem:[%s547 + $0x1a8] sm:$0xff]
        %656 = vst [vmem:[%s548 + $0x1a8] sm:$0xff] %v655
        %v657 = vld [vmem:[%s547 + $0x1b0] sm:$0xff]
        %658 = vst [vmem:[%s548 + $0x1b0] sm:$0xff] %v657
        %v659 = vld [vmem:[%s547 + $0x1b8] sm:$0xff]
        %660 = vst [vmem:[%s548 + $0x1b8] sm:$0xff] %v659
        %v661 = vld [vmem:[%s547 + $0x1c0] sm:$0xff]
        %662 = vst [vmem:[%s548 + $0x1c0] sm:$0xff] %v661
        %v663 = vld [vmem:[%s547 + $0x1c8] sm:$0xff]
        %664 = vst [vmem:[%s548 + $0x1c8] sm:$0xff] %v663
        %v665 = vld [vmem:[%s547 + $0x1d0] sm:$0xff]
        %666 = vst [vmem:[%s548 + $0x1d0] sm:$0xff] %v665
        %v667 = vld [vmem:[%s547 + $0x1d8] sm:$0xff]
        %668 = vst [vmem:[%s548 + $0x1d8] sm:$0xff] %v667
        %v669 = vld [vmem:[%s547 + $0x1e0] sm:$0xff]
        %670 = vst [vmem:[%s548 + $0x1e0] sm:$0xff] %v669
        %v671 = vld [vmem:[%s547 + $0x1e8] sm:$0xff]
        %672 = vst [vmem:[%s548 + $0x1e8] sm:$0xff] %v671
        %v673 = vld [vmem:[%s547 + $0x1f0] sm:$0xff]
        %674 = vst [vmem:[%s548 + $0x1f0] sm:$0xff] %v673
        %v675 = vld [vmem:[%s547 + $0x1f8] sm:$0xff]
        %676 = vst [vmem:[%s548 + $0x1f8] sm:$0xff] %v675
        %v677 = vld [vmem:[%s547 + $0x200] sm:$0xff]
        %678 = vst [vmem:[%s548 + $0x200] sm:$0xff] %v677
        %v679 = vld [vmem:[%s547 + $0x208] sm:$0xff]
        %680 = vst [vmem:[%s548 + $0x208] sm:$0xff] %v679
        %v681 = vld [vmem:[%s547 + $0x210] sm:$0xff]
        %682 = vst [vmem:[%s548 + $0x210] sm:$0xff] %v681
        %v683 = vld [vmem:[%s547 + $0x218] sm:$0xff]
        %684 = vst [vmem:[%s548 + $0x218] sm:$0xff] %v683
        %v685 = vld [vmem:[%s547 + $0x220] sm:$0xff]
        %686 = vst [vmem:[%s548 + $0x220] sm:$0xff] %v685
        %v687 = vld [vmem:[%s547 + $0x228] sm:$0xff]
        %688 = vst [vmem:[%s548 + $0x228] sm:$0xff] %v687
        %v689 = vld [vmem:[%s547 + $0x230] sm:$0xff]
        %690 = vst [vmem:[%s548 + $0x230] sm:$0xff] %v689
        %v691 = vld [vmem:[%s547 + $0x238] sm:$0xff]
        %692 = vst [vmem:[%s548 + $0x238] sm:$0xff] %v691
        %v693 = vld [vmem:[%s547 + $0x240] sm:$0xff]
        %694 = vst [vmem:[%s548 + $0x240] sm:$0xff] %v693
        %v695 = vld [vmem:[%s547 + $0x248] sm:$0xff]
        %696 = vst [vmem:[%s548 + $0x248] sm:$0xff] %v695
        %v697 = vld [vmem:[%s547 + $0x250] sm:$0xff]
        %698 = vst [vmem:[%s548 + $0x250] sm:$0xff] %v697
        %v699 = vld [vmem:[%s547 + $0x258] sm:$0xff]
        %700 = vst [vmem:[%s548 + $0x258] sm:$0xff] %v699
        %v701 = vld [vmem:[%s547 + $0x260] sm:$0xff]
        %702 = vst [vmem:[%s548 + $0x260] sm:$0xff] %v701
        %v703 = vld [vmem:[%s547 + $0x268] sm:$0xff]
        %704 = vst [vmem:[%s548 + $0x268] sm:$0xff] %v703
        %v705 = vld [vmem:[%s547 + $0x270] sm:$0xff]
        %706 = vst [vmem:[%s548 + $0x270] sm:$0xff] %v705
        %v707 = vld [vmem:[%s547 + $0x278] sm:$0xff]
        %708 = vst [vmem:[%s548 + $0x278] sm:$0xff] %v707
        %v709 = vld [vmem:[%s547 + $0x280] sm:$0xff]
        %710 = vst [vmem:[%s548 + $0x280] sm:$0xff] %v709
        %v711 = vld [vmem:[%s547 + $0x288] sm:$0xff]
        %712 = vst [vmem:[%s548 + $0x288] sm:$0xff] %v711
        %v713 = vld [vmem:[%s547 + $0x290] sm:$0xff]
        %714 = vst [vmem:[%s548 + $0x290] sm:$0xff] %v713
        %v715 = vld [vmem:[%s547 + $0x298] sm:$0xff]
        %716 = vst [vmem:[%s548 + $0x298] sm:$0xff] %v715
        %v717 = vld [vmem:[%s547 + $0x2a0] sm:$0xff]
        %718 = vst [vmem:[%s548 + $0x2a0] sm:$0xff] %v717
        %v719 = vld [vmem:[%s547 + $0x2a8] sm:$0xff]
        %720 = vst [vmem:[%s548 + $0x2a8] sm:$0xff] %v719
        %v721 = vld [vmem:[%s547 + $0x2b0] sm:$0xff]
        %722 = vst [vmem:[%s548 + $0x2b0] sm:$0xff] %v721
        %v723 = vld [vmem:[%s547 + $0x2b8] sm:$0xff]
        %724 = vst [vmem:[%s548 + $0x2b8] sm:$0xff] %v723
        %v725 = vld [vmem:[%s547 + $0x2c0] sm:$0xff]
        %726 = vst [vmem:[%s548 + $0x2c0] sm:$0xff] %v725
        %v727 = vld [vmem:[%s547 + $0x2c8] sm:$0xff]
        %728 = vst [vmem:[%s548 + $0x2c8] sm:$0xff] %v727
        %v729 = vld [vmem:[%s547 + $0x2d0] sm:$0xff]
        %730 = vst [vmem:[%s548 + $0x2d0] sm:$0xff] %v729
        %v731 = vld [vmem:[%s547 + $0x2d8] sm:$0xff]
        %732 = vst [vmem:[%s548 + $0x2d8] sm:$0xff] %v731
        %v733 = vld [vmem:[%s547 + $0x2e0] sm:$0xff]
        %734 = vst [vmem:[%s548 + $0x2e0] sm:$0xff] %v733
        %v735 = vld [vmem:[%s547 + $0x2e8] sm:$0xff]
        %736 = vst [vmem:[%s548 + $0x2e8] sm:$0xff] %v735
        %v737 = vld [vmem:[%s547 + $0x2f0] sm:$0xff]
        %738 = vst [vmem:[%s548 + $0x2f0] sm:$0xff] %v737
        %v739 = vld [vmem:[%s547 + $0x2f8] sm:$0xff]
        %740 = vst [vmem:[%s548 + $0x2f8] sm:$0xff] %v739
        %v741 = vld [vmem:[%s547 + $0x300] sm:$0xff]
        %742 = vst [vmem:[%s548 + $0x300] sm:$0xff] %v741
        %v743 = vld [vmem:[%s547 + $0x308] sm:$0xff]
        %744 = vst [vmem:[%s548 + $0x308] sm:$0xff] %v743
        %v745 = vld [vmem:[%s547 + $0x310] sm:$0xff]
        %746 = vst [vmem:[%s548 + $0x310] sm:$0xff] %v745
        %v747 = vld [vmem:[%s547 + $0x318] sm:$0xff]
        %748 = vst [vmem:[%s548 + $0x318] sm:$0xff] %v747
        %v749 = vld [vmem:[%s547 + $0x320] sm:$0xff]
        %750 = vst [vmem:[%s548 + $0x320] sm:$0xff] %v749
        %v751 = vld [vmem:[%s547 + $0x328] sm:$0xff]
        %752 = vst [vmem:[%s548 + $0x328] sm:$0xff] %v751
        %v753 = vld [vmem:[%s547 + $0x330] sm:$0xff]
        %754 = vst [vmem:[%s548 + $0x330] sm:$0xff] %v753
        %v755 = vld [vmem:[%s547 + $0x338] sm:$0xff]
        %756 = vst [vmem:[%s548 + $0x338] sm:$0xff] %v755
        %v757 = vld [vmem:[%s547 + $0x340] sm:$0xff]
        %758 = vst [vmem:[%s548 + $0x340] sm:$0xff] %v757
        %v759 = vld [vmem:[%s547 + $0x348] sm:$0xff]
        %760 = vst [vmem:[%s548 + $0x348] sm:$0xff] %v759
        %v761 = vld [vmem:[%s547 + $0x350] sm:$0xff]
        %762 = vst [vmem:[%s548 + $0x350] sm:$0xff] %v761
        %v763 = vld [vmem:[%s547 + $0x358] sm:$0xff]
        %764 = vst [vmem:[%s548 + $0x358] sm:$0xff] %v763
        %v765 = vld [vmem:[%s547 + $0x360] sm:$0xff]
        %766 = vst [vmem:[%s548 + $0x360] sm:$0xff] %v765
        %v767 = vld [vmem:[%s547 + $0x368] sm:$0xff]
        %768 = vst [vmem:[%s548 + $0x368] sm:$0xff] %v767
        %v769 = vld [vmem:[%s547 + $0x370] sm:$0xff]
        %770 = vst [vmem:[%s548 + $0x370] sm:$0xff] %v769
        %v771 = vld [vmem:[%s547 + $0x378] sm:$0xff]
        %772 = vst [vmem:[%s548 + $0x378] sm:$0xff] %v771
        %v773 = vld [vmem:[%s547 + $0x380] sm:$0xff]
        %774 = vst [vmem:[%s548 + $0x380] sm:$0xff] %v773
        %v775 = vld [vmem:[%s547 + $0x388] sm:$0xff]
        %776 = vst [vmem:[%s548 + $0x388] sm:$0xff] %v775
        %v777 = vld [vmem:[%s547 + $0x390] sm:$0xff]
        %778 = vst [vmem:[%s548 + $0x390] sm:$0xff] %v777
        %v779 = vld [vmem:[%s547 + $0x398] sm:$0xff]
        %780 = vst [vmem:[%s548 + $0x398] sm:$0xff] %v779
        %v781 = vld [vmem:[%s547 + $0x3a0] sm:$0xff]
        %782 = vst [vmem:[%s548 + $0x3a0] sm:$0xff] %v781
        %v783 = vld [vmem:[%s547 + $0x3a8] sm:$0xff]
        %784 = vst [vmem:[%s548 + $0x3a8] sm:$0xff] %v783
        %v785 = vld [vmem:[%s547 + $0x3b0] sm:$0xff]
        %786 = vst [vmem:[%s548 + $0x3b0] sm:$0xff] %v785
        %v787 = vld [vmem:[%s547 + $0x3b8] sm:$0xff]
        %788 = vst [vmem:[%s548 + $0x3b8] sm:$0xff] %v787
        %v789 = vld [vmem:[%s547 + $0x3c0] sm:$0xff]
        %790 = vst [vmem:[%s548 + $0x3c0] sm:$0xff] %v789
        %v791 = vld [vmem:[%s547 + $0x3c8] sm:$0xff]
        %792 = vst [vmem:[%s548 + $0x3c8] sm:$0xff] %v791
        %v793 = vld [vmem:[%s547 + $0x3d0] sm:$0xff]
        %794 = vst [vmem:[%s548 + $0x3d0] sm:$0xff] %v793
        %v795 = vld [vmem:[%s547 + $0x3d8] sm:$0xff]
        %796 = vst [vmem:[%s548 + $0x3d8] sm:$0xff] %v795
        %v797 = vld [vmem:[%s547 + $0x3e0] sm:$0xff]
        %798 = vst [vmem:[%s548 + $0x3e0] sm:$0xff] %v797
        %v799 = vld [vmem:[%s547 + $0x3e8] sm:$0xff]
        %800 = vst [vmem:[%s548 + $0x3e8] sm:$0xff] %v799
        %v801 = vld [vmem:[%s547 + $0x3f0] sm:$0xff]
        %802 = vst [vmem:[%s548 + $0x3f0] sm:$0xff] %v801
        %v803 = vld [vmem:[%s547 + $0x3f8] sm:$0xff]
        %804 = vst [vmem:[%s548 + $0x3f8] sm:$0xff] %v803
        %v805 = vld [vmem:[%s547 + $0x400] sm:$0xff]
        %806 = vst [vmem:[%s548 + $0x400] sm:$0xff] %v805
        %v807 = vld [vmem:[%s547 + $0x408] sm:$0xff]
        %808 = vst [vmem:[%s548 + $0x408] sm:$0xff] %v807
        %v809 = vld [vmem:[%s547 + $0x410] sm:$0xff]
        %810 = vst [vmem:[%s548 + $0x410] sm:$0xff] %v809
        %v811 = vld [vmem:[%s547 + $0x418] sm:$0xff]
        %812 = vst [vmem:[%s548 + $0x418] sm:$0xff] %v811
        %v813 = vld [vmem:[%s547 + $0x420] sm:$0xff]
        %814 = vst [vmem:[%s548 + $0x420] sm:$0xff] %v813
        %v815 = vld [vmem:[%s547 + $0x428] sm:$0xff]
        %816 = vst [vmem:[%s548 + $0x428] sm:$0xff] %v815
        %v817 = vld [vmem:[%s547 + $0x430] sm:$0xff]
        %818 = vst [vmem:[%s548 + $0x430] sm:$0xff] %v817
        %v819 = vld [vmem:[%s547 + $0x438] sm:$0xff]
        %820 = vst [vmem:[%s548 + $0x438] sm:$0xff] %v819
        %v821 = vld [vmem:[%s547 + $0x440] sm:$0xff]
        %822 = vst [vmem:[%s548 + $0x440] sm:$0xff] %v821
        %v823 = vld [vmem:[%s547 + $0x448] sm:$0xff]
        %824 = vst [vmem:[%s548 + $0x448] sm:$0xff] %v823
        %v825 = vld [vmem:[%s547 + $0x450] sm:$0xff]
        %826 = vst [vmem:[%s548 + $0x450] sm:$0xff] %v825
        %v827 = vld [vmem:[%s547 + $0x458] sm:$0xff]
        %828 = vst [vmem:[%s548 + $0x458] sm:$0xff] %v827
        %v829 = vld [vmem:[%s547 + $0x460] sm:$0xff]
        %830 = vst [vmem:[%s548 + $0x460] sm:$0xff] %v829
        %v831 = vld [vmem:[%s547 + $0x468] sm:$0xff]
        %832 = vst [vmem:[%s548 + $0x468] sm:$0xff] %v831
        %v833 = vld [vmem:[%s547 + $0x470] sm:$0xff]
        %834 = vst [vmem:[%s548 + $0x470] sm:$0xff] %v833
        %v835 = vld [vmem:[%s547 + $0x478] sm:$0xff]
        %836 = vst [vmem:[%s548 + $0x478] sm:$0xff] %v835
        %v837 = vld [vmem:[%s547 + $0x480] sm:$0xff]
        %838 = vst [vmem:[%s548 + $0x480] sm:$0xff] %v837
        %v839 = vld [vmem:[%s547 + $0x488] sm:$0xff]
        %840 = vst [vmem:[%s548 + $0x488] sm:$0xff] %v839
        %v841 = vld [vmem:[%s547 + $0x490] sm:$0xff]
        %842 = vst [vmem:[%s548 + $0x490] sm:$0xff] %v841
        %v843 = vld [vmem:[%s547 + $0x498] sm:$0xff]
        %844 = vst [vmem:[%s548 + $0x498] sm:$0xff] %v843
        %v845 = vld [vmem:[%s547 + $0x4a0] sm:$0xff]
        %846 = vst [vmem:[%s548 + $0x4a0] sm:$0xff] %v845
        %v847 = vld [vmem:[%s547 + $0x4a8] sm:$0xff]
        %848 = vst [vmem:[%s548 + $0x4a8] sm:$0xff] %v847
        %v849 = vld [vmem:[%s547 + $0x4b0] sm:$0xff]
        %850 = vst [vmem:[%s548 + $0x4b0] sm:$0xff] %v849
        %v851 = vld [vmem:[%s547 + $0x4b8] sm:$0xff]
        %852 = vst [vmem:[%s548 + $0x4b8] sm:$0xff] %v851
        %v853 = vld [vmem:[%s547 + $0x4c0] sm:$0xff]
        %854 = vst [vmem:[%s548 + $0x4c0] sm:$0xff] %v853
        %v855 = vld [vmem:[%s547 + $0x4c8] sm:$0xff]
        %856 = vst [vmem:[%s548 + $0x4c8] sm:$0xff] %v855
        %v857 = vld [vmem:[%s547 + $0x4d0] sm:$0xff]
        %858 = vst [vmem:[%s548 + $0x4d0] sm:$0xff] %v857
        %v859 = vld [vmem:[%s547 + $0x4d8] sm:$0xff]
        %860 = vst [vmem:[%s548 + $0x4d8] sm:$0xff] %v859
        %v861 = vld [vmem:[%s547 + $0x4e0] sm:$0xff]
        %862 = vst [vmem:[%s548 + $0x4e0] sm:$0xff] %v861
        %v863 = vld [vmem:[%s547 + $0x4e8] sm:$0xff]
        %864 = vst [vmem:[%s548 + $0x4e8] sm:$0xff] %v863
        %v865 = vld [vmem:[%s547 + $0x4f0] sm:$0xff]
        %866 = vst [vmem:[%s548 + $0x4f0] sm:$0xff] %v865
        %v867 = vld [vmem:[%s547 + $0x4f8] sm:$0xff]
        %868 = vst [vmem:[%s548 + $0x4f8] sm:$0xff] %v867
        %v869 = vld [vmem:[%s547 + $0x500] sm:$0xff]
        %870 = vst [vmem:[%s548 + $0x500] sm:$0xff] %v869
        %v871 = vld [vmem:[%s547 + $0x508] sm:$0xff]
        %872 = vst [vmem:[%s548 + $0x508] sm:$0xff] %v871
        %v873 = vld [vmem:[%s547 + $0x510] sm:$0xff]
        %874 = vst [vmem:[%s548 + $0x510] sm:$0xff] %v873
        %v875 = vld [vmem:[%s547 + $0x518] sm:$0xff]
        %876 = vst [vmem:[%s548 + $0x518] sm:$0xff] %v875
        %v877 = vld [vmem:[%s547 + $0x520] sm:$0xff]
        %878 = vst [vmem:[%s548 + $0x520] sm:$0xff] %v877
        %v879 = vld [vmem:[%s547 + $0x528] sm:$0xff]
        %880 = vst [vmem:[%s548 + $0x528] sm:$0xff] %v879
        %v881 = vld [vmem:[%s547 + $0x530] sm:$0xff]
        %882 = vst [vmem:[%s548 + $0x530] sm:$0xff] %v881
        %v883 = vld [vmem:[%s547 + $0x538] sm:$0xff]
        %884 = vst [vmem:[%s548 + $0x538] sm:$0xff] %v883
        %v885 = vld [vmem:[%s547 + $0x540] sm:$0xff]
        %886 = vst [vmem:[%s548 + $0x540] sm:$0xff] %v885
        %v887 = vld [vmem:[%s547 + $0x548] sm:$0xff]
        %888 = vst [vmem:[%s548 + $0x548] sm:$0xff] %v887
        %v889 = vld [vmem:[%s547 + $0x550] sm:$0xff]
        %890 = vst [vmem:[%s548 + $0x550] sm:$0xff] %v889
        %v891 = vld [vmem:[%s547 + $0x558] sm:$0xff]
        %892 = vst [vmem:[%s548 + $0x558] sm:$0xff] %v891
        %v893 = vld [vmem:[%s547 + $0x560] sm:$0xff]
        %894 = vst [vmem:[%s548 + $0x560] sm:$0xff] %v893
        %v895 = vld [vmem:[%s547 + $0x568] sm:$0xff]
        %896 = vst [vmem:[%s548 + $0x568] sm:$0xff] %v895
        %v897 = vld [vmem:[%s547 + $0x570] sm:$0xff]
        %898 = vst [vmem:[%s548 + $0x570] sm:$0xff] %v897
        %v899 = vld [vmem:[%s547 + $0x578] sm:$0xff]
        %900 = vst [vmem:[%s548 + $0x578] sm:$0xff] %v899
        %v901 = vld [vmem:[%s547 + $0x580] sm:$0xff]
        %902 = vst [vmem:[%s548 + $0x580] sm:$0xff] %v901
        %v903 = vld [vmem:[%s547 + $0x588] sm:$0xff]
        %904 = vst [vmem:[%s548 + $0x588] sm:$0xff] %v903
        %v905 = vld [vmem:[%s547 + $0x590] sm:$0xff]
        %906 = vst [vmem:[%s548 + $0x590] sm:$0xff] %v905
        %v907 = vld [vmem:[%s547 + $0x598] sm:$0xff]
        %908 = vst [vmem:[%s548 + $0x598] sm:$0xff] %v907
        %v909 = vld [vmem:[%s547 + $0x5a0] sm:$0xff]
        %910 = vst [vmem:[%s548 + $0x5a0] sm:$0xff] %v909
        %v911 = vld [vmem:[%s547 + $0x5a8] sm:$0xff]
        %912 = vst [vmem:[%s548 + $0x5a8] sm:$0xff] %v911
        %v913 = vld [vmem:[%s547 + $0x5b0] sm:$0xff]
        %914 = vst [vmem:[%s548 + $0x5b0] sm:$0xff] %v913
        %v915 = vld [vmem:[%s547 + $0x5b8] sm:$0xff]
        %916 = vst [vmem:[%s548 + $0x5b8] sm:$0xff] %v915
        %v917 = vld [vmem:[%s547 + $0x5c0] sm:$0xff]
        %918 = vst [vmem:[%s548 + $0x5c0] sm:$0xff] %v917
        %v919 = vld [vmem:[%s547 + $0x5c8] sm:$0xff]
        %920 = vst [vmem:[%s548 + $0x5c8] sm:$0xff] %v919
        %v921 = vld [vmem:[%s547 + $0x5d0] sm:$0xff]
        %922 = vst [vmem:[%s548 + $0x5d0] sm:$0xff] %v921
        %v923 = vld [vmem:[%s547 + $0x5d8] sm:$0xff]
        %924 = vst [vmem:[%s548 + $0x5d8] sm:$0xff] %v923
        %v925 = vld [vmem:[%s547 + $0x5e0] sm:$0xff]
        %926 = vst [vmem:[%s548 + $0x5e0] sm:$0xff] %v925
        %v927 = vld [vmem:[%s547 + $0x5e8] sm:$0xff]
        %928 = vst [vmem:[%s548 + $0x5e8] sm:$0xff] %v927
        %v929 = vld [vmem:[%s547 + $0x5f0] sm:$0xff]
        %930 = vst [vmem:[%s548 + $0x5f0] sm:$0xff] %v929
        %v931 = vld [vmem:[%s547 + $0x5f8] sm:$0xff]
        %932 = vst [vmem:[%s548 + $0x5f8] sm:$0xff] %v931
        %v933 = vld [vmem:[%s547 + $0x600] sm:$0xff]
        %934 = vst [vmem:[%s548 + $0x600] sm:$0xff] %v933
        %v935 = vld [vmem:[%s547 + $0x608] sm:$0xff]
        %936 = vst [vmem:[%s548 + $0x608] sm:$0xff] %v935
        %v937 = vld [vmem:[%s547 + $0x610] sm:$0xff]
        %938 = vst [vmem:[%s548 + $0x610] sm:$0xff] %v937
        %v939 = vld [vmem:[%s547 + $0x618] sm:$0xff]
        %940 = vst [vmem:[%s548 + $0x618] sm:$0xff] %v939
        %v941 = vld [vmem:[%s547 + $0x620] sm:$0xff]
        %942 = vst [vmem:[%s548 + $0x620] sm:$0xff] %v941
        %v943 = vld [vmem:[%s547 + $0x628] sm:$0xff]
        %944 = vst [vmem:[%s548 + $0x628] sm:$0xff] %v943
        %v945 = vld [vmem:[%s547 + $0x630] sm:$0xff]
        %946 = vst [vmem:[%s548 + $0x630] sm:$0xff] %v945
        %v947 = vld [vmem:[%s547 + $0x638] sm:$0xff]
        %948 = vst [vmem:[%s548 + $0x638] sm:$0xff] %v947
        %v949 = vld [vmem:[%s547 + $0x640] sm:$0xff]
        %950 = vst [vmem:[%s548 + $0x640] sm:$0xff] %v949
        %v951 = vld [vmem:[%s547 + $0x648] sm:$0xff]
        %952 = vst [vmem:[%s548 + $0x648] sm:$0xff] %v951
        %v953 = vld [vmem:[%s547 + $0x650] sm:$0xff]
        %954 = vst [vmem:[%s548 + $0x650] sm:$0xff] %v953
        %v955 = vld [vmem:[%s547 + $0x658] sm:$0xff]
        %956 = vst [vmem:[%s548 + $0x658] sm:$0xff] %v955
        %v957 = vld [vmem:[%s547 + $0x660] sm:$0xff]
        %958 = vst [vmem:[%s548 + $0x660] sm:$0xff] %v957
        %v959 = vld [vmem:[%s547 + $0x668] sm:$0xff]
        %960 = vst [vmem:[%s548 + $0x668] sm:$0xff] %v959
        %v961 = vld [vmem:[%s547 + $0x670] sm:$0xff]
        %962 = vst [vmem:[%s548 + $0x670] sm:$0xff] %v961
        %v963 = vld [vmem:[%s547 + $0x678] sm:$0xff]
        %964 = vst [vmem:[%s548 + $0x678] sm:$0xff] %v963
        %v965 = vld [vmem:[%s547 + $0x680] sm:$0xff]
        %966 = vst [vmem:[%s548 + $0x680] sm:$0xff] %v965
        %v967 = vld [vmem:[%s547 + $0x688] sm:$0xff]
        %968 = vst [vmem:[%s548 + $0x688] sm:$0xff] %v967
        %v969 = vld [vmem:[%s547 + $0x690] sm:$0xff]
        %970 = vst [vmem:[%s548 + $0x690] sm:$0xff] %v969
        %v971 = vld [vmem:[%s547 + $0x698] sm:$0xff]
        %972 = vst [vmem:[%s548 + $0x698] sm:$0xff] %v971
        %v973 = vld [vmem:[%s547 + $0x6a0] sm:$0xff]
        %974 = vst [vmem:[%s548 + $0x6a0] sm:$0xff] %v973
        %v975 = vld [vmem:[%s547 + $0x6a8] sm:$0xff]
        %976 = vst [vmem:[%s548 + $0x6a8] sm:$0xff] %v975
        %v977 = vld [vmem:[%s547 + $0x6b0] sm:$0xff]
        %978 = vst [vmem:[%s548 + $0x6b0] sm:$0xff] %v977
        %v979 = vld [vmem:[%s547 + $0x6b8] sm:$0xff]
        %980 = vst [vmem:[%s548 + $0x6b8] sm:$0xff] %v979
        %v981 = vld [vmem:[%s547 + $0x6c0] sm:$0xff]
        %982 = vst [vmem:[%s548 + $0x6c0] sm:$0xff] %v981
        %v983 = vld [vmem:[%s547 + $0x6c8] sm:$0xff]
        %984 = vst [vmem:[%s548 + $0x6c8] sm:$0xff] %v983
        %v985 = vld [vmem:[%s547 + $0x6d0] sm:$0xff]
        %986 = vst [vmem:[%s548 + $0x6d0] sm:$0xff] %v985
        %v987 = vld [vmem:[%s547 + $0x6d8] sm:$0xff]
        %988 = vst [vmem:[%s548 + $0x6d8] sm:$0xff] %v987
      $region95: #{se_block_forward.1} parent=89 // loop_footer
        %s546 = sadd.s32 1, %s542
      $region96: #{se_block_forward.1} parent=89 // loop_footer_branch
        %541 = sbr.rel target = $region92
      $region97: #{se_block_forward.1} parent=89 // loop_exit
        _
    $region90: #{se_block_forward.1} parent=74 // pred_fallthru
      _
    %p989 = pneg %p537
    // Predicated region
    $region98: #{se_block_forward.1} parent=74 // pred_check
      _
    $region99: #{se_block_forward.1} parent=74 // pred_check_branch
      %991 = sbr.rel (%p537) target = $region101
    $region100: #{se_block_forward.1} parent=74 // pred_region
      %s992 = sand.u32 1760, 7
    $region101: #{se_block_forward.1} parent=74 // pred_fallthru
      _
  $region75: #{se_block_forward.1} parent=0 // pred_fallthru
    _
  // Predicated region
  $region76: #{se_block_forward.1} parent=0 // pred_check
    %p521 = pneg %p517
  $region77: #{se_block_forward.1} parent=0 // pred_check_branch
    %523 = sbr.rel (%p521) target = $region79
  $region78: #{se_block_forward.1} parent=0 // pred_region
    %s524 = sshll.u32 1, 1760
    %s525 = ssub.s32 %s524, 1
    loop: start=0, step=1, limit=1
    $region80: #{se_block_forward.1} parent=78 // loop_pre_header
      _
    $region81: #{se_block_forward.1} parent=78 // loop_header
      %s527 = sphi 0, %s531
      %p528 = scmp.ge.s32.totalorder %s527, 1
      %s532 = sphi %s10, %s10
      %s533 = sphi [#allocation3], [#allocation3]
    $region82: #{se_block_forward.1} parent=78 // loop_header_branch
      %530 = sbr.rel (%p528) target = $region86
    $region83: #{se_block_forward.1} parent=78 // loop_body
      %v534 = vld [vmem:[%s532] sm:%s525]
      %535 = vst [vmem:[%s533] sm:%s525] %v534
    $region84: #{se_block_forward.1} parent=78 // loop_footer
      %s531 = sadd.s32 1, %s527
    $region85: #{se_block_forward.1} parent=78 // loop_footer_branch
      %526 = sbr.rel target = $region81
    $region86: #{se_block_forward.1} parent=78 // loop_exit
      _
  $region79: #{se_block_forward.1} parent=0 // pred_fallthru
    _
  // Predicated region
  $region102: #{se_block_forward.1} parent=0 // pred_check
    _
  $region103: #{se_block_forward.1} parent=0 // pred_check_branch
    %995 = sbr.rel (0) target = $region105
  $region104: #{se_block_forward.1} parent=0 // pred_region
    %996 = vsyncadd %s515, 28160
  $region105: #{se_block_forward.1} parent=0 // pred_fallthru
    _
  %v997 = vld [vmem:[%s0] sm:$0x1]
  %v998 = vld [vmem:[%s3] sm:$0xff]
  %v999 = vld [vmem:[%s3 + $0x8] sm:$0xff]
  %v1000 = vld [vmem:[%s3 + $0x10] sm:$0xff]
  %v1001 = vld [vmem:[%s3 + $0x18] sm:$0xff]
  %v1002 = vld [vmem:[%s3 + $0x20] sm:$0xff]
  %v1003 = vld [vmem:[%s3 + $0x28] sm:$0xff]
  %v1004 = vld [vmem:[%s3 + $0x30] sm:$0xff]
  %v1005 = vld [vmem:[%s3 + $0x38] sm:$0xff]
  %v1006 = vld [vmem:[%s3 + $0x40] sm:$0xff]
  %v1007 = vld [vmem:[%s3 + $0x48] sm:$0xff]
  %v1008 = vld [vmem:[%s3 + $0x50] sm:$0xff]
  %v1009 = vld [vmem:[%s3 + $0x58] sm:$0xff]
  %v1010 = vld [vmem:[%s3 + $0x60] sm:$0xff]
  %v1011 = vld [vmem:[%s3 + $0x68] sm:$0xff]
  %v1012 = vld [vmem:[%s3 + $0x70] sm:$0xff]
  %v1013 = vld [vmem:[%s3 + $0x78] sm:$0xff]
  %v1014 = vld [vmem:[%s3 + $0x80] sm:$0xff]
  %v1015 = vld [vmem:[%s3 + $0x88] sm:$0xff]
  %v1016 = vld [vmem:[%s3 + $0x90] sm:$0xff]
  %v1017 = vld [vmem:[%s3 + $0x98] sm:$0xff]
  %v1018 = vld [vmem:[%s3 + $0xa0] sm:$0xff]
  %v1019 = vld [vmem:[%s3 + $0xa8] sm:$0xff]
  %v1020 = vld [vmem:[%s3 + $0xb0] sm:$0xff]
  %v1021 = vld [vmem:[%s3 + $0xb8] sm:$0xff]
  %v1022 = vld [vmem:[%s3 + $0xc0] sm:$0xff]
  %v1023 = vld [vmem:[%s3 + $0xc8] sm:$0xff]
  %v1024 = vld [vmem:[%s3 + $0xd0] sm:$0xff]
  %v1025 = vld [vmem:[%s3 + $0xd8] sm:$0xff]
  %v1026 = vld [vmem:[%s3 + $0xe0] sm:$0xff]
  %v1027 = vld [vmem:[%s3 + $0xe8] sm:$0xff]
  %v1028 = vld [vmem:[%s3 + $0xf0] sm:$0xff]
  %v1029 = vld [vmem:[%s3 + $0xf8] sm:$0xff]
  %v1030 = vld [vmem:[%s3 + $0x100] sm:$0xff]
  %v1031 = vld [vmem:[%s3 + $0x108] sm:$0xff]
  %v1032 = vld [vmem:[%s3 + $0x110] sm:$0xff]
  %v1033 = vld [vmem:[%s3 + $0x118] sm:$0xff]
  %v1034 = vld [vmem:[%s3 + $0x120] sm:$0xff]
  %v1035 = vld [vmem:[%s3 + $0x128] sm:$0xff]
  %v1036 = vld [vmem:[%s3 + $0x130] sm:$0xff]
  %v1037 = vld [vmem:[%s3 + $0x138] sm:$0xff]
  %v1038 = vld [vmem:[%s3 + $0x140] sm:$0xff]
  %v1039 = vld [vmem:[%s3 + $0x148] sm:$0xff]
  %v1040 = vld [vmem:[%s3 + $0x150] sm:$0xff]
  %v1041 = vld [vmem:[%s3 + $0x158] sm:$0xff]
  %v1042 = vld [vmem:[%s3 + $0x160] sm:$0xff]
  %v1043 = vld [vmem:[%s3 + $0x168] sm:$0xff]
  %v1044 = vld [vmem:[%s3 + $0x170] sm:$0xff]
  %v1045 = vld [vmem:[%s3 + $0x178] sm:$0xff]
  %v1046 = vld [vmem:[%s3 + $0x180] sm:$0xff]
  %v1047 = vld [vmem:[%s3 + $0x188] sm:$0xff]
  %v1048 = vld [vmem:[%s3 + $0x190] sm:$0xff]
  %v1049 = vld [vmem:[%s3 + $0x198] sm:$0xff]
  %v1050 = vld [vmem:[%s3 + $0x1a0] sm:$0x3f]
  %v1051 = vld [vmem:[%s3 + $0x1a8] sm:$0x3f]
  %v1052 = vld [vmem:[%s3 + $0x1b0] sm:$0x3f]
  %v1053 = vld [vmem:[%s3 + $0x1b8] sm:$0x3f]
  %v1054 = vld [vmem:[%s4] sm:$0xf]
  %v1056 = vlaneseq
  %v1057 = vshrl.u32 %v1056, 7
  %v1058 = vsub.s32 0, %v1057
  %v1059 = vrot.slane %v1054, %v1058
  %v1060 = vlaneseq
  %v1061 = vshrl.u32 %v1060, 7
  %v1062 = vsub.s32 1, %v1061
  %v1063 = vrot.slane %v1054, %v1062
  %v1064 = vlaneseq
  %v1065 = vshrl.u32 %v1064, 7
  %v1066 = vsub.s32 2, %v1065
  %v1067 = vrot.slane %v1054, %v1066
  %v1068 = vlaneseq
  %v1069 = vshrl.u32 %v1068, 7
  %v1070 = vsub.s32 3, %v1069
  %v1071 = vrot.slane %v1054, %v1070
  %vm1076 = vcmask 900096
  %v1078 = vsel %vm1076, %v997, 0
  %vm1080 = vcmask 1045504
  %v1082 = vsel %vm1080, %v1050, 0
  %v1085 = vsel %vm1080, %v1051, 0
  %v1088 = vsel %vm1080, %v1052, 0
  %v1091 = vsel %vm1080, %v1053, 0
  %1093 = vmatprep.subr.mxu0 0.0
  %1094 = vmatpush1.msra.mxu0 0.0
  %1095 = vmatprep.subr.mxu0 0.0
  %1096 = vmatpush1.msra.mxu0 0.0
  %1097 = vmatprep.subr.mxu0 %v1085
  %1098 = vmatpush1.msra.mxu0 %v1082
  %1099 = vmatprep.subr.mxu0 %v1047
  %1100 = vmatpush1.msra.mxu0 %v1046
  %1101 = vmatprep.subr.mxu0 %v1043
  %1102 = vmatpush1.msra.mxu0 %v1042
  %1103 = vmatprep.subr.mxu0 %v1039
  %1104 = vmatpush1.msra.mxu0 %v1038
  %1105 = vmatprep.subr.mxu0 %v1035
  %1106 = vmatpush1.msra.mxu0 %v1034
  %1107 = vmatprep.subr.mxu0 %v1031
  %1108 = vmatpush1.msra.mxu0 %v1030
  %1109 = vmatprep.subr.mxu0 %v1027
  %1110 = vmatpush1.msra.mxu0 %v1026
  %1111 = vmatprep.subr.mxu0 %v1023
  %1112 = vmatpush1.msra.mxu0 %v1022
  %1113 = vmatprep.subr.mxu0 %v1019
  %1114 = vmatpush1.msra.mxu0 %v1018
  %1115 = vmatprep.subr.mxu0 %v1015
  %1116 = vmatpush1.msra.mxu0 %v1014
  %1117 = vmatprep.subr.mxu0 %v1011
  %1118 = vmatpush1.msra.mxu0 %v1010
  %1119 = vmatprep.subr.mxu0 %v1007
  %1120 = vmatpush1.msra.mxu0 %v1006
  %1121 = vmatprep.subr.mxu0 %v1003
  %1122 = vmatpush1.msra.mxu0 %v1002
  %1123 = vmatprep.subr.mxu0 %v999
  %1124 = vmatpush1.msra.mxu0 %v998
  %1125 = vmatprep.subr.mxu0 0.0
  %1126 = vmatpush2.msra.mxu0 0.0
  %1127 = vmatprep.subr.mxu0 0.0
  %1128 = vmatpush2.msra.mxu0 0.0
  %1129 = vmatprep.subr.mxu0 0.0
  %1130 = vmatpush2.msra.mxu0 0.0
  %1131 = vmatprep.subr.mxu0 0.0
  %1132 = vmatpush2.msra.mxu0 0.0
  %1133 = vmatprep.subr.mxu0 0.0
  %1134 = vmatpush2.msra.mxu0 0.0
  %1135 = vmatprep.subr.mxu0 0.0
  %1136 = vmatpush2.msra.mxu0 0.0
  %1137 = vmatprep.subr.mxu0 0.0
  %1138 = vmatpush2.msra.mxu0 0.0
  %1139 = vmatprep.subr.mxu0 0.0
  %1140 = vmatpush2.msra.mxu0 0.0
  %1141 = vmatprep.subr.mxu0 0.0
  %1142 = vmatpush2.msra.mxu0 0.0
  %1143 = vmatprep.subr.mxu0 0.0
  %1144 = vmatpush2.msra.mxu0 0.0
  %1145 = vmatprep.subr.mxu0 0.0
  %1146 = vmatpush2.msra.mxu0 0.0
  %1147 = vmatprep.subr.mxu0 0.0
  %1148 = vmatpush2.msra.mxu0 0.0
  %1149 = vmatprep.subr.mxu0 0.0
  %1150 = vmatpush2.msra.mxu0 0.0
  %1151 = vmatprep.subr.mxu0 0.0
  %1152 = vmatpush2.msra.mxu0 0.0
  %1153 = vmatprep.subr.mxu0 0.0
  %1154 = vmatpush2.msra.mxu0 0.0
  %1155 = vmatprep.subr.mxu0 0.0
  %1156 = vmatpush2.msra.mxu0 0.0
  %1157 = vmatprep.mubr.f32.mxu0 0.0
  %1158 = vmatmul.mubr.f32.gmra.mxu0 %v1078
  %v1159 = vpop.f32.mrf.mxu0
  %v1160 = vadd.f32 %v1059, %v1159
  %v1161 = vpop.f32.mrf.mxu0
  %v1162 = vadd.f32 %v1063, %v1161
  %1163 = vdwg.mxu0
  %1164 = vmatprep.subr.mxu0 0.0
  %1165 = vmatpush1.msra.mxu0 0.0
  %1166 = vmatprep.subr.mxu0 0.0
  %1167 = vmatpush1.msra.mxu0 0.0
  %1168 = vmatprep.subr.mxu0 %v1091
  %1169 = vmatpush1.msra.mxu0 %v1088
  %1170 = vmatprep.subr.mxu0 %v1049
  %1171 = vmatpush1.msra.mxu0 %v1048
  %1172 = vmatprep.subr.mxu0 %v1045
  %1173 = vmatpush1.msra.mxu0 %v1044
  %1174 = vmatprep.subr.mxu0 %v1041
  %1175 = vmatpush1.msra.mxu0 %v1040
  %1176 = vmatprep.subr.mxu0 %v1037
  %1177 = vmatpush1.msra.mxu0 %v1036
  %1178 = vmatprep.subr.mxu0 %v1033
  %1179 = vmatpush1.msra.mxu0 %v1032
  %1180 = vmatprep.subr.mxu0 %v1029
  %1181 = vmatpush1.msra.mxu0 %v1028
  %1182 = vmatprep.subr.mxu0 %v1025
  %1183 = vmatpush1.msra.mxu0 %v1024
  %1184 = vmatprep.subr.mxu0 %v1021
  %1185 = vmatpush1.msra.mxu0 %v1020
  %1186 = vmatprep.subr.mxu0 %v1017
  %1187 = vmatpush1.msra.mxu0 %v1016
  %1188 = vmatprep.subr.mxu0 %v1013
  %1189 = vmatpush1.msra.mxu0 %v1012
  %1190 = vmatprep.subr.mxu0 %v1009
  %1191 = vmatpush1.msra.mxu0 %v1008
  %1192 = vmatprep.subr.mxu0 %v1005
  %1193 = vmatpush1.msra.mxu0 %v1004
  %1194 = vmatprep.subr.mxu0 %v1001
  %1195 = vmatpush1.msra.mxu0 %v1000
  %1196 = vmatprep.subr.mxu0 0.0
  %1197 = vmatpush2.msra.mxu0 0.0
  %1198 = vmatprep.subr.mxu0 0.0
  %1199 = vmatpush2.msra.mxu0 0.0
  %1200 = vmatprep.subr.mxu0 0.0
  %1201 = vmatpush2.msra.mxu0 0.0
  %1202 = vmatprep.subr.mxu0 0.0
  %1203 = vmatpush2.msra.mxu0 0.0
  %1204 = vmatprep.subr.mxu0 0.0
  %1205 = vmatpush2.msra.mxu0 0.0
  %1206 = vmatprep.subr.mxu0 0.0
  %1207 = vmatpush2.msra.mxu0 0.0
  %1208 = vmatprep.subr.mxu0 0.0
  %1209 = vmatpush2.msra.mxu0 0.0
  %1210 = vmatprep.subr.mxu0 0.0
  %1211 = vmatpush2.msra.mxu0 0.0
  %1212 = vmatprep.subr.mxu0 0.0
  %1213 = vmatpush2.msra.mxu0 0.0
  %1214 = vmatprep.subr.mxu0 0.0
  %1215 = vmatpush2.msra.mxu0 0.0
  %1216 = vmatprep.subr.mxu0 0.0
  %1217 = vmatpush2.msra.mxu0 0.0
  %1218 = vmatprep.subr.mxu0 0.0
  %1219 = vmatpush2.msra.mxu0 0.0
  %1220 = vmatprep.subr.mxu0 0.0
  %1221 = vmatpush2.msra.mxu0 0.0
  %1222 = vmatprep.subr.mxu0 0.0
  %1223 = vmatpush2.msra.mxu0 0.0
  %1224 = vmatprep.subr.mxu0 0.0
  %1225 = vmatpush2.msra.mxu0 0.0
  %1226 = vmatprep.subr.mxu0 0.0
  %1227 = vmatpush2.msra.mxu0 0.0
  %1228 = vmatprep.mubr.f32.mxu0 0.0
  %1229 = vmatmul.mubr.f32.gmra.mxu0 %v1078
  %v1230 = vpop.f32.mrf.mxu0
  %v1231 = vadd.f32 %v1067, %v1230
  %v1232 = vpop.f32.mrf.mxu0
  %v1233 = vadd.f32 %v1071, %v1232
  %1234 = vdwg.mxu0
  %v1235 = vxor.u32 %v1160, 2147483648
  %v1236 = vxor.u32 %v1162, 2147483648
  %v1237 = vxor.u32 %v1231, 2147483648
  %v1238 = vxor.u32 %v1233, 2147483648
  %v1239 = vmul.f32 %v1235, 1.442695
  %v1240 = vpow.pop %v1239
  %v1241 = vmul.f32 %v1236, 1.442695
  %v1242 = vpow.pop %v1241
  %v1243 = vmul.f32 %v1237, 1.442695
  %v1244 = vpow.pop %v1243
  %v1245 = vmul.f32 %v1238, 1.442695
  %v1246 = vpow.pop %v1245
  %v1247 = vadd.f32 %v1240, 1.0
  %v1248 = vadd.f32 %v1242, 1.0
  %v1249 = vadd.f32 %v1244, 1.0
  %v1250 = vadd.f32 %v1246, 1.0
  %v1251 = vrcp.pop %v1247
  %v1252 = vmul.f32 1.0, %v1251
  %v1253 = vrcp.pop %v1248
  %v1254 = vmul.f32 1.0, %v1253
  %v1255 = vrcp.pop %v1249
  %v1256 = vmul.f32 1.0, %v1255
  %v1257 = vrcp.pop %v1250
  %v1258 = vmul.f32 1.0, %v1257
  %v1259 = vld [vmem:[%s1] sm:$0xff]
  %v1260 = vld [vmem:[%s1 + $0x8] sm:$0xff]
  %v1261 = vld [vmem:[%s1 + $0x10] sm:$0xff]
  %v1262 = vld [vmem:[%s1 + $0x18] sm:$0xff]
  %v1263 = vld [vmem:[%s1 + $0x20] sm:$0xff]
  %v1264 = vld [vmem:[%s1 + $0x28] sm:$0xff]
  %v1265 = vld [vmem:[%s1 + $0x30] sm:$0xff]
  %v1266 = vld [vmem:[%s1 + $0x38] sm:$0xff]
  %v1267 = vld [vmem:[%s1 + $0x40] sm:$0xff]
  %v1268 = vld [vmem:[%s1 + $0x48] sm:$0xff]
  %v1269 = vld [vmem:[%s1 + $0x50] sm:$0xff]
  %v1270 = vld [vmem:[%s1 + $0x58] sm:$0xff]
  %v1271 = vld [vmem:[%s1 + $0x60] sm:$0xff]
  %v1272 = vld [vmem:[%s1 + $0x68] sm:$0xff]
  %v1273 = vld [vmem:[%s1 + $0x70] sm:$0xff]
  %v1274 = vld [vmem:[%s1 + $0x78] sm:$0xff]
  %v1275 = vld [vmem:[%s1 + $0x80] sm:$0xff]
  %v1276 = vld [vmem:[%s1 + $0x88] sm:$0xff]
  %v1277 = vld [vmem:[%s1 + $0x90] sm:$0xff]
  %v1278 = vld [vmem:[%s1 + $0x98] sm:$0xff]
  %v1279 = vld [vmem:[%s1 + $0xa0] sm:$0xff]
  %v1280 = vld [vmem:[%s1 + $0xa8] sm:$0xff]
  %v1281 = vld [vmem:[%s1 + $0xb0] sm:$0xff]
  %v1282 = vld [vmem:[%s1 + $0xb8] sm:$0xff]
  %v1283 = vld [vmem:[%s1 + $0xc0] sm:$0xff]
  %v1284 = vld [vmem:[%s1 + $0xc8] sm:$0xff]
  %v1285 = vld [vmem:[%s1 + $0xd0] sm:$0xff]
  %v1286 = vld [vmem:[%s1 + $0xd8] sm:$0xff]
  %v1287 = vld [vmem:[%s1 + $0xe0] sm:$0xff]
  %v1288 = vld [vmem:[%s1 + $0xe8] sm:$0xff]
  %v1289 = vld [vmem:[%s1 + $0xf0] sm:$0xff]
  %v1290 = vld [vmem:[%s1 + $0xf8] sm:$0xff]
  %v1291 = vld [vmem:[%s1 + $0x100] sm:$0xff]
  %v1292 = vld [vmem:[%s1 + $0x108] sm:$0xff]
  %v1293 = vld [vmem:[%s1 + $0x110] sm:$0xff]
  %v1294 = vld [vmem:[%s1 + $0x118] sm:$0xff]
  %v1295 = vld [vmem:[%s1 + $0x120] sm:$0xff]
  %v1296 = vld [vmem:[%s1 + $0x128] sm:$0xff]
  %v1297 = vld [vmem:[%s1 + $0x130] sm:$0xff]
  %v1298 = vld [vmem:[%s1 + $0x138] sm:$0xff]
  %v1299 = vld [vmem:[%s1 + $0x140] sm:$0xff]
  %v1300 = vld [vmem:[%s1 + $0x148] sm:$0xff]
  %v1301 = vld [vmem:[%s1 + $0x150] sm:$0xff]
  %v1302 = vld [vmem:[%s1 + $0x158] sm:$0xff]
  %v1303 = vld [vmem:[%s1 + $0x160] sm:$0xff]
  %v1304 = vld [vmem:[%s1 + $0x168] sm:$0xff]
  %v1305 = vld [vmem:[%s1 + $0x170] sm:$0xff]
  %v1306 = vld [vmem:[%s1 + $0x178] sm:$0xff]
  %v1307 = vld [vmem:[%s1 + $0x180] sm:$0xff]
  %v1308 = vld [vmem:[%s1 + $0x188] sm:$0xff]
  %v1309 = vld [vmem:[%s1 + $0x190] sm:$0xff]
  %v1310 = vld [vmem:[%s1 + $0x198] sm:$0xff]
  %v1311 = vld [vmem:[%s1 + $0x1a0] sm:$0xff]
  %v1312 = vld [vmem:[%s1 + $0x1a8] sm:$0xff]
  %v1313 = vld [vmem:[%s1 + $0x1b0] sm:$0xff]
  %1314 = vxpose.xlu0.b32.start [1/16] %v1259, 128
  %1315 = vxpose.xlu0.b32.cont [2/16] %v1260, 128
  %1316 = vxpose.xlu0.b32.cont [3/16] %v1261, 128
  %1317 = vxpose.xlu0.b32.cont [4/16] %v1262, 128
  %1318 = vxpose.xlu0.b32.cont [5/16] %v1263, 128
  %1319 = vxpose.xlu0.b32.cont [6/16] %v1264, 128
  %1320 = vxpose.xlu0.b32.cont [7/16] %v1265, 128
  %1321 = vxpose.xlu0.b32.cont [8/16] %v1266, 128
  %1322 = vxpose.xlu0.b32.cont [9/16] %v1267, 128
  %1323 = vxpose.xlu0.b32.cont [10/16] %v1268, 128
  %1324 = vxpose.xlu0.b32.cont [11/16] %v1269, 128
  %1325 = vxpose.xlu0.b32.cont [12/16] %v1270, 128
  %1326 = vxpose.xlu0.b32.cont [13/16] %v1271, 128
  %1327 = vxpose.xlu0.b32.cont [14/16] %v1272, 128
  %1328 = vxpose.xlu0.b32.cont [15/16] %v1273, 128
  %1329 = vxpose.xlu0.b32.end [16/16] %v1274, 128
  %v1330 = vpop.trf.xlu0
  %v1331 = vpop.trf.xlu0
  %v1332 = vpop.trf.xlu0
  %v1333 = vpop.trf.xlu0
  %v1334 = vpop.trf.xlu0
  %v1335 = vpop.trf.xlu0
  %v1336 = vpop.trf.xlu0
  %v1337 = vpop.trf.xlu0
  %v1338 = vpop.trf.xlu0
  %v1339 = vpop.trf.xlu0
  %v1340 = vpop.trf.xlu0
  %v1341 = vpop.trf.xlu0
  %v1342 = vpop.trf.xlu0
  %v1343 = vpop.trf.xlu0
  %v1344 = vpop.trf.xlu0
  %v1345 = vpop.trf.xlu0
  %1346 = vxpose.xlu0.b32.start [1/16] %v1275, 128
  %1347 = vxpose.xlu0.b32.cont [2/16] %v1276, 128
  %1348 = vxpose.xlu0.b32.cont [3/16] %v1277, 128
  %1349 = vxpose.xlu0.b32.cont [4/16] %v1278, 128
  %1350 = vxpose.xlu0.b32.cont [5/16] %v1279, 128
  %1351 = vxpose.xlu0.b32.cont [6/16] %v1280, 128
  %1352 = vxpose.xlu0.b32.cont [7/16] %v1281, 128
  %1353 = vxpose.xlu0.b32.cont [8/16] %v1282, 128
  %1354 = vxpose.xlu0.b32.cont [9/16] %v1283, 128
  %1355 = vxpose.xlu0.b32.cont [10/16] %v1284, 128
  %1356 = vxpose.xlu0.b32.cont [11/16] %v1285, 128
  %1357 = vxpose.xlu0.b32.cont [12/16] %v1286, 128
  %1358 = vxpose.xlu0.b32.cont [13/16] %v1287, 128
  %1359 = vxpose.xlu0.b32.cont [14/16] %v1288, 128
  %1360 = vxpose.xlu0.b32.cont [15/16] %v1289, 128
  %1361 = vxpose.xlu0.b32.end [16/16] %v1290, 128
  %v1362 = vpop.trf.xlu0
  %v1363 = vpop.trf.xlu0
  %v1364 = vpop.trf.xlu0
  %v1365 = vpop.trf.xlu0
  %v1366 = vpop.trf.xlu0
  %v1367 = vpop.trf.xlu0
  %v1368 = vpop.trf.xlu0
  %v1369 = vpop.trf.xlu0
  %v1370 = vpop.trf.xlu0
  %v1371 = vpop.trf.xlu0
  %v1372 = vpop.trf.xlu0
  %v1373 = vpop.trf.xlu0
  %v1374 = vpop.trf.xlu0
  %v1375 = vpop.trf.xlu0
  %v1376 = vpop.trf.xlu0
  %v1377 = vpop.trf.xlu0
  %1378 = vxpose.xlu0.b32.start [1/16] %v1291, 128
  %1379 = vxpose.xlu0.b32.cont [2/16] %v1292, 128
  %1380 = vxpose.xlu0.b32.cont [3/16] %v1293, 128
  %1381 = vxpose.xlu0.b32.cont [4/16] %v1294, 128
  %1382 = vxpose.xlu0.b32.cont [5/16] %v1295, 128
  %1383 = vxpose.xlu0.b32.cont [6/16] %v1296, 128
  %1384 = vxpose.xlu0.b32.cont [7/16] %v1297, 128
  %1385 = vxpose.xlu0.b32.cont [8/16] %v1298, 128
  %1386 = vxpose.xlu0.b32.cont [9/16] %v1299, 128
  %1387 = vxpose.xlu0.b32.cont [10/16] %v1300, 128
  %1388 = vxpose.xlu0.b32.cont [11/16] %v1301, 128
  %1389 = vxpose.xlu0.b32.cont [12/16] %v1302, 128
  %1390 = vxpose.xlu0.b32.cont [13/16] %v1303, 128
  %1391 = vxpose.xlu0.b32.cont [14/16] %v1304, 128
  %1392 = vxpose.xlu0.b32.cont [15/16] %v1305, 128
  %1393 = vxpose.xlu0.b32.end [16/16] %v1306, 128
  %v1394 = vpop.trf.xlu0
  %v1395 = vpop.trf.xlu0
  %v1396 = vpop.trf.xlu0
  %v1397 = vpop.trf.xlu0
  %v1398 = vpop.trf.xlu0
  %v1399 = vpop.trf.xlu0
  %v1400 = vpop.trf.xlu0
  %v1401 = vpop.trf.xlu0
  %v1402 = vpop.trf.xlu0
  %v1403 = vpop.trf.xlu0
  %v1404 = vpop.trf.xlu0
  %v1405 = vpop.trf.xlu0
  %v1406 = vpop.trf.xlu0
  %v1407 = vpop.trf.xlu0
  %v1408 = vpop.trf.xlu0
  %v1409 = vpop.trf.xlu0
  %1410 = vxpose.xlu0.b32.start [1/16] %v1307, 128
  %1411 = vxpose.xlu0.b32.cont [2/16] %v1308, 128
  %1412 = vxpose.xlu0.b32.cont [3/16] %v1309, 128
  %1413 = vxpose.xlu0.b32.cont [4/16] %v1310, 128
  %1414 = vxpose.xlu0.b32.cont [5/16] %v1311, 128
  %1415 = vxpose.xlu0.b32.cont [6/16] %v1312, 128
  %1416 = vxpose.xlu0.b32.cont [7/16] %v1313, 128
  %1417 = vxpose.xlu0.b32.cont [8/16] 0.0, 128
  %1418 = vxpose.xlu0.b32.cont [9/16] 0.0, 128
  %1419 = vxpose.xlu0.b32.cont [10/16] 0.0, 128
  %1420 = vxpose.xlu0.b32.cont [11/16] 0.0, 128
  %1421 = vxpose.xlu0.b32.cont [12/16] 0.0, 128
  %1422 = vxpose.xlu0.b32.cont [13/16] 0.0, 128
  %1423 = vxpose.xlu0.b32.cont [14/16] 0.0, 128
  %1424 = vxpose.xlu0.b32.cont [15/16] 0.0, 128
  %1425 = vxpose.xlu0.b32.end [16/16] 0.0, 128
  %v1426 = vpop.trf.xlu0
  %v1427 = vpop.trf.xlu0
  %v1428 = vpop.trf.xlu0
  %v1429 = vpop.trf.xlu0
  %v1430 = vpop.trf.xlu0
  %v1431 = vpop.trf.xlu0
  %v1432 = vpop.trf.xlu0
  %v1433 = vpop.trf.xlu0
  %v1434 = vpop.trf.xlu0
  %v1435 = vpop.trf.xlu0
  %v1436 = vpop.trf.xlu0
  %v1437 = vpop.trf.xlu0
  %v1438 = vpop.trf.xlu0
  %v1439 = vpop.trf.xlu0
  %v1440 = vpop.trf.xlu0
  %v1441 = vpop.trf.xlu0
  %v1442 = vlaneseq
  %v1443 = vshrl.u32 %v1442, 7
  %v1444 = vsub.s32 0, %v1443
  %v1445 = vrot.slane %v1252, %v1444
  %v1446 = vlaneseq
  %v1447 = vshrl.u32 %v1446, 7
  %v1448 = vsub.s32 0, %v1447
  %v1449 = vrot.slane %v1254, %v1448
  %v1450 = vlaneseq
  %v1451 = vshrl.u32 %v1450, 7
  %v1452 = vsub.s32 0, %v1451
  %v1453 = vrot.slane %v1256, %v1452
  %v1454 = vlaneseq
  %v1455 = vshrl.u32 %v1454, 7
  %v1456 = vsub.s32 0, %v1455
  %v1457 = vrot.slane %v1258, %v1456
  %v1458 = vmul.f32 %v1445, %v1330
  %v1459 = vmul.f32 %v1449, %v1362
  %v1460 = vmul.f32 %v1453, %v1394
  %v1461 = vmul.f32 %v1457, %v1426
  %v1462 = vmul.f32 %v1445, %v1331
  %v1463 = vmul.f32 %v1449, %v1363
  %v1464 = vmul.f32 %v1453, %v1395
  %v1465 = vmul.f32 %v1457, %v1427
  %v1466 = vmul.f32 %v1445, %v1332
  %v1467 = vmul.f32 %v1449, %v1364
  %v1468 = vmul.f32 %v1453, %v1396
  %v1469 = vmul.f32 %v1457, %v1428
  %v1470 = vmul.f32 %v1445, %v1333
  %v1471 = vmul.f32 %v1449, %v1365
  %v1472 = vmul.f32 %v1453, %v1397
  %v1473 = vmul.f32 %v1457, %v1429
  %v1474 = vmul.f32 %v1445, %v1334
  %v1475 = vmul.f32 %v1449, %v1366
  %v1476 = vmul.f32 %v1453, %v1398
  %v1477 = vmul.f32 %v1457, %v1430
  %v1478 = vmul.f32 %v1445, %v1335
  %v1479 = vmul.f32 %v1449, %v1367
  %v1480 = vmul.f32 %v1453, %v1399
  %v1481 = vmul.f32 %v1457, %v1431
  %v1482 = vmul.f32 %v1445, %v1336
  %v1483 = vmul.f32 %v1449, %v1368
  %v1484 = vmul.f32 %v1453, %v1400
  %v1485 = vmul.f32 %v1457, %v1432
  %s1486 = smul.u32 8, 55
  %s1487 = smul.u32 %s1486, 4
  %s1488 = sshll.u32 %s1487, 4
  %1489 = dma.done [#allocation4], %s1488
  %v1490 = vld [vmem:[#allocation2] sm:$0xff]
  %v1491 = vld [vmem:[#allocation2 + $0x8] sm:$0xff]
  %v1492 = vld [vmem:[#allocation2 + $0x10] sm:$0xff]
  %v1493 = vld [vmem:[#allocation2 + $0x18] sm:$0xff]
  %v1494 = vld [vmem:[#allocation2 + $0x20] sm:$0xff]
  %v1495 = vld [vmem:[#allocation2 + $0x28] sm:$0xff]
  %v1496 = vld [vmem:[#allocation2 + $0x30] sm:$0xff]
  %v1497 = vld [vmem:[#allocation2 + $0x38] sm:$0xff]
  %v1498 = vld [vmem:[#allocation2 + $0x40] sm:$0xff]
  %v1499 = vld [vmem:[#allocation2 + $0x48] sm:$0xff]
  %v1500 = vld [vmem:[#allocation2 + $0x50] sm:$0xff]
  %v1501 = vld [vmem:[#allocation2 + $0x58] sm:$0xff]
  %v1502 = vld [vmem:[#allocation2 + $0x60] sm:$0xff]
  %v1503 = vld [vmem:[#allocation2 + $0x68] sm:$0xff]
  %v1504 = vld [vmem:[#allocation2 + $0x70] sm:$0xff]
  %v1505 = vld [vmem:[#allocation2 + $0x78] sm:$0xff]
  %v1506 = vld [vmem:[#allocation2 + $0x80] sm:$0xff]
  %v1507 = vld [vmem:[#allocation2 + $0x88] sm:$0xff]
  %v1508 = vld [vmem:[#allocation2 + $0x90] sm:$0xff]
  %v1509 = vld [vmem:[#allocation2 + $0x98] sm:$0xff]
  %v1510 = vld [vmem:[#allocation2 + $0xa0] sm:$0xff]
  %v1511 = vld [vmem:[#allocation2 + $0xa8] sm:$0xff]
  %v1512 = vld [vmem:[#allocation2 + $0xb0] sm:$0xff]
  %v1513 = vld [vmem:[#allocation2 + $0xb8] sm:$0xff]
  %v1514 = vld [vmem:[#allocation2 + $0xc0] sm:$0xff]
  %v1515 = vld [vmem:[#allocation2 + $0xc8] sm:$0xff]
  %v1516 = vld [vmem:[#allocation2 + $0xd0] sm:$0xff]
  %v1517 = vld [vmem:[#allocation2 + $0xd8] sm:$0xff]
  %v1518 = vld [vmem:[#allocation2 + $0xe0] sm:$0xff]
  %v1519 = vld [vmem:[#allocation2 + $0xe8] sm:$0xff]
  %v1520 = vld [vmem:[#allocation2 + $0xf0] sm:$0xff]
  %v1521 = vld [vmem:[#allocation2 + $0xf8] sm:$0xff]
  %v1522 = vld [vmem:[#allocation2 + $0x100] sm:$0xff]
  %v1523 = vld [vmem:[#allocation2 + $0x108] sm:$0xff]
  %v1524 = vld [vmem:[#allocation2 + $0x110] sm:$0xff]
  %v1525 = vld [vmem:[#allocation2 + $0x118] sm:$0xff]
  %v1526 = vld [vmem:[#allocation2 + $0x120] sm:$0xff]
  %v1527 = vld [vmem:[#allocation2 + $0x128] sm:$0xff]
  %v1528 = vld [vmem:[#allocation2 + $0x130] sm:$0xff]
  %v1529 = vld [vmem:[#allocation2 + $0x138] sm:$0xff]
  %v1530 = vld [vmem:[#allocation2 + $0x140] sm:$0xff]
  %v1531 = vld [vmem:[#allocation2 + $0x148] sm:$0xff]
  %v1532 = vld [vmem:[#allocation2 + $0x150] sm:$0xff]
  %v1533 = vld [vmem:[#allocation2 + $0x158] sm:$0xff]
  %v1534 = vld [vmem:[#allocation2 + $0x160] sm:$0xff]
  %v1535 = vld [vmem:[#allocation2 + $0x168] sm:$0xff]
  %v1536 = vld [vmem:[#allocation2 + $0x170] sm:$0xff]
  %v1537 = vld [vmem:[#allocation2 + $0x178] sm:$0xff]
  %v1538 = vld [vmem:[#allocation2 + $0x180] sm:$0xff]
  %v1539 = vld [vmem:[#allocation2 + $0x188] sm:$0xff]
  %v1540 = vld [vmem:[#allocation2 + $0x190] sm:$0xff]
  %v1541 = vld [vmem:[#allocation2 + $0x198] sm:$0xff]
  %v1542 = vld [vmem:[#allocation2 + $0x1a0] sm:$0xff]
  %v1543 = vld [vmem:[#allocation2 + $0x1a8] sm:$0xff]
  %v1544 = vld [vmem:[#allocation2 + $0x1b0] sm:$0xff]
  %v1545 = vld [vmem:[#allocation2 + $0x1b8] sm:$0xff]
  %v1546 = vld [vmem:[#allocation2 + $0x1c0] sm:$0xff]
  %v1547 = vld [vmem:[#allocation2 + $0x1c8] sm:$0xff]
  %v1548 = vld [vmem:[#allocation2 + $0x1d0] sm:$0xff]
  %v1549 = vld [vmem:[#allocation2 + $0x1d8] sm:$0xff]
  %v1550 = vld [vmem:[#allocation2 + $0x1e0] sm:$0xff]
  %v1551 = vld [vmem:[#allocation2 + $0x1e8] sm:$0xff]
  %v1552 = vld [vmem:[#allocation2 + $0x1f0] sm:$0xff]
  %v1553 = vld [vmem:[#allocation2 + $0x1f8] sm:$0xff]
  %v1554 = vld [vmem:[#allocation2 + $0x200] sm:$0xff]
  %v1555 = vld [vmem:[#allocation2 + $0x208] sm:$0xff]
  %v1556 = vld [vmem:[#allocation2 + $0x210] sm:$0xff]
  %v1557 = vld [vmem:[#allocation2 + $0x218] sm:$0xff]
  %v1558 = vld [vmem:[#allocation2 + $0x220] sm:$0xff]
  %v1559 = vld [vmem:[#allocation2 + $0x228] sm:$0xff]
  %v1560 = vld [vmem:[#allocation2 + $0x230] sm:$0xff]
  %v1561 = vld [vmem:[#allocation2 + $0x238] sm:$0xff]
  %v1562 = vld [vmem:[#allocation2 + $0x240] sm:$0xff]
  %v1563 = vld [vmem:[#allocation2 + $0x248] sm:$0xff]
  %v1564 = vld [vmem:[#allocation2 + $0x250] sm:$0xff]
  %v1565 = vld [vmem:[#allocation2 + $0x258] sm:$0xff]
  %v1566 = vld [vmem:[#allocation2 + $0x260] sm:$0xff]
  %v1567 = vld [vmem:[#allocation2 + $0x268] sm:$0xff]
  %v1568 = vld [vmem:[#allocation2 + $0x270] sm:$0xff]
  %v1569 = vld [vmem:[#allocation2 + $0x278] sm:$0xff]
  %v1570 = vld [vmem:[#allocation2 + $0x280] sm:$0xff]
  %v1571 = vld [vmem:[#allocation2 + $0x288] sm:$0xff]
  %v1572 = vld [vmem:[#allocation2 + $0x290] sm:$0xff]
  %v1573 = vld [vmem:[#allocation2 + $0x298] sm:$0xff]
  %v1574 = vld [vmem:[#allocation2 + $0x2a0] sm:$0xff]
  %v1575 = vld [vmem:[#allocation2 + $0x2a8] sm:$0xff]
  %v1576 = vld [vmem:[#allocation2 + $0x2b0] sm:$0xff]
  %v1577 = vld [vmem:[#allocation2 + $0x2b8] sm:$0xff]
  %v1578 = vld [vmem:[#allocation2 + $0x2c0] sm:$0xff]
  %v1579 = vld [vmem:[#allocation2 + $0x2c8] sm:$0xff]
  %v1580 = vld [vmem:[#allocation2 + $0x2d0] sm:$0xff]
  %v1581 = vld [vmem:[#allocation2 + $0x2d8] sm:$0xff]
  %v1582 = vld [vmem:[#allocation2 + $0x2e0] sm:$0xff]
  %v1583 = vld [vmem:[#allocation2 + $0x2e8] sm:$0xff]
  %v1584 = vld [vmem:[#allocation2 + $0x2f0] sm:$0xff]
  %v1585 = vld [vmem:[#allocation2 + $0x2f8] sm:$0xff]
  %v1586 = vld [vmem:[#allocation2 + $0x300] sm:$0xff]
  %v1587 = vld [vmem:[#allocation2 + $0x308] sm:$0xff]
  %v1588 = vld [vmem:[#allocation2 + $0x310] sm:$0xff]
  %v1589 = vld [vmem:[#allocation2 + $0x318] sm:$0xff]
  %v1590 = vld [vmem:[#allocation2 + $0x320] sm:$0xff]
  %v1591 = vld [vmem:[#allocation2 + $0x328] sm:$0xff]
  %v1592 = vld [vmem:[#allocation2 + $0x330] sm:$0xff]
  %v1593 = vld [vmem:[#allocation2 + $0x338] sm:$0xff]
  %v1594 = vld [vmem:[#allocation2 + $0x340] sm:$0xff]
  %v1595 = vld [vmem:[#allocation2 + $0x348] sm:$0xff]
  %v1596 = vld [vmem:[#allocation2 + $0x350] sm:$0xff]
  %v1597 = vld [vmem:[#allocation2 + $0x358] sm:$0xff]
  %v1598 = vld [vmem:[#allocation2 + $0x360] sm:$0xff]
  %v1599 = vld [vmem:[#allocation2 + $0x368] sm:$0xff]
  %v1600 = vld [vmem:[#allocation2 + $0x370] sm:$0xff]
  %v1601 = vld [vmem:[#allocation2 + $0x378] sm:$0xff]
  %v1602 = vld [vmem:[#allocation2 + $0x380] sm:$0xff]
  %v1603 = vld [vmem:[#allocation2 + $0x388] sm:$0xff]
  %v1604 = vld [vmem:[#allocation2 + $0x390] sm:$0xff]
  %v1605 = vld [vmem:[#allocation2 + $0x398] sm:$0xff]
  %v1606 = vld [vmem:[#allocation2 + $0x3a0] sm:$0xff]
  %v1607 = vld [vmem:[#allocation2 + $0x3a8] sm:$0xff]
  %v1608 = vld [vmem:[#allocation2 + $0x3b0] sm:$0xff]
  %v1609 = vld [vmem:[#allocation2 + $0x3b8] sm:$0xff]
  %v1610 = vld [vmem:[#allocation2 + $0x3c0] sm:$0xff]
  %v1611 = vld [vmem:[#allocation2 + $0x3c8] sm:$0xff]
  %v1612 = vld [vmem:[#allocation2 + $0x3d0] sm:$0xff]
  %v1613 = vld [vmem:[#allocation2 + $0x3d8] sm:$0xff]
  %v1614 = vld [vmem:[#allocation2 + $0x3e0] sm:$0xff]
  %v1615 = vld [vmem:[#allocation2 + $0x3e8] sm:$0xff]
  %v1616 = vld [vmem:[#allocation2 + $0x3f0] sm:$0xff]
  %v1617 = vld [vmem:[#allocation2 + $0x3f8] sm:$0xff]
  %v1618 = vld [vmem:[#allocation2 + $0x400] sm:$0xff]
  %v1619 = vld [vmem:[#allocation2 + $0x408] sm:$0xff]
  %v1620 = vld [vmem:[#allocation2 + $0x410] sm:$0xff]
  %v1621 = vld [vmem:[#allocation2 + $0x418] sm:$0xff]
  %v1622 = vld [vmem:[#allocation2 + $0x420] sm:$0xff]
  %v1623 = vld [vmem:[#allocation2 + $0x428] sm:$0xff]
  %v1624 = vld [vmem:[#allocation2 + $0x430] sm:$0xff]
  %v1625 = vld [vmem:[#allocation2 + $0x438] sm:$0xff]
  %v1626 = vld [vmem:[#allocation2 + $0x440] sm:$0xff]
  %v1627 = vld [vmem:[#allocation2 + $0x448] sm:$0xff]
  %v1628 = vld [vmem:[#allocation2 + $0x450] sm:$0xff]
  %v1629 = vld [vmem:[#allocation2 + $0x458] sm:$0xff]
  %v1630 = vld [vmem:[#allocation2 + $0x460] sm:$0xff]
  %v1631 = vld [vmem:[#allocation2 + $0x468] sm:$0xff]
  %v1632 = vld [vmem:[#allocation2 + $0x470] sm:$0xff]
  %v1633 = vld [vmem:[#allocation2 + $0x478] sm:$0xff]
  %v1634 = vld [vmem:[#allocation2 + $0x480] sm:$0xff]
  %v1635 = vld [vmem:[#allocation2 + $0x488] sm:$0xff]
  %v1636 = vld [vmem:[#allocation2 + $0x490] sm:$0xff]
  %v1637 = vld [vmem:[#allocation2 + $0x498] sm:$0xff]
  %v1638 = vld [vmem:[#allocation2 + $0x4a0] sm:$0xff]
  %v1639 = vld [vmem:[#allocation2 + $0x4a8] sm:$0xff]
  %v1640 = vld [vmem:[#allocation2 + $0x4b0] sm:$0xff]
  %v1641 = vld [vmem:[#allocation2 + $0x4b8] sm:$0xff]
  %v1642 = vld [vmem:[#allocation2 + $0x4c0] sm:$0xff]
  %v1643 = vld [vmem:[#allocation2 + $0x4c8] sm:$0xff]
  %v1644 = vld [vmem:[#allocation2 + $0x4d0] sm:$0xff]
  %v1645 = vld [vmem:[#allocation2 + $0x4d8] sm:$0xff]
  %v1646 = vld [vmem:[#allocation2 + $0x4e0] sm:$0xff]
  %v1647 = vld [vmem:[#allocation2 + $0x4e8] sm:$0xff]
  %v1648 = vld [vmem:[#allocation2 + $0x4f0] sm:$0xff]
  %v1649 = vld [vmem:[#allocation2 + $0x4f8] sm:$0xff]
  %v1650 = vld [vmem:[#allocation2 + $0x500] sm:$0xff]
  %v1651 = vld [vmem:[#allocation2 + $0x508] sm:$0xff]
  %v1652 = vld [vmem:[#allocation2 + $0x510] sm:$0xff]
  %v1653 = vld [vmem:[#allocation2 + $0x518] sm:$0xff]
  %v1654 = vld [vmem:[#allocation2 + $0x520] sm:$0xff]
  %v1655 = vld [vmem:[#allocation2 + $0x528] sm:$0xff]
  %v1656 = vld [vmem:[#allocation2 + $0x530] sm:$0xff]
  %v1657 = vld [vmem:[#allocation2 + $0x538] sm:$0xff]
  %v1658 = vld [vmem:[#allocation2 + $0x540] sm:$0xff]
  %v1659 = vld [vmem:[#allocation2 + $0x548] sm:$0xff]
  %v1660 = vld [vmem:[#allocation2 + $0x550] sm:$0xff]
  %v1661 = vld [vmem:[#allocation2 + $0x558] sm:$0xff]
  %v1662 = vld [vmem:[#allocation2 + $0x560] sm:$0xff]
  %v1663 = vld [vmem:[#allocation2 + $0x568] sm:$0xff]
  %v1664 = vld [vmem:[#allocation2 + $0x570] sm:$0xff]
  %v1665 = vld [vmem:[#allocation2 + $0x578] sm:$0xff]
  %v1666 = vld [vmem:[#allocation2 + $0x580] sm:$0xff]
  %v1667 = vld [vmem:[#allocation2 + $0x588] sm:$0xff]
  %v1668 = vld [vmem:[#allocation2 + $0x590] sm:$0xff]
  %v1669 = vld [vmem:[#allocation2 + $0x598] sm:$0xff]
  %v1670 = vld [vmem:[#allocation2 + $0x5a0] sm:$0xff]
  %v1671 = vld [vmem:[#allocation2 + $0x5a8] sm:$0xff]
  %v1672 = vld [vmem:[#allocation2 + $0x5b0] sm:$0xff]
  %v1673 = vld [vmem:[#allocation2 + $0x5b8] sm:$0xff]
  %v1674 = vld [vmem:[#allocation2 + $0x5c0] sm:$0xff]
  %v1675 = vld [vmem:[#allocation2 + $0x5c8] sm:$0xff]
  %v1676 = vld [vmem:[#allocation2 + $0x5d0] sm:$0xff]
  %v1677 = vld [vmem:[#allocation2 + $0x5d8] sm:$0xff]
  %v1678 = vld [vmem:[#allocation2 + $0x5e0] sm:$0xff]
  %v1679 = vld [vmem:[#allocation2 + $0x5e8] sm:$0xff]
  %v1680 = vld [vmem:[#allocation2 + $0x5f0] sm:$0xff]
  %v1681 = vld [vmem:[#allocation2 + $0x5f8] sm:$0xff]
  %v1682 = vld [vmem:[#allocation2 + $0x600] sm:$0xff]
  %v1683 = vld [vmem:[#allocation2 + $0x608] sm:$0xff]
  %v1684 = vld [vmem:[#allocation2 + $0x610] sm:$0xff]
  %v1685 = vld [vmem:[#allocation2 + $0x618] sm:$0xff]
  %v1686 = vld [vmem:[#allocation2 + $0x620] sm:$0xff]
  %v1687 = vld [vmem:[#allocation2 + $0x628] sm:$0xff]
  %v1688 = vld [vmem:[#allocation2 + $0x630] sm:$0xff]
  %v1689 = vld [vmem:[#allocation2 + $0x638] sm:$0xff]
  %v1690 = vld [vmem:[#allocation2 + $0x640] sm:$0xff]
  %v1691 = vld [vmem:[#allocation2 + $0x648] sm:$0xff]
  %v1692 = vld [vmem:[#allocation2 + $0x650] sm:$0xff]
  %v1693 = vld [vmem:[#allocation2 + $0x658] sm:$0xff]
  %v1694 = vld [vmem:[#allocation2 + $0x660] sm:$0xff]
  %v1695 = vld [vmem:[#allocation2 + $0x668] sm:$0xff]
  %v1696 = vld [vmem:[#allocation2 + $0x670] sm:$0xff]
  %v1697 = vld [vmem:[#allocation2 + $0x678] sm:$0xff]
  %v1698 = vld [vmem:[#allocation2 + $0x680] sm:$0xff]
  %v1699 = vld [vmem:[#allocation2 + $0x688] sm:$0xff]
  %v1700 = vld [vmem:[#allocation2 + $0x690] sm:$0xff]
  %v1701 = vld [vmem:[#allocation2 + $0x698] sm:$0xff]
  %v1702 = vld [vmem:[#allocation2 + $0x6a0] sm:$0xff]
  %v1703 = vld [vmem:[#allocation2 + $0x6a8] sm:$0xff]
  %v1704 = vld [vmem:[#allocation2 + $0x6b0] sm:$0xff]
  %v1705 = vld [vmem:[#allocation2 + $0x6b8] sm:$0xff]
  %v1706 = vld [vmem:[#allocation2 + $0x6c0] sm:$0xff]
  %v1707 = vld [vmem:[#allocation2 + $0x6c8] sm:$0xff]
  %v1708 = vld [vmem:[#allocation2 + $0x6d0] sm:$0xff]
  %v1709 = vld [vmem:[#allocation2 + $0x6d8] sm:$0xff]
  %vm1710 = vcmask 457728
  %v1712 = vsel %vm1710, %v1461, 0
  %v1715 = vsel %vm1710, %v1465, 0
  %v1718 = vsel %vm1710, %v1469, 0
  %v1721 = vsel %vm1710, %v1473, 0
  %v1724 = vsel %vm1710, %v1477, 0
  %v1727 = vsel %vm1710, %v1481, 0
  %v1730 = vsel %vm1710, %v1485, 0
  %1732 = vmatprep.subr.mxu0 %v1551
  %1733 = vmatpush1.msra.mxu0 %v1550
  %1734 = vmatprep.subr.mxu0 %v1547
  %1735 = vmatpush1.msra.mxu0 %v1546
  %1736 = vmatprep.subr.mxu0 %v1543
  %1737 = vmatpush1.msra.mxu0 %v1542
  %1738 = vmatprep.subr.mxu0 %v1539
  %1739 = vmatpush1.msra.mxu0 %v1538
  %1740 = vmatprep.subr.mxu0 %v1535
  %1741 = vmatpush1.msra.mxu0 %v1534
  %1742 = vmatprep.subr.mxu0 %v1531
  %1743 = vmatpush1.msra.mxu0 %v1530
  %1744 = vmatprep.subr.mxu0 %v1527
  %1745 = vmatpush1.msra.mxu0 %v1526
  %1746 = vmatprep.subr.mxu0 %v1523
  %1747 = vmatpush1.msra.mxu0 %v1522
  %1748 = vmatprep.subr.mxu0 %v1519
  %1749 = vmatpush1.msra.mxu0 %v1518
  %1750 = vmatprep.subr.mxu0 %v1515
  %1751 = vmatpush1.msra.mxu0 %v1514
  %1752 = vmatprep.subr.mxu0 %v1511
  %1753 = vmatpush1.msra.mxu0 %v1510
  %1754 = vmatprep.subr.mxu0 %v1507
  %1755 = vmatpush1.msra.mxu0 %v1506
  %1756 = vmatprep.subr.mxu0 %v1503
  %1757 = vmatpush1.msra.mxu0 %v1502
  %1758 = vmatprep.subr.mxu0 %v1499
  %1759 = vmatpush1.msra.mxu0 %v1498
  %1760 = vmatprep.subr.mxu0 %v1495
  %1761 = vmatpush1.msra.mxu0 %v1494
  %1762 = vmatprep.subr.mxu0 %v1491
  %1763 = vmatpush1.msra.mxu0 %v1490
  %1764 = vmatprep.subr.mxu0 %v1615
  %1765 = vmatpush2.msra.mxu0 %v1614
  %1766 = vmatprep.subr.mxu0 %v1611
  %1767 = vmatpush2.msra.mxu0 %v1610
  %1768 = vmatprep.subr.mxu0 %v1607
  %1769 = vmatpush2.msra.mxu0 %v1606
  %1770 = vmatprep.subr.mxu0 %v1603
  %1771 = vmatpush2.msra.mxu0 %v1602
  %1772 = vmatprep.subr.mxu0 %v1599
  %1773 = vmatpush2.msra.mxu0 %v1598
  %1774 = vmatprep.subr.mxu0 %v1595
  %1775 = vmatpush2.msra.mxu0 %v1594
  %1776 = vmatprep.subr.mxu0 %v1591
  %1777 = vmatpush2.msra.mxu0 %v1590
  %1778 = vmatprep.subr.mxu0 %v1587
  %1779 = vmatpush2.msra.mxu0 %v1586
  %1780 = vmatprep.subr.mxu0 %v1583
  %1781 = vmatpush2.msra.mxu0 %v1582
  %1782 = vmatprep.subr.mxu0 %v1579
  %1783 = vmatpush2.msra.mxu0 %v1578
  %1784 = vmatprep.subr.mxu0 %v1575
  %1785 = vmatpush2.msra.mxu0 %v1574
  %1786 = vmatprep.subr.mxu0 %v1571
  %1787 = vmatpush2.msra.mxu0 %v1570
  %1788 = vmatprep.subr.mxu0 %v1567
  %1789 = vmatpush2.msra.mxu0 %v1566
  %1790 = vmatprep.subr.mxu0 %v1563
  %1791 = vmatpush2.msra.mxu0 %v1562
  %1792 = vmatprep.subr.mxu0 %v1559
  %1793 = vmatpush2.msra.mxu0 %v1558
  %1794 = vmatprep.subr.mxu0 %v1555
  %1795 = vmatpush2.msra.mxu0 %v1554
  %1796 = vmatprep.mubr.f32.mxu0 %v1459
  %1797 = vmatmul.mubr.f32.gmra.mxu0 %v1458
  %v1798 = vpop.f32.mrf.mxu0
  %v1799 = vadd.f32 0.0, %v1798
  %v1800 = vpop.f32.mrf.mxu0
  %v1801 = vadd.f32 0.0, %v1800
  %1802 = vmatprep.mubr.f32.mxu0 %v1463
  %1803 = vmatmul.mubr.f32.gmra.mxu0 %v1462
  %v1804 = vpop.f32.mrf.mxu0
  %v1805 = vadd.f32 0.0, %v1804
  %v1806 = vpop.f32.mrf.mxu0
  %v1807 = vadd.f32 0.0, %v1806
  %1808 = vmatprep.mubr.f32.mxu0 %v1467
  %1809 = vmatmul.mubr.f32.gmra.mxu0 %v1466
  %v1810 = vpop.f32.mrf.mxu0
  %v1811 = vadd.f32 0.0, %v1810
  %v1812 = vpop.f32.mrf.mxu0
  %v1813 = vadd.f32 0.0, %v1812
  %1814 = vmatprep.mubr.f32.mxu0 %v1471
  %1815 = vmatmul.mubr.f32.gmra.mxu0 %v1470
  %v1816 = vpop.f32.mrf.mxu0
  %v1817 = vadd.f32 0.0, %v1816
  %v1818 = vpop.f32.mrf.mxu0
  %v1819 = vadd.f32 0.0, %v1818
  %1820 = vmatprep.mubr.f32.mxu0 %v1475
  %1821 = vmatmul.mubr.f32.gmra.mxu0 %v1474
  %v1822 = vpop.f32.mrf.mxu0
  %v1823 = vadd.f32 0.0, %v1822
  %v1824 = vpop.f32.mrf.mxu0
  %v1825 = vadd.f32 0.0, %v1824
  %1826 = vmatprep.mubr.f32.mxu0 %v1479
  %1827 = vmatmul.mubr.f32.gmra.mxu0 %v1478
  %v1828 = vpop.f32.mrf.mxu0
  %v1829 = vadd.f32 0.0, %v1828
  %v1830 = vpop.f32.mrf.mxu0
  %v1831 = vadd.f32 0.0, %v1830
  %1832 = vmatprep.mubr.f32.mxu0 %v1483
  %1833 = vmatmul.mubr.f32.gmra.mxu0 %v1482
  %v1834 = vpop.f32.mrf.mxu0
  %v1835 = vadd.f32 0.0, %v1834
  %v1836 = vpop.f32.mrf.mxu0
  %v1837 = vadd.f32 0.0, %v1836
  %1838 = vdwg.mxu0
  %1839 = vmatprep.subr.mxu0 %v1679
  %1840 = vmatpush1.msra.mxu0 %v1678
  %1841 = vmatprep.subr.mxu0 %v1675
  %1842 = vmatpush1.msra.mxu0 %v1674
  %1843 = vmatprep.subr.mxu0 %v1671
  %1844 = vmatpush1.msra.mxu0 %v1670
  %1845 = vmatprep.subr.mxu0 %v1667
  %1846 = vmatpush1.msra.mxu0 %v1666
  %1847 = vmatprep.subr.mxu0 %v1663
  %1848 = vmatpush1.msra.mxu0 %v1662
  %1849 = vmatprep.subr.mxu0 %v1659
  %1850 = vmatpush1.msra.mxu0 %v1658
  %1851 = vmatprep.subr.mxu0 %v1655
  %1852 = vmatpush1.msra.mxu0 %v1654
  %1853 = vmatprep.subr.mxu0 %v1651
  %1854 = vmatpush1.msra.mxu0 %v1650
  %1855 = vmatprep.subr.mxu0 %v1647
  %1856 = vmatpush1.msra.mxu0 %v1646
  %1857 = vmatprep.subr.mxu0 %v1643
  %1858 = vmatpush1.msra.mxu0 %v1642
  %1859 = vmatprep.subr.mxu0 %v1639
  %1860 = vmatpush1.msra.mxu0 %v1638
  %1861 = vmatprep.subr.mxu0 %v1635
  %1862 = vmatpush1.msra.mxu0 %v1634
  %1863 = vmatprep.subr.mxu0 %v1631
  %1864 = vmatpush1.msra.mxu0 %v1630
  %1865 = vmatprep.subr.mxu0 %v1627
  %1866 = vmatpush1.msra.mxu0 %v1626
  %1867 = vmatprep.subr.mxu0 %v1623
  %1868 = vmatpush1.msra.mxu0 %v1622
  %1869 = vmatprep.subr.mxu0 %v1619
  %1870 = vmatpush1.msra.mxu0 %v1618
  %1871 = vmatprep.subr.mxu0 0.0
  %1872 = vmatpush2.msra.mxu0 0.0
  %1873 = vmatprep.subr.mxu0 0.0
  %1874 = vmatpush2.msra.mxu0 0.0
  %1875 = vmatprep.subr.mxu0 0.0
  %1876 = vmatpush2.msra.mxu0 0.0
  %1877 = vmatprep.subr.mxu0 0.0
  %1878 = vmatpush2.msra.mxu0 0.0
  %1879 = vmatprep.subr.mxu0 0.0
  %1880 = vmatpush2.msra.mxu0 0.0
  %1881 = vmatprep.subr.mxu0 0.0
  %1882 = vmatpush2.msra.mxu0 0.0
  %1883 = vmatprep.subr.mxu0 0.0
  %1884 = vmatpush2.msra.mxu0 0.0
  %1885 = vmatprep.subr.mxu0 0.0
  %1886 = vmatpush2.msra.mxu0 0.0
  %1887 = vmatprep.subr.mxu0 0.0
  %1888 = vmatpush2.msra.mxu0 0.0
  %1889 = vmatprep.subr.mxu0 %v1707
  %1890 = vmatpush2.msra.mxu0 %v1706
  %1891 = vmatprep.subr.mxu0 %v1703
  %1892 = vmatpush2.msra.mxu0 %v1702
  %1893 = vmatprep.subr.mxu0 %v1699
  %1894 = vmatpush2.msra.mxu0 %v1698
  %1895 = vmatprep.subr.mxu0 %v1695
  %1896 = vmatpush2.msra.mxu0 %v1694
  %1897 = vmatprep.subr.mxu0 %v1691
  %1898 = vmatpush2.msra.mxu0 %v1690
  %1899 = vmatprep.subr.mxu0 %v1687
  %1900 = vmatpush2.msra.mxu0 %v1686
  %1901 = vmatprep.subr.mxu0 %v1683
  %1902 = vmatpush2.msra.mxu0 %v1682
  %1903 = vmatprep.mubr.f32.mxu0 %v1712
  %1904 = vmatmul.mubr.f32.gmra.mxu0 %v1460
  %v1905 = vpop.f32.mrf.mxu0
  %v1906 = vadd.f32 %v1799, %v1905
  %v1907 = vpop.f32.mrf.mxu0
  %v1908 = vadd.f32 %v1801, %v1907
  %1909 = vmatprep.mubr.f32.mxu0 %v1715
  %1910 = vmatmul.mubr.f32.gmra.mxu0 %v1464
  %v1911 = vpop.f32.mrf.mxu0
  %v1912 = vadd.f32 %v1805, %v1911
  %v1913 = vpop.f32.mrf.mxu0
  %v1914 = vadd.f32 %v1807, %v1913
  %1915 = vmatprep.mubr.f32.mxu0 %v1718
  %1916 = vmatmul.mubr.f32.gmra.mxu0 %v1468
  %v1917 = vpop.f32.mrf.mxu0
  %v1918 = vadd.f32 %v1811, %v1917
  %v1919 = vpop.f32.mrf.mxu0
  %v1920 = vadd.f32 %v1813, %v1919
  %1921 = vmatprep.mubr.f32.mxu0 %v1721
  %1922 = vmatmul.mubr.f32.gmra.mxu0 %v1472
  %v1923 = vpop.f32.mrf.mxu0
  %v1924 = vadd.f32 %v1817, %v1923
  %v1925 = vpop.f32.mrf.mxu0
  %v1926 = vadd.f32 %v1819, %v1925
  %1927 = vmatprep.mubr.f32.mxu0 %v1724
  %1928 = vmatmul.mubr.f32.gmra.mxu0 %v1476
  %v1929 = vpop.f32.mrf.mxu0
  %v1930 = vadd.f32 %v1823, %v1929
  %v1931 = vpop.f32.mrf.mxu0
  %v1932 = vadd.f32 %v1825, %v1931
  %1933 = vmatprep.mubr.f32.mxu0 %v1727
  %1934 = vmatmul.mubr.f32.gmra.mxu0 %v1480
  %v1935 = vpop.f32.mrf.mxu0
  %v1936 = vadd.f32 %v1829, %v1935
  %v1937 = vpop.f32.mrf.mxu0
  %v1938 = vadd.f32 %v1831, %v1937
  %1939 = vmatprep.mubr.f32.mxu0 %v1730
  %1940 = vmatmul.mubr.f32.gmra.mxu0 %v1484
  %v1941 = vpop.f32.mrf.mxu0
  %v1942 = vadd.f32 %v1835, %v1941
  %v1943 = vpop.f32.mrf.mxu0
  %v1944 = vadd.f32 %v1837, %v1943
  %1945 = vdwg.mxu0
  %1946 = vmatprep.subr.mxu0 %v1553
  %1947 = vmatpush1.msra.mxu0 %v1552
  %1948 = vmatprep.subr.mxu0 %v1549
  %1949 = vmatpush1.msra.mxu0 %v1548
  %1950 = vmatprep.subr.mxu0 %v1545
  %1951 = vmatpush1.msra.mxu0 %v1544
  %1952 = vmatprep.subr.mxu0 %v1541
  %1953 = vmatpush1.msra.mxu0 %v1540
  %1954 = vmatprep.subr.mxu0 %v1537
  %1955 = vmatpush1.msra.mxu0 %v1536
  %1956 = vmatprep.subr.mxu0 %v1533
  %1957 = vmatpush1.msra.mxu0 %v1532
  %1958 = vmatprep.subr.mxu0 %v1529
  %1959 = vmatpush1.msra.mxu0 %v1528
  %1960 = vmatprep.subr.mxu0 %v1525
  %1961 = vmatpush1.msra.mxu0 %v1524
  %1962 = vmatprep.subr.mxu0 %v1521
  %1963 = vmatpush1.msra.mxu0 %v1520
  %1964 = vmatprep.subr.mxu0 %v1517
  %1965 = vmatpush1.msra.mxu0 %v1516
  %1966 = vmatprep.subr.mxu0 %v1513
  %1967 = vmatpush1.msra.mxu0 %v1512
  %1968 = vmatprep.subr.mxu0 %v1509
  %1969 = vmatpush1.msra.mxu0 %v1508
  %1970 = vmatprep.subr.mxu0 %v1505
  %1971 = vmatpush1.msra.mxu0 %v1504
  %1972 = vmatprep.subr.mxu0 %v1501
  %1973 = vmatpush1.msra.mxu0 %v1500
  %1974 = vmatprep.subr.mxu0 %v1497
  %1975 = vmatpush1.msra.mxu0 %v1496
  %1976 = vmatprep.subr.mxu0 %v1493
  %1977 = vmatpush1.msra.mxu0 %v1492
  %1978 = vmatprep.subr.mxu0 %v1617
  %1979 = vmatpush2.msra.mxu0 %v1616
  %1980 = vmatprep.subr.mxu0 %v1613
  %1981 = vmatpush2.msra.mxu0 %v1612
  %1982 = vmatprep.subr.mxu0 %v1609
  %1983 = vmatpush2.msra.mxu0 %v1608
  %1984 = vmatprep.subr.mxu0 %v1605
  %1985 = vmatpush2.msra.mxu0 %v1604
  %1986 = vmatprep.subr.mxu0 %v1601
  %1987 = vmatpush2.msra.mxu0 %v1600
  %1988 = vmatprep.subr.mxu0 %v1597
  %1989 = vmatpush2.msra.mxu0 %v1596
  %1990 = vmatprep.subr.mxu0 %v1593
  %1991 = vmatpush2.msra.mxu0 %v1592
  %1992 = vmatprep.subr.mxu0 %v1589
  %1993 = vmatpush2.msra.mxu0 %v1588
  %1994 = vmatprep.subr.mxu0 %v1585
  %1995 = vmatpush2.msra.mxu0 %v1584
  %1996 = vmatprep.subr.mxu0 %v1581
  %1997 = vmatpush2.msra.mxu0 %v1580
  %1998 = vmatprep.subr.mxu0 %v1577
  %1999 = vmatpush2.msra.mxu0 %v1576
  %2000 = vmatprep.subr.mxu0 %v1573
  %2001 = vmatpush2.msra.mxu0 %v1572
  %2002 = vmatprep.subr.mxu0 %v1569
  %2003 = vmatpush2.msra.mxu0 %v1568
  %2004 = vmatprep.subr.mxu0 %v1565
  %2005 = vmatpush2.msra.mxu0 %v1564
  %2006 = vmatprep.subr.mxu0 %v1561
  %2007 = vmatpush2.msra.mxu0 %v1560
  %2008 = vmatprep.subr.mxu0 %v1557
  %2009 = vmatpush2.msra.mxu0 %v1556
  %2010 = vmatprep.mubr.f32.mxu0 %v1459
  %2011 = vmatmul.mubr.f32.gmra.mxu0 %v1458
  %v2012 = vpop.f32.mrf.mxu0
  %v2013 = vadd.f32 0.0, %v2012
  %v2014 = vpop.f32.mrf.mxu0
  %v2015 = vadd.f32 0.0, %v2014
  %2016 = vmatprep.mubr.f32.mxu0 %v1463
  %2017 = vmatmul.mubr.f32.gmra.mxu0 %v1462
  %v2018 = vpop.f32.mrf.mxu0
  %v2019 = vadd.f32 0.0, %v2018
  %v2020 = vpop.f32.mrf.mxu0
  %v2021 = vadd.f32 0.0, %v2020
  %2022 = vmatprep.mubr.f32.mxu0 %v1467
  %2023 = vmatmul.mubr.f32.gmra.mxu0 %v1466
  %v2024 = vpop.f32.mrf.mxu0
  %v2025 = vadd.f32 0.0, %v2024
  %v2026 = vpop.f32.mrf.mxu0
  %v2027 = vadd.f32 0.0, %v2026
  %2028 = vmatprep.mubr.f32.mxu0 %v1471
  %2029 = vmatmul.mubr.f32.gmra.mxu0 %v1470
  %v2030 = vpop.f32.mrf.mxu0
  %v2031 = vadd.f32 0.0, %v2030
  %v2032 = vpop.f32.mrf.mxu0
  %v2033 = vadd.f32 0.0, %v2032
  %2034 = vmatprep.mubr.f32.mxu0 %v1475
  %2035 = vmatmul.mubr.f32.gmra.mxu0 %v1474
  %v2036 = vpop.f32.mrf.mxu0
  %v2037 = vadd.f32 0.0, %v2036
  %v2038 = vpop.f32.mrf.mxu0
  %v2039 = vadd.f32 0.0, %v2038
  %2040 = vmatprep.mubr.f32.mxu0 %v1479
  %2041 = vmatmul.mubr.f32.gmra.mxu0 %v1478
  %v2042 = vpop.f32.mrf.mxu0
  %v2043 = vadd.f32 0.0, %v2042
  %v2044 = vpop.f32.mrf.mxu0
  %v2045 = vadd.f32 0.0, %v2044
  %2046 = vmatprep.mubr.f32.mxu0 %v1483
  %2047 = vmatmul.mubr.f32.gmra.mxu0 %v1482
  %v2048 = vpop.f32.mrf.mxu0
  %v2049 = vadd.f32 0.0, %v2048
  %v2050 = vpop.f32.mrf.mxu0
  %v2051 = vadd.f32 0.0, %v2050
  %2052 = vdwg.mxu0
  %2053 = vmatprep.subr.mxu0 %v1681
  %2054 = vmatpush1.msra.mxu0 %v1680
  %2055 = vmatprep.subr.mxu0 %v1677
  %2056 = vmatpush1.msra.mxu0 %v1676
  %2057 = vmatprep.subr.mxu0 %v1673
  %2058 = vmatpush1.msra.mxu0 %v1672
  %2059 = vmatprep.subr.mxu0 %v1669
  %2060 = vmatpush1.msra.mxu0 %v1668
  %2061 = vmatprep.subr.mxu0 %v1665
  %2062 = vmatpush1.msra.mxu0 %v1664
  %2063 = vmatprep.subr.mxu0 %v1661
  %2064 = vmatpush1.msra.mxu0 %v1660
  %2065 = vmatprep.subr.mxu0 %v1657
  %2066 = vmatpush1.msra.mxu0 %v1656
  %2067 = vmatprep.subr.mxu0 %v1653
  %2068 = vmatpush1.msra.mxu0 %v1652
  %2069 = vmatprep.subr.mxu0 %v1649
  %2070 = vmatpush1.msra.mxu0 %v1648
  %2071 = vmatprep.subr.mxu0 %v1645
  %2072 = vmatpush1.msra.mxu0 %v1644
  %2073 = vmatprep.subr.mxu0 %v1641
  %2074 = vmatpush1.msra.mxu0 %v1640
  %2075 = vmatprep.subr.mxu0 %v1637
  %2076 = vmatpush1.msra.mxu0 %v1636
  %2077 = vmatprep.subr.mxu0 %v1633
  %2078 = vmatpush1.msra.mxu0 %v1632
  %2079 = vmatprep.subr.mxu0 %v1629
  %2080 = vmatpush1.msra.mxu0 %v1628
  %2081 = vmatprep.subr.mxu0 %v1625
  %2082 = vmatpush1.msra.mxu0 %v1624
  %2083 = vmatprep.subr.mxu0 %v1621
  %2084 = vmatpush1.msra.mxu0 %v1620
  %2085 = vmatprep.subr.mxu0 0.0
  %2086 = vmatpush2.msra.mxu0 0.0
  %2087 = vmatprep.subr.mxu0 0.0
  %2088 = vmatpush2.msra.mxu0 0.0
  %2089 = vmatprep.subr.mxu0 0.0
  %2090 = vmatpush2.msra.mxu0 0.0
  %2091 = vmatprep.subr.mxu0 0.0
  %2092 = vmatpush2.msra.mxu0 0.0
  %2093 = vmatprep.subr.mxu0 0.0
  %2094 = vmatpush2.msra.mxu0 0.0
  %2095 = vmatprep.subr.mxu0 0.0
  %2096 = vmatpush2.msra.mxu0 0.0
  %2097 = vmatprep.subr.mxu0 0.0
  %2098 = vmatpush2.msra.mxu0 0.0
  %2099 = vmatprep.subr.mxu0 0.0
  %2100 = vmatpush2.msra.mxu0 0.0
  %2101 = vmatprep.subr.mxu0 0.0
  %2102 = vmatpush2.msra.mxu0 0.0
  %2103 = vmatprep.subr.mxu0 %v1709
  %2104 = vmatpush2.msra.mxu0 %v1708
  %2105 = vmatprep.subr.mxu0 %v1705
  %2106 = vmatpush2.msra.mxu0 %v1704
  %2107 = vmatprep.subr.mxu0 %v1701
  %2108 = vmatpush2.msra.mxu0 %v1700
  %2109 = vmatprep.subr.mxu0 %v1697
  %2110 = vmatpush2.msra.mxu0 %v1696
  %2111 = vmatprep.subr.mxu0 %v1693
  %2112 = vmatpush2.msra.mxu0 %v1692
  %2113 = vmatprep.subr.mxu0 %v1689
  %2114 = vmatpush2.msra.mxu0 %v1688
  %2115 = vmatprep.subr.mxu0 %v1685
  %2116 = vmatpush2.msra.mxu0 %v1684
  %2117 = vmatprep.mubr.f32.mxu0 %v1712
  %2118 = vmatmul.mubr.f32.gmra.mxu0 %v1460
  %v2119 = vpop.f32.mrf.mxu0
  %v2120 = vadd.f32 %v2013, %v2119
  %v2121 = vpop.f32.mrf.mxu0
  %v2122 = vadd.f32 %v2015, %v2121
  %2123 = vmatprep.mubr.f32.mxu0 %v1715
  %2124 = vmatmul.mubr.f32.gmra.mxu0 %v1464
  %v2125 = vpop.f32.mrf.mxu0
  %v2126 = vadd.f32 %v2019, %v2125
  %v2127 = vpop.f32.mrf.mxu0
  %v2128 = vadd.f32 %v2021, %v2127
  %2129 = vmatprep.mubr.f32.mxu0 %v1718
  %2130 = vmatmul.mubr.f32.gmra.mxu0 %v1468
  %v2131 = vpop.f32.mrf.mxu0
  %v2132 = vadd.f32 %v2025, %v2131
  %v2133 = vpop.f32.mrf.mxu0
  %v2134 = vadd.f32 %v2027, %v2133
  %2135 = vmatprep.mubr.f32.mxu0 %v1721
  %2136 = vmatmul.mubr.f32.gmra.mxu0 %v1472
  %v2137 = vpop.f32.mrf.mxu0
  %v2138 = vadd.f32 %v2031, %v2137
  %v2139 = vpop.f32.mrf.mxu0
  %v2140 = vadd.f32 %v2033, %v2139
  %2141 = vmatprep.mubr.f32.mxu0 %v1724
  %2142 = vmatmul.mubr.f32.gmra.mxu0 %v1476
  %v2143 = vpop.f32.mrf.mxu0
  %v2144 = vadd.f32 %v2037, %v2143
  %v2145 = vpop.f32.mrf.mxu0
  %v2146 = vadd.f32 %v2039, %v2145
  %2147 = vmatprep.mubr.f32.mxu0 %v1727
  %2148 = vmatmul.mubr.f32.gmra.mxu0 %v1480
  %v2149 = vpop.f32.mrf.mxu0
  %v2150 = vadd.f32 %v2043, %v2149
  %v2151 = vpop.f32.mrf.mxu0
  %v2152 = vadd.f32 %v2045, %v2151
  %2153 = vmatprep.mubr.f32.mxu0 %v1730
  %2154 = vmatmul.mubr.f32.gmra.mxu0 %v1484
  %v2155 = vpop.f32.mrf.mxu0
  %v2156 = vadd.f32 %v2049, %v2155
  %v2157 = vpop.f32.mrf.mxu0
  %v2158 = vadd.f32 %v2051, %v2157
  %2159 = vdwg.mxu0
  %v2160 = vld [vmem:[%s5] sm:$0xf]
  %v2161 = vld [vmem:[%s6] sm:$0xf]
  %v2162 = vadd.f32 %v1906, %v1912
  %v2163 = vadd.f32 %v2162, %v1918
  %v2164 = vadd.f32 %v2163, %v1924
  %v2165 = vadd.f32 %v2164, %v1930
  %v2166 = vadd.f32 %v2165, %v1936
  %vm2167 = vcmask 1040384
  %v2168 = vsel %vm2167, %v1942, 0.0
  %v2169 = vadd.f32 %v2166, %v2168
  %v2170 = vrot.slane %v2169, 4
  %v2171 = vadd.f32 %v2169, %v2170
  %v2172 = vrot.slane %v2171, 2
  %v2173 = vadd.f32 %v2171, %v2172
  %v2174 = vrot.slane %v2173, 1
  %v2175 = vadd.f32 %v2173, %v2174
  %v2176 = vadd.f32 %v1908, %v1914
  %v2177 = vadd.f32 %v2176, %v1920
  %v2178 = vadd.f32 %v2177, %v1926
  %v2179 = vadd.f32 %v2178, %v1932
  %v2180 = vadd.f32 %v2179, %v1938
  %v2181 = vsel %vm2167, %v1944, 0.0
  %v2182 = vadd.f32 %v2180, %v2181
  %v2183 = vrot.slane %v2182, 4
  %v2184 = vadd.f32 %v2182, %v2183
  %v2185 = vrot.slane %v2184, 2
  %v2186 = vadd.f32 %v2184, %v2185
  %v2187 = vrot.slane %v2186, 1
  %v2188 = vadd.f32 %v2186, %v2187
  %v2189 = vadd.f32 %v2120, %v2126
  %v2190 = vadd.f32 %v2189, %v2132
  %v2191 = vadd.f32 %v2190, %v2138
  %v2192 = vadd.f32 %v2191, %v2144
  %v2193 = vadd.f32 %v2192, %v2150
  %v2194 = vsel %vm2167, %v2156, 0.0
  %v2195 = vadd.f32 %v2193, %v2194
  %v2196 = vrot.slane %v2195, 4
  %v2197 = vadd.f32 %v2195, %v2196
  %v2198 = vrot.slane %v2197, 2
  %v2199 = vadd.f32 %v2197, %v2198
  %v2200 = vrot.slane %v2199, 1
  %v2201 = vadd.f32 %v2199, %v2200
  %v2202 = vsel %vm1710, %v2122, 0.0
  %v2203 = vsel %vm1710, %v2128, 0.0
  %v2204 = vadd.f32 %v2202, %v2203
  %v2205 = vsel %vm1710, %v2134, 0.0
  %v2206 = vadd.f32 %v2204, %v2205
  %v2207 = vsel %vm1710, %v2140, 0.0
  %v2208 = vadd.f32 %v2206, %v2207
  %v2209 = vsel %vm1710, %v2146, 0.0
  %v2210 = vadd.f32 %v2208, %v2209
  %v2211 = vsel %vm1710, %v2152, 0.0
  %v2212 = vadd.f32 %v2210, %v2211
  %vm2213 = vcmask 450560
  %v2214 = vsel %vm2213, %v2158, 0.0
  %v2215 = vadd.f32 %v2212, %v2214
  %v2216 = vrot.slane %v2215, 4
  %v2217 = vadd.f32 %v2215, %v2216
  %v2218 = vrot.slane %v2217, 2
  %v2219 = vadd.f32 %v2217, %v2218
  %v2220 = vrot.slane %v2219, 1
  %v2221 = vadd.f32 %v2219, %v2220
  %v2222 = vrcp.pop 49.0
  %v2223 = vmul.f32 %v2175, %v2222
  %v2224 = vmul.f32 %v2188, %v2222
  %v2225 = vmul.f32 %v2201, %v2222
  %v2226 = vmul.f32 %v2221, %v2222
  %v2227 = vsub.f32 %v1906, %v2223
  %v2228 = vsub.f32 %v1908, %v2224
  %v2229 = vsub.f32 %v2120, %v2225
  %v2230 = vsub.f32 %v2122, %v2226
  %v2231 = vsub.f32 %v1912, %v2223
  %v2232 = vsub.f32 %v1914, %v2224
  %v2233 = vsub.f32 %v2126, %v2225
  %v2234 = vsub.f32 %v2128, %v2226
  %v2235 = vsub.f32 %v1918, %v2223
  %v2236 = vsub.f32 %v1920, %v2224
  %v2237 = vsub.f32 %v2132, %v2225
  %v2238 = vsub.f32 %v2134, %v2226
  %v2239 = vsub.f32 %v1924, %v2223
  %v2240 = vsub.f32 %v1926, %v2224
  %v2241 = vsub.f32 %v2138, %v2225
  %v2242 = vsub.f32 %v2140, %v2226
  %v2243 = vsub.f32 %v1930, %v2223
  %v2244 = vsub.f32 %v1932, %v2224
  %v2245 = vsub.f32 %v2144, %v2225
  %v2246 = vsub.f32 %v2146, %v2226
  %v2247 = vsub.f32 %v1936, %v2223
  %v2248 = vsub.f32 %v1938, %v2224
  %v2249 = vsub.f32 %v2150, %v2225
  %v2250 = vsub.f32 %v2152, %v2226
  %v2251 = vsub.f32 %v1942, %v2223
  %v2252 = vsub.f32 %v1944, %v2224
  %v2253 = vsub.f32 %v2156, %v2225
  %v2254 = vsub.f32 %v2158, %v2226
  %v2255 = vmul.f32 %v2227, %v2227
  %v2256 = vmul.f32 %v2228, %v2228
  %v2257 = vmul.f32 %v2229, %v2229
  %v2258 = vmul.f32 %v2230, %v2230
  %v2259 = vmul.f32 %v2231, %v2231
  %v2260 = vmul.f32 %v2232, %v2232
  %v2261 = vmul.f32 %v2233, %v2233
  %v2262 = vmul.f32 %v2234, %v2234
  %v2263 = vmul.f32 %v2235, %v2235
  %v2264 = vmul.f32 %v2236, %v2236
  %v2265 = vmul.f32 %v2237, %v2237
  %v2266 = vmul.f32 %v2238, %v2238
  %v2267 = vmul.f32 %v2239, %v2239
  %v2268 = vmul.f32 %v2240, %v2240
  %v2269 = vmul.f32 %v2241, %v2241
  %v2270 = vmul.f32 %v2242, %v2242
  %v2271 = vmul.f32 %v2243, %v2243
  %v2272 = vmul.f32 %v2244, %v2244
  %v2273 = vmul.f32 %v2245, %v2245
  %v2274 = vmul.f32 %v2246, %v2246
  %v2275 = vmul.f32 %v2247, %v2247
  %v2276 = vmul.f32 %v2248, %v2248
  %v2277 = vmul.f32 %v2249, %v2249
  %v2278 = vmul.f32 %v2250, %v2250
  %v2279 = vmul.f32 %v2251, %v2251
  %v2280 = vmul.f32 %v2252, %v2252
  %v2281 = vmul.f32 %v2253, %v2253
  %v2282 = vmul.f32 %v2254, %v2254
  %v2283 = vadd.f32 %v2255, %v2259
  %v2284 = vadd.f32 %v2283, %v2263
  %v2285 = vadd.f32 %v2284, %v2267
  %v2286 = vadd.f32 %v2285, %v2271
  %v2287 = vadd.f32 %v2286, %v2275
  %v2288 = vsel %vm2167, %v2279, 0.0
  %v2289 = vadd.f32 %v2287, %v2288
  %v2290 = vrot.slane %v2289, 4
  %v2291 = vadd.f32 %v2289, %v2290
  %v2292 = vrot.slane %v2291, 2
  %v2293 = vadd.f32 %v2291, %v2292
  %v2294 = vrot.slane %v2293, 1
  %v2295 = vadd.f32 %v2293, %v2294
  %v2296 = vadd.f32 %v2256, %v2260
  %v2297 = vadd.f32 %v2296, %v2264
  %v2298 = vadd.f32 %v2297, %v2268
  %v2299 = vadd.f32 %v2298, %v2272
  %v2300 = vadd.f32 %v2299, %v2276
  %v2301 = vsel %vm2167, %v2280, 0.0
  %v2302 = vadd.f32 %v2300, %v2301
  %v2303 = vrot.slane %v2302, 4
  %v2304 = vadd.f32 %v2302, %v2303
  %v2305 = vrot.slane %v2304, 2
  %v2306 = vadd.f32 %v2304, %v2305
  %v2307 = vrot.slane %v2306, 1
  %v2308 = vadd.f32 %v2306, %v2307
  %v2309 = vadd.f32 %v2257, %v2261
  %v2310 = vadd.f32 %v2309, %v2265
  %v2311 = vadd.f32 %v2310, %v2269
  %v2312 = vadd.f32 %v2311, %v2273
  %v2313 = vadd.f32 %v2312, %v2277
  %v2314 = vsel %vm2167, %v2281, 0.0
  %v2315 = vadd.f32 %v2313, %v2314
  %v2316 = vrot.slane %v2315, 4
  %v2317 = vadd.f32 %v2315, %v2316
  %v2318 = vrot.slane %v2317, 2
  %v2319 = vadd.f32 %v2317, %v2318
  %v2320 = vrot.slane %v2319, 1
  %v2321 = vadd.f32 %v2319, %v2320
  %v2322 = vsel %vm1710, %v2258, 0.0
  %v2323 = vsel %vm1710, %v2262, 0.0
  %v2324 = vadd.f32 %v2322, %v2323
  %v2325 = vsel %vm1710, %v2266, 0.0
  %v2326 = vadd.f32 %v2324, %v2325
  %v2327 = vsel %vm1710, %v2270, 0.0
  %v2328 = vadd.f32 %v2326, %v2327
  %v2329 = vsel %vm1710, %v2274, 0.0
  %v2330 = vadd.f32 %v2328, %v2329
  %v2331 = vsel %vm1710, %v2278, 0.0
  %v2332 = vadd.f32 %v2330, %v2331
  %v2333 = vsel %vm2213, %v2282, 0.0
  %v2334 = vadd.f32 %v2332, %v2333
  %v2335 = vrot.slane %v2334, 4
  %v2336 = vadd.f32 %v2334, %v2335
  %v2337 = vrot.slane %v2336, 2
  %v2338 = vadd.f32 %v2336, %v2337
  %v2339 = vrot.slane %v2338, 1
  %v2340 = vadd.f32 %v2338, %v2339
  %v2341 = vmul.f32 %v2295, %v2222
  %v2342 = vmul.f32 %v2308, %v2222
  %v2343 = vmul.f32 %v2321, %v2222
  %v2344 = vmul.f32 %v2340, %v2222
  %v2345 = vadd.f32 %v2341, 1e-05
  %v2346 = vadd.f32 %v2342, 1e-05
  %v2347 = vadd.f32 %v2343, 1e-05
  %v2348 = vadd.f32 %v2344, 1e-05
  %v2349 = vrsqrt.pop %v2345
  %v2350 = vrsqrt.pop %v2346
  %v2351 = vrsqrt.pop %v2347
  %v2352 = vrsqrt.pop %v2348
  %v2357 = vcombine.low %v2349, %v2350
  %v2358 = vcombine.low %v2351, %v2352
  %v2360 = vunpack.c.l.s4 1966171168
  %v2361 = vunpack.c.0.s8 %v2360
  %v2362 = vlaneseq
  %v2363 = vshrl.u32 %v2362, 7
  %v2364 = vsub.s32 %v2361, %v2363
  %v2365 = vrot.slane %v2357, %v2364
  %v2367 = vunpack.c.l.s4 1966171168
  %v2368 = vunpack.c.0.s8 %v2367
  %v2369 = vlaneseq
  %v2370 = vshrl.u32 %v2369, 7
  %v2371 = vsub.s32 %v2368, %v2370
  %v2372 = vrot.slane %v2358, %v2371
  %v2373 = vcombine.low %v2365, %v2372
  %v2375 = vunpack.c.l.s4 1966171168
  %v2376 = vunpack.c.0.s8 %v2375
  %v2377 = vlaneseq
  %v2378 = vshrl.u32 %v2377, 7
  %v2379 = vsub.s32 %v2376, %v2378
  %v2380 = vrot.slane %v2373, %v2379
  %v2382 = vmul.f32 %v2160, %v2380
  %v2384 = vlaneseq
  %v2385 = vshrl.u32 %v2384, 7
  %v2386 = vsub.s32 0, %v2385
  %v2387 = vrot.slane %v2382, %v2386
  %v2388 = vlaneseq
  %v2389 = vshrl.u32 %v2388, 7
  %v2390 = vsub.s32 1, %v2389
  %v2391 = vrot.slane %v2382, %v2390
  %v2392 = vlaneseq
  %v2393 = vshrl.u32 %v2392, 7
  %v2394 = vsub.s32 2, %v2393
  %v2395 = vrot.slane %v2382, %v2394
  %v2396 = vlaneseq
  %v2397 = vshrl.u32 %v2396, 7
  %v2398 = vsub.s32 3, %v2397
  %v2399 = vrot.slane %v2382, %v2398
  %v2404 = vmul.f32 %v2227, %v2387
  %v2405 = vmul.f32 %v2228, %v2391
  %v2406 = vmul.f32 %v2229, %v2395
  %v2407 = vmul.f32 %v2230, %v2399
  %v2408 = vmul.f32 %v2231, %v2387
  %v2409 = vmul.f32 %v2232, %v2391
  %v2410 = vmul.f32 %v2233, %v2395
  %v2411 = vmul.f32 %v2234, %v2399
  %v2412 = vmul.f32 %v2235, %v2387
  %v2413 = vmul.f32 %v2236, %v2391
  %v2414 = vmul.f32 %v2237, %v2395
  %v2415 = vmul.f32 %v2238, %v2399
  %v2416 = vmul.f32 %v2239, %v2387
  %v2417 = vmul.f32 %v2240, %v2391
  %v2418 = vmul.f32 %v2241, %v2395
  %v2419 = vmul.f32 %v2242, %v2399
  %v2420 = vmul.f32 %v2243, %v2387
  %v2421 = vmul.f32 %v2244, %v2391
  %v2422 = vmul.f32 %v2245, %v2395
  %v2423 = vmul.f32 %v2246, %v2399
  %v2424 = vmul.f32 %v2247, %v2387
  %v2425 = vmul.f32 %v2248, %v2391
  %v2426 = vmul.f32 %v2249, %v2395
  %v2427 = vmul.f32 %v2250, %v2399
  %v2428 = vmul.f32 %v2251, %v2387
  %v2429 = vmul.f32 %v2252, %v2391
  %v2430 = vmul.f32 %v2253, %v2395
  %v2431 = vmul.f32 %v2254, %v2399
  %v2433 = vlaneseq
  %v2434 = vshrl.u32 %v2433, 7
  %v2435 = vsub.s32 0, %v2434
  %v2436 = vrot.slane %v2161, %v2435
  %v2437 = vlaneseq
  %v2438 = vshrl.u32 %v2437, 7
  %v2439 = vsub.s32 1, %v2438
  %v2440 = vrot.slane %v2161, %v2439
  %v2441 = vlaneseq
  %v2442 = vshrl.u32 %v2441, 7
  %v2443 = vsub.s32 2, %v2442
  %v2444 = vrot.slane %v2161, %v2443
  %v2445 = vlaneseq
  %v2446 = vshrl.u32 %v2445, 7
  %v2447 = vsub.s32 3, %v2446
  %v2448 = vrot.slane %v2161, %v2447
  %v2453 = vadd.f32 %v2404, %v2436
  %v2454 = vadd.f32 %v2405, %v2440
  %v2455 = vadd.f32 %v2406, %v2444
  %v2456 = vadd.f32 %v2407, %v2448
  %v2457 = vadd.f32 %v2408, %v2436
  %v2458 = vadd.f32 %v2409, %v2440
  %v2459 = vadd.f32 %v2410, %v2444
  %v2460 = vadd.f32 %v2411, %v2448
  %v2461 = vadd.f32 %v2412, %v2436
  %v2462 = vadd.f32 %v2413, %v2440
  %v2463 = vadd.f32 %v2414, %v2444
  %v2464 = vadd.f32 %v2415, %v2448
  %v2465 = vadd.f32 %v2416, %v2436
  %v2466 = vadd.f32 %v2417, %v2440
  %v2467 = vadd.f32 %v2418, %v2444
  %v2468 = vadd.f32 %v2419, %v2448
  %v2469 = vadd.f32 %v2420, %v2436
  %v2470 = vadd.f32 %v2421, %v2440
  %v2471 = vadd.f32 %v2422, %v2444
  %v2472 = vadd.f32 %v2423, %v2448
  %v2473 = vadd.f32 %v2424, %v2436
  %v2474 = vadd.f32 %v2425, %v2440
  %v2475 = vadd.f32 %v2426, %v2444
  %v2476 = vadd.f32 %v2427, %v2448
  %v2477 = vadd.f32 %v2428, %v2436
  %v2478 = vadd.f32 %v2429, %v2440
  %v2479 = vadd.f32 %v2430, %v2444
  %v2480 = vadd.f32 %v2431, %v2448
  %v2481 = vld [vmem:[%s2] sm:$0xff]
  %v2482 = vld [vmem:[%s2 + $0x8] sm:$0xff]
  %v2483 = vld [vmem:[%s2 + $0x10] sm:$0xff]
  %v2484 = vld [vmem:[%s2 + $0x18] sm:$0xff]
  %v2485 = vld [vmem:[%s2 + $0x20] sm:$0xff]
  %v2486 = vld [vmem:[%s2 + $0x28] sm:$0xff]
  %v2487 = vld [vmem:[%s2 + $0x30] sm:$0xff]
  %v2488 = vld [vmem:[%s2 + $0x38] sm:$0xff]
  %v2489 = vld [vmem:[%s2 + $0x40] sm:$0xff]
  %v2490 = vld [vmem:[%s2 + $0x48] sm:$0xff]
  %v2491 = vld [vmem:[%s2 + $0x50] sm:$0xff]
  %v2492 = vld [vmem:[%s2 + $0x58] sm:$0xff]
  %v2493 = vld [vmem:[%s2 + $0x60] sm:$0xff]
  %v2494 = vld [vmem:[%s2 + $0x68] sm:$0xff]
  %v2495 = vld [vmem:[%s2 + $0x70] sm:$0xff]
  %v2496 = vld [vmem:[%s2 + $0x78] sm:$0xff]
  %v2497 = vld [vmem:[%s2 + $0x80] sm:$0xff]
  %v2498 = vld [vmem:[%s2 + $0x88] sm:$0xff]
  %v2499 = vld [vmem:[%s2 + $0x90] sm:$0xff]
  %v2500 = vld [vmem:[%s2 + $0x98] sm:$0xff]
  %v2501 = vld [vmem:[%s2 + $0xa0] sm:$0xff]
  %v2502 = vld [vmem:[%s2 + $0xa8] sm:$0xff]
  %v2503 = vld [vmem:[%s2 + $0xb0] sm:$0xff]
  %v2504 = vld [vmem:[%s2 + $0xb8] sm:$0xff]
  %v2505 = vld [vmem:[%s2 + $0xc0] sm:$0xff]
  %v2506 = vld [vmem:[%s2 + $0xc8] sm:$0xff]
  %v2507 = vld [vmem:[%s2 + $0xd0] sm:$0xff]
  %v2508 = vld [vmem:[%s2 + $0xd8] sm:$0xff]
  %v2509 = vld [vmem:[%s2 + $0xe0] sm:$0xff]
  %v2510 = vld [vmem:[%s2 + $0xe8] sm:$0xff]
  %v2511 = vld [vmem:[%s2 + $0xf0] sm:$0xff]
  %v2512 = vld [vmem:[%s2 + $0xf8] sm:$0xff]
  %v2513 = vld [vmem:[%s2 + $0x100] sm:$0xff]
  %v2514 = vld [vmem:[%s2 + $0x108] sm:$0xff]
  %v2515 = vld [vmem:[%s2 + $0x110] sm:$0xff]
  %v2516 = vld [vmem:[%s2 + $0x118] sm:$0xff]
  %v2517 = vld [vmem:[%s2 + $0x120] sm:$0xff]
  %v2518 = vld [vmem:[%s2 + $0x128] sm:$0xff]
  %v2519 = vld [vmem:[%s2 + $0x130] sm:$0xff]
  %v2520 = vld [vmem:[%s2 + $0x138] sm:$0xff]
  %v2521 = vld [vmem:[%s2 + $0x140] sm:$0xff]
  %v2522 = vld [vmem:[%s2 + $0x148] sm:$0xff]
  %v2523 = vld [vmem:[%s2 + $0x150] sm:$0xff]
  %v2524 = vld [vmem:[%s2 + $0x158] sm:$0xff]
  %v2525 = vld [vmem:[%s2 + $0x160] sm:$0xff]
  %v2526 = vld [vmem:[%s2 + $0x168] sm:$0xff]
  %v2527 = vld [vmem:[%s2 + $0x170] sm:$0xff]
  %v2528 = vld [vmem:[%s2 + $0x178] sm:$0xff]
  %v2529 = vld [vmem:[%s2 + $0x180] sm:$0xff]
  %v2530 = vld [vmem:[%s2 + $0x188] sm:$0xff]
  %v2531 = vld [vmem:[%s2 + $0x190] sm:$0xff]
  %v2532 = vld [vmem:[%s2 + $0x198] sm:$0xff]
  %v2533 = vld [vmem:[%s2 + $0x1a0] sm:$0xff]
  %v2534 = vld [vmem:[%s2 + $0x1a8] sm:$0xff]
  %v2535 = vld [vmem:[%s2 + $0x1b0] sm:$0xff]
  %2536 = vxpose.xlu0.b32.start [1/16] %v2481, 128
  %2537 = vxpose.xlu0.b32.cont [2/16] %v2482, 128
  %2538 = vxpose.xlu0.b32.cont [3/16] %v2483, 128
  %2539 = vxpose.xlu0.b32.cont [4/16] %v2484, 128
  %2540 = vxpose.xlu0.b32.cont [5/16] %v2485, 128
  %2541 = vxpose.xlu0.b32.cont [6/16] %v2486, 128
  %2542 = vxpose.xlu0.b32.cont [7/16] %v2487, 128
  %2543 = vxpose.xlu0.b32.cont [8/16] %v2488, 128
  %2544 = vxpose.xlu0.b32.cont [9/16] %v2489, 128
  %2545 = vxpose.xlu0.b32.cont [10/16] %v2490, 128
  %2546 = vxpose.xlu0.b32.cont [11/16] %v2491, 128
  %2547 = vxpose.xlu0.b32.cont [12/16] %v2492, 128
  %2548 = vxpose.xlu0.b32.cont [13/16] %v2493, 128
  %2549 = vxpose.xlu0.b32.cont [14/16] %v2494, 128
  %2550 = vxpose.xlu0.b32.cont [15/16] %v2495, 128
  %2551 = vxpose.xlu0.b32.end [16/16] %v2496, 128
  %v2552 = vpop.trf.xlu0
  %v2553 = vpop.trf.xlu0
  %v2554 = vpop.trf.xlu0
  %v2555 = vpop.trf.xlu0
  %v2556 = vpop.trf.xlu0
  %v2557 = vpop.trf.xlu0
  %v2558 = vpop.trf.xlu0
  %v2559 = vpop.trf.xlu0
  %v2560 = vpop.trf.xlu0
  %v2561 = vpop.trf.xlu0
  %v2562 = vpop.trf.xlu0
  %v2563 = vpop.trf.xlu0
  %v2564 = vpop.trf.xlu0
  %v2565 = vpop.trf.xlu0
  %v2566 = vpop.trf.xlu0
  %v2567 = vpop.trf.xlu0
  %2568 = vxpose.xlu0.b32.start [1/16] %v2497, 128
  %2569 = vxpose.xlu0.b32.cont [2/16] %v2498, 128
  %2570 = vxpose.xlu0.b32.cont [3/16] %v2499, 128
  %2571 = vxpose.xlu0.b32.cont [4/16] %v2500, 128
  %2572 = vxpose.xlu0.b32.cont [5/16] %v2501, 128
  %2573 = vxpose.xlu0.b32.cont [6/16] %v2502, 128
  %2574 = vxpose.xlu0.b32.cont [7/16] %v2503, 128
  %2575 = vxpose.xlu0.b32.cont [8/16] %v2504, 128
  %2576 = vxpose.xlu0.b32.cont [9/16] %v2505, 128
  %2577 = vxpose.xlu0.b32.cont [10/16] %v2506, 128
  %2578 = vxpose.xlu0.b32.cont [11/16] %v2507, 128
  %2579 = vxpose.xlu0.b32.cont [12/16] %v2508, 128
  %2580 = vxpose.xlu0.b32.cont [13/16] %v2509, 128
  %2581 = vxpose.xlu0.b32.cont [14/16] %v2510, 128
  %2582 = vxpose.xlu0.b32.cont [15/16] %v2511, 128
  %2583 = vxpose.xlu0.b32.end [16/16] %v2512, 128
  %v2584 = vpop.trf.xlu0
  %v2585 = vpop.trf.xlu0
  %v2586 = vpop.trf.xlu0
  %v2587 = vpop.trf.xlu0
  %v2588 = vpop.trf.xlu0
  %v2589 = vpop.trf.xlu0
  %v2590 = vpop.trf.xlu0
  %v2591 = vpop.trf.xlu0
  %v2592 = vpop.trf.xlu0
  %v2593 = vpop.trf.xlu0
  %v2594 = vpop.trf.xlu0
  %v2595 = vpop.trf.xlu0
  %v2596 = vpop.trf.xlu0
  %v2597 = vpop.trf.xlu0
  %v2598 = vpop.trf.xlu0
  %v2599 = vpop.trf.xlu0
  %2600 = vxpose.xlu0.b32.start [1/16] %v2513, 128
  %2601 = vxpose.xlu0.b32.cont [2/16] %v2514, 128
  %2602 = vxpose.xlu0.b32.cont [3/16] %v2515, 128
  %2603 = vxpose.xlu0.b32.cont [4/16] %v2516, 128
  %2604 = vxpose.xlu0.b32.cont [5/16] %v2517, 128
  %2605 = vxpose.xlu0.b32.cont [6/16] %v2518, 128
  %2606 = vxpose.xlu0.b32.cont [7/16] %v2519, 128
  %2607 = vxpose.xlu0.b32.cont [8/16] %v2520, 128
  %2608 = vxpose.xlu0.b32.cont [9/16] %v2521, 128
  %2609 = vxpose.xlu0.b32.cont [10/16] %v2522, 128
  %2610 = vxpose.xlu0.b32.cont [11/16] %v2523, 128
  %2611 = vxpose.xlu0.b32.cont [12/16] %v2524, 128
  %2612 = vxpose.xlu0.b32.cont [13/16] %v2525, 128
  %2613 = vxpose.xlu0.b32.cont [14/16] %v2526, 128
  %2614 = vxpose.xlu0.b32.cont [15/16] %v2527, 128
  %2615 = vxpose.xlu0.b32.end [16/16] %v2528, 128
  %v2616 = vpop.trf.xlu0
  %v2617 = vpop.trf.xlu0
  %v2618 = vpop.trf.xlu0
  %v2619 = vpop.trf.xlu0
  %v2620 = vpop.trf.xlu0
  %v2621 = vpop.trf.xlu0
  %v2622 = vpop.trf.xlu0
  %v2623 = vpop.trf.xlu0
  %v2624 = vpop.trf.xlu0
  %v2625 = vpop.trf.xlu0
  %v2626 = vpop.trf.xlu0
  %v2627 = vpop.trf.xlu0
  %v2628 = vpop.trf.xlu0
  %v2629 = vpop.trf.xlu0
  %v2630 = vpop.trf.xlu0
  %v2631 = vpop.trf.xlu0
  %2632 = vxpose.xlu0.b32.start [1/16] %v2529, 128
  %2633 = vxpose.xlu0.b32.cont [2/16] %v2530, 128
  %2634 = vxpose.xlu0.b32.cont [3/16] %v2531, 128
  %2635 = vxpose.xlu0.b32.cont [4/16] %v2532, 128
  %2636 = vxpose.xlu0.b32.cont [5/16] %v2533, 128
  %2637 = vxpose.xlu0.b32.cont [6/16] %v2534, 128
  %2638 = vxpose.xlu0.b32.cont [7/16] %v2535, 128
  %2639 = vxpose.xlu0.b32.cont [8/16] 0.0, 128
  %2640 = vxpose.xlu0.b32.cont [9/16] 0.0, 128
  %2641 = vxpose.xlu0.b32.cont [10/16] 0.0, 128
  %2642 = vxpose.xlu0.b32.cont [11/16] 0.0, 128
  %2643 = vxpose.xlu0.b32.cont [12/16] 0.0, 128
  %2644 = vxpose.xlu0.b32.cont [13/16] 0.0, 128
  %2645 = vxpose.xlu0.b32.cont [14/16] 0.0, 128
  %2646 = vxpose.xlu0.b32.cont [15/16] 0.0, 128
  %2647 = vxpose.xlu0.b32.end [16/16] 0.0, 128
  %v2648 = vpop.trf.xlu0
  %v2649 = vpop.trf.xlu0
  %v2650 = vpop.trf.xlu0
  %v2651 = vpop.trf.xlu0
  %v2652 = vpop.trf.xlu0
  %v2653 = vpop.trf.xlu0
  %v2654 = vpop.trf.xlu0
  %v2655 = vpop.trf.xlu0
  %v2656 = vpop.trf.xlu0
  %v2657 = vpop.trf.xlu0
  %v2658 = vpop.trf.xlu0
  %v2659 = vpop.trf.xlu0
  %v2660 = vpop.trf.xlu0
  %v2661 = vpop.trf.xlu0
  %v2662 = vpop.trf.xlu0
  %v2663 = vpop.trf.xlu0
  %v2664 = vadd.f32 %v2552, %v2453
  %v2665 = vadd.f32 %v2584, %v2454
  %v2666 = vadd.f32 %v2616, %v2455
  %v2667 = vadd.f32 %v2648, %v2456
  %v2668 = vadd.f32 %v2553, %v2457
  %v2669 = vadd.f32 %v2585, %v2458
  %v2670 = vadd.f32 %v2617, %v2459
  %v2671 = vadd.f32 %v2649, %v2460
  %v2672 = vadd.f32 %v2554, %v2461
  %v2673 = vadd.f32 %v2586, %v2462
  %v2674 = vadd.f32 %v2618, %v2463
  %v2675 = vadd.f32 %v2650, %v2464
  %v2676 = vadd.f32 %v2555, %v2465
  %v2677 = vadd.f32 %v2587, %v2466
  %v2678 = vadd.f32 %v2619, %v2467
  %v2679 = vadd.f32 %v2651, %v2468
  %v2680 = vadd.f32 %v2556, %v2469
  %v2681 = vadd.f32 %v2588, %v2470
  %v2682 = vadd.f32 %v2620, %v2471
  %v2683 = vadd.f32 %v2652, %v2472
  %v2684 = vadd.f32 %v2557, %v2473
  %v2685 = vadd.f32 %v2589, %v2474
  %v2686 = vadd.f32 %v2621, %v2475
  %v2687 = vadd.f32 %v2653, %v2476
  %v2688 = vadd.f32 %v2558, %v2477
  %v2689 = vadd.f32 %v2590, %v2478
  %v2690 = vadd.f32 %v2622, %v2479
  %v2691 = vadd.f32 %v2654, %v2480
  %v2692 = vmax.f32 %v2664, 0.0
  %v2693 = vmax.f32 %v2665, 0.0
  %v2694 = vmax.f32 %v2666, 0.0
  %v2695 = vmax.f32 %v2667, 0.0
  %v2696 = vmax.f32 %v2668, 0.0
  %v2697 = vmax.f32 %v2669, 0.0
  %v2698 = vmax.f32 %v2670, 0.0
  %v2699 = vmax.f32 %v2671, 0.0
  %v2700 = vmax.f32 %v2672, 0.0
  %v2701 = vmax.f32 %v2673, 0.0
  %v2702 = vmax.f32 %v2674, 0.0
  %v2703 = vmax.f32 %v2675, 0.0
  %v2704 = vmax.f32 %v2676, 0.0
  %v2705 = vmax.f32 %v2677, 0.0
  %v2706 = vmax.f32 %v2678, 0.0
  %v2707 = vmax.f32 %v2679, 0.0
  %v2708 = vmax.f32 %v2680, 0.0
  %v2709 = vmax.f32 %v2681, 0.0
  %v2710 = vmax.f32 %v2682, 0.0
  %v2711 = vmax.f32 %v2683, 0.0
  %v2712 = vmax.f32 %v2684, 0.0
  %v2713 = vmax.f32 %v2685, 0.0
  %v2714 = vmax.f32 %v2686, 0.0
  %v2715 = vmax.f32 %v2687, 0.0
  %v2716 = vmax.f32 %v2688, 0.0
  %v2717 = vmax.f32 %v2689, 0.0
  %v2718 = vmax.f32 %v2690, 0.0
  %v2719 = vmax.f32 %v2691, 0.0
  %s2720 = sshll.u32 %s1487, 4
  %2721 = dma.done %s515, %s2720
  %v2722 = vld [vmem:[#allocation3] sm:$0xff]
  %v2723 = vld [vmem:[#allocation3 + $0x8] sm:$0xff]
  %v2724 = vld [vmem:[#allocation3 + $0x10] sm:$0xff]
  %v2725 = vld [vmem:[#allocation3 + $0x18] sm:$0xff]
  %v2726 = vld [vmem:[#allocation3 + $0x20] sm:$0xff]
  %v2727 = vld [vmem:[#allocation3 + $0x28] sm:$0xff]
  %v2728 = vld [vmem:[#allocation3 + $0x30] sm:$0xff]
  %v2729 = vld [vmem:[#allocation3 + $0x38] sm:$0xff]
  %v2730 = vld [vmem:[#allocation3 + $0x40] sm:$0xff]
  %v2731 = vld [vmem:[#allocation3 + $0x48] sm:$0xff]
  %v2732 = vld [vmem:[#allocation3 + $0x50] sm:$0xff]
  %v2733 = vld [vmem:[#allocation3 + $0x58] sm:$0xff]
  %v2734 = vld [vmem:[#allocation3 + $0x60] sm:$0xff]
  %v2735 = vld [vmem:[#allocation3 + $0x68] sm:$0xff]
  %v2736 = vld [vmem:[#allocation3 + $0x70] sm:$0xff]
  %v2737 = vld [vmem:[#allocation3 + $0x78] sm:$0xff]
  %v2738 = vld [vmem:[#allocation3 + $0x80] sm:$0xff]
  %v2739 = vld [vmem:[#allocation3 + $0x88] sm:$0xff]
  %v2740 = vld [vmem:[#allocation3 + $0x90] sm:$0xff]
  %v2741 = vld [vmem:[#allocation3 + $0x98] sm:$0xff]
  %v2742 = vld [vmem:[#allocation3 + $0xa0] sm:$0xff]
  %v2743 = vld [vmem:[#allocation3 + $0xa8] sm:$0xff]
  %v2744 = vld [vmem:[#allocation3 + $0xb0] sm:$0xff]
  %v2745 = vld [vmem:[#allocation3 + $0xb8] sm:$0xff]
  %v2746 = vld [vmem:[#allocation3 + $0xc0] sm:$0xff]
  %v2747 = vld [vmem:[#allocation3 + $0xc8] sm:$0xff]
  %v2748 = vld [vmem:[#allocation3 + $0xd0] sm:$0xff]
  %v2749 = vld [vmem:[#allocation3 + $0xd8] sm:$0xff]
  %v2750 = vld [vmem:[#allocation3 + $0xe0] sm:$0xff]
  %v2751 = vld [vmem:[#allocation3 + $0xe8] sm:$0xff]
  %v2752 = vld [vmem:[#allocation3 + $0xf0] sm:$0xff]
  %v2753 = vld [vmem:[#allocation3 + $0xf8] sm:$0xff]
  %v2754 = vld [vmem:[#allocation3 + $0x100] sm:$0xff]
  %v2755 = vld [vmem:[#allocation3 + $0x108] sm:$0xff]
  %v2756 = vld [vmem:[#allocation3 + $0x110] sm:$0xff]
  %v2757 = vld [vmem:[#allocation3 + $0x118] sm:$0xff]
  %v2758 = vld [vmem:[#allocation3 + $0x120] sm:$0xff]
  %v2759 = vld [vmem:[#allocation3 + $0x128] sm:$0xff]
  %v2760 = vld [vmem:[#allocation3 + $0x130] sm:$0xff]
  %v2761 = vld [vmem:[#allocation3 + $0x138] sm:$0xff]
  %v2762 = vld [vmem:[#allocation3 + $0x140] sm:$0xff]
  %v2763 = vld [vmem:[#allocation3 + $0x148] sm:$0xff]
  %v2764 = vld [vmem:[#allocation3 + $0x150] sm:$0xff]
  %v2765 = vld [vmem:[#allocation3 + $0x158] sm:$0xff]
  %v2766 = vld [vmem:[#allocation3 + $0x160] sm:$0xff]
  %v2767 = vld [vmem:[#allocation3 + $0x168] sm:$0xff]
  %v2768 = vld [vmem:[#allocation3 + $0x170] sm:$0xff]
  %v2769 = vld [vmem:[#allocation3 + $0x178] sm:$0xff]
  %v2770 = vld [vmem:[#allocation3 + $0x180] sm:$0xff]
  %v2771 = vld [vmem:[#allocation3 + $0x188] sm:$0xff]
  %v2772 = vld [vmem:[#allocation3 + $0x190] sm:$0xff]
  %v2773 = vld [vmem:[#allocation3 + $0x198] sm:$0xff]
  %v2774 = vld [vmem:[#allocation3 + $0x1a0] sm:$0xff]
  %v2775 = vld [vmem:[#allocation3 + $0x1a8] sm:$0xff]
  %v2776 = vld [vmem:[#allocation3 + $0x1b0] sm:$0xff]
  %v2777 = vld [vmem:[#allocation3 + $0x1b8] sm:$0xff]
  %v2778 = vld [vmem:[#allocation3 + $0x1c0] sm:$0xff]
  %v2779 = vld [vmem:[#allocation3 + $0x1c8] sm:$0xff]
  %v2780 = vld [vmem:[#allocation3 + $0x1d0] sm:$0xff]
  %v2781 = vld [vmem:[#allocation3 + $0x1d8] sm:$0xff]
  %v2782 = vld [vmem:[#allocation3 + $0x1e0] sm:$0xff]
  %v2783 = vld [vmem:[#allocation3 + $0x1e8] sm:$0xff]
  %v2784 = vld [vmem:[#allocation3 + $0x1f0] sm:$0xff]
  %v2785 = vld [vmem:[#allocation3 + $0x1f8] sm:$0xff]
  %v2786 = vld [vmem:[#allocation3 + $0x200] sm:$0xff]
  %v2787 = vld [vmem:[#allocation3 + $0x208] sm:$0xff]
  %v2788 = vld [vmem:[#allocation3 + $0x210] sm:$0xff]
  %v2789 = vld [vmem:[#allocation3 + $0x218] sm:$0xff]
  %v2790 = vld [vmem:[#allocation3 + $0x220] sm:$0xff]
  %v2791 = vld [vmem:[#allocation3 + $0x228] sm:$0xff]
  %v2792 = vld [vmem:[#allocation3 + $0x230] sm:$0xff]
  %v2793 = vld [vmem:[#allocation3 + $0x238] sm:$0xff]
  %v2794 = vld [vmem:[#allocation3 + $0x240] sm:$0xff]
  %v2795 = vld [vmem:[#allocation3 + $0x248] sm:$0xff]
  %v2796 = vld [vmem:[#allocation3 + $0x250] sm:$0xff]
  %v2797 = vld [vmem:[#allocation3 + $0x258] sm:$0xff]
  %v2798 = vld [vmem:[#allocation3 + $0x260] sm:$0xff]
  %v2799 = vld [vmem:[#allocation3 + $0x268] sm:$0xff]
  %v2800 = vld [vmem:[#allocation3 + $0x270] sm:$0xff]
  %v2801 = vld [vmem:[#allocation3 + $0x278] sm:$0xff]
  %v2802 = vld [vmem:[#allocation3 + $0x280] sm:$0xff]
  %v2803 = vld [vmem:[#allocation3 + $0x288] sm:$0xff]
  %v2804 = vld [vmem:[#allocation3 + $0x290] sm:$0xff]
  %v2805 = vld [vmem:[#allocation3 + $0x298] sm:$0xff]
  %v2806 = vld [vmem:[#allocation3 + $0x2a0] sm:$0xff]
  %v2807 = vld [vmem:[#allocation3 + $0x2a8] sm:$0xff]
  %v2808 = vld [vmem:[#allocation3 + $0x2b0] sm:$0xff]
  %v2809 = vld [vmem:[#allocation3 + $0x2b8] sm:$0xff]
  %v2810 = vld [vmem:[#allocation3 + $0x2c0] sm:$0xff]
  %v2811 = vld [vmem:[#allocation3 + $0x2c8] sm:$0xff]
  %v2812 = vld [vmem:[#allocation3 + $0x2d0] sm:$0xff]
  %v2813 = vld [vmem:[#allocation3 + $0x2d8] sm:$0xff]
  %v2814 = vld [vmem:[#allocation3 + $0x2e0] sm:$0xff]
  %v2815 = vld [vmem:[#allocation3 + $0x2e8] sm:$0xff]
  %v2816 = vld [vmem:[#allocation3 + $0x2f0] sm:$0xff]
  %v2817 = vld [vmem:[#allocation3 + $0x2f8] sm:$0xff]
  %v2818 = vld [vmem:[#allocation3 + $0x300] sm:$0xff]
  %v2819 = vld [vmem:[#allocation3 + $0x308] sm:$0xff]
  %v2820 = vld [vmem:[#allocation3 + $0x310] sm:$0xff]
  %v2821 = vld [vmem:[#allocation3 + $0x318] sm:$0xff]
  %v2822 = vld [vmem:[#allocation3 + $0x320] sm:$0xff]
  %v2823 = vld [vmem:[#allocation3 + $0x328] sm:$0xff]
  %v2824 = vld [vmem:[#allocation3 + $0x330] sm:$0xff]
  %v2825 = vld [vmem:[#allocation3 + $0x338] sm:$0xff]
  %v2826 = vld [vmem:[#allocation3 + $0x340] sm:$0xff]
  %v2827 = vld [vmem:[#allocation3 + $0x348] sm:$0xff]
  %v2828 = vld [vmem:[#allocation3 + $0x350] sm:$0xff]
  %v2829 = vld [vmem:[#allocation3 + $0x358] sm:$0xff]
  %v2830 = vld [vmem:[#allocation3 + $0x360] sm:$0xff]
  %v2831 = vld [vmem:[#allocation3 + $0x368] sm:$0xff]
  %v2832 = vld [vmem:[#allocation3 + $0x370] sm:$0xff]
  %v2833 = vld [vmem:[#allocation3 + $0x378] sm:$0xff]
  %v2834 = vld [vmem:[#allocation3 + $0x380] sm:$0xff]
  %v2835 = vld [vmem:[#allocation3 + $0x388] sm:$0xff]
  %v2836 = vld [vmem:[#allocation3 + $0x390] sm:$0xff]
  %v2837 = vld [vmem:[#allocation3 + $0x398] sm:$0xff]
  %v2838 = vld [vmem:[#allocation3 + $0x3a0] sm:$0xff]
  %v2839 = vld [vmem:[#allocation3 + $0x3a8] sm:$0xff]
  %v2840 = vld [vmem:[#allocation3 + $0x3b0] sm:$0xff]
  %v2841 = vld [vmem:[#allocation3 + $0x3b8] sm:$0xff]
  %v2842 = vld [vmem:[#allocation3 + $0x3c0] sm:$0xff]
  %v2843 = vld [vmem:[#allocation3 + $0x3c8] sm:$0xff]
  %v2844 = vld [vmem:[#allocation3 + $0x3d0] sm:$0xff]
  %v2845 = vld [vmem:[#allocation3 + $0x3d8] sm:$0xff]
  %v2846 = vld [vmem:[#allocation3 + $0x3e0] sm:$0xff]
  %v2847 = vld [vmem:[#allocation3 + $0x3e8] sm:$0xff]
  %v2848 = vld [vmem:[#allocation3 + $0x3f0] sm:$0xff]
  %v2849 = vld [vmem:[#allocation3 + $0x3f8] sm:$0xff]
  %v2850 = vld [vmem:[#allocation3 + $0x400] sm:$0xff]
  %v2851 = vld [vmem:[#allocation3 + $0x408] sm:$0xff]
  %v2852 = vld [vmem:[#allocation3 + $0x410] sm:$0xff]
  %v2853 = vld [vmem:[#allocation3 + $0x418] sm:$0xff]
  %v2854 = vld [vmem:[#allocation3 + $0x420] sm:$0xff]
  %v2855 = vld [vmem:[#allocation3 + $0x428] sm:$0xff]
  %v2856 = vld [vmem:[#allocation3 + $0x430] sm:$0xff]
  %v2857 = vld [vmem:[#allocation3 + $0x438] sm:$0xff]
  %v2858 = vld [vmem:[#allocation3 + $0x440] sm:$0xff]
  %v2859 = vld [vmem:[#allocation3 + $0x448] sm:$0xff]
  %v2860 = vld [vmem:[#allocation3 + $0x450] sm:$0xff]
  %v2861 = vld [vmem:[#allocation3 + $0x458] sm:$0xff]
  %v2862 = vld [vmem:[#allocation3 + $0x460] sm:$0xff]
  %v2863 = vld [vmem:[#allocation3 + $0x468] sm:$0xff]
  %v2864 = vld [vmem:[#allocation3 + $0x470] sm:$0xff]
  %v2865 = vld [vmem:[#allocation3 + $0x478] sm:$0xff]
  %v2866 = vld [vmem:[#allocation3 + $0x480] sm:$0xff]
  %v2867 = vld [vmem:[#allocation3 + $0x488] sm:$0xff]
  %v2868 = vld [vmem:[#allocation3 + $0x490] sm:$0xff]
  %v2869 = vld [vmem:[#allocation3 + $0x498] sm:$0xff]
  %v2870 = vld [vmem:[#allocation3 + $0x4a0] sm:$0xff]
  %v2871 = vld [vmem:[#allocation3 + $0x4a8] sm:$0xff]
  %v2872 = vld [vmem:[#allocation3 + $0x4b0] sm:$0xff]
  %v2873 = vld [vmem:[#allocation3 + $0x4b8] sm:$0xff]
  %v2874 = vld [vmem:[#allocation3 + $0x4c0] sm:$0xff]
  %v2875 = vld [vmem:[#allocation3 + $0x4c8] sm:$0xff]
  %v2876 = vld [vmem:[#allocation3 + $0x4d0] sm:$0xff]
  %v2877 = vld [vmem:[#allocation3 + $0x4d8] sm:$0xff]
  %v2878 = vld [vmem:[#allocation3 + $0x4e0] sm:$0xff]
  %v2879 = vld [vmem:[#allocation3 + $0x4e8] sm:$0xff]
  %v2880 = vld [vmem:[#allocation3 + $0x4f0] sm:$0xff]
  %v2881 = vld [vmem:[#allocation3 + $0x4f8] sm:$0xff]
  %v2882 = vld [vmem:[#allocation3 + $0x500] sm:$0xff]
  %v2883 = vld [vmem:[#allocation3 + $0x508] sm:$0xff]
  %v2884 = vld [vmem:[#allocation3 + $0x510] sm:$0xff]
  %v2885 = vld [vmem:[#allocation3 + $0x518] sm:$0xff]
  %v2886 = vld [vmem:[#allocation3 + $0x520] sm:$0xff]
  %v2887 = vld [vmem:[#allocation3 + $0x528] sm:$0xff]
  %v2888 = vld [vmem:[#allocation3 + $0x530] sm:$0xff]
  %v2889 = vld [vmem:[#allocation3 + $0x538] sm:$0xff]
  %v2890 = vld [vmem:[#allocation3 + $0x540] sm:$0xff]
  %v2891 = vld [vmem:[#allocation3 + $0x548] sm:$0xff]
  %v2892 = vld [vmem:[#allocation3 + $0x550] sm:$0xff]
  %v2893 = vld [vmem:[#allocation3 + $0x558] sm:$0xff]
  %v2894 = vld [vmem:[#allocation3 + $0x560] sm:$0xff]
  %v2895 = vld [vmem:[#allocation3 + $0x568] sm:$0xff]
  %v2896 = vld [vmem:[#allocation3 + $0x570] sm:$0xff]
  %v2897 = vld [vmem:[#allocation3 + $0x578] sm:$0xff]
  %v2898 = vld [vmem:[#allocation3 + $0x580] sm:$0xff]
  %v2899 = vld [vmem:[#allocation3 + $0x588] sm:$0xff]
  %v2900 = vld [vmem:[#allocation3 + $0x590] sm:$0xff]
  %v2901 = vld [vmem:[#allocation3 + $0x598] sm:$0xff]
  %v2902 = vld [vmem:[#allocation3 + $0x5a0] sm:$0xff]
  %v2903 = vld [vmem:[#allocation3 + $0x5a8] sm:$0xff]
  %v2904 = vld [vmem:[#allocation3 + $0x5b0] sm:$0xff]
  %v2905 = vld [vmem:[#allocation3 + $0x5b8] sm:$0xff]
  %v2906 = vld [vmem:[#allocation3 + $0x5c0] sm:$0xff]
  %v2907 = vld [vmem:[#allocation3 + $0x5c8] sm:$0xff]
  %v2908 = vld [vmem:[#allocation3 + $0x5d0] sm:$0xff]
  %v2909 = vld [vmem:[#allocation3 + $0x5d8] sm:$0xff]
  %v2910 = vld [vmem:[#allocation3 + $0x5e0] sm:$0xff]
  %v2911 = vld [vmem:[#allocation3 + $0x5e8] sm:$0xff]
  %v2912 = vld [vmem:[#allocation3 + $0x5f0] sm:$0xff]
  %v2913 = vld [vmem:[#allocation3 + $0x5f8] sm:$0xff]
  %v2914 = vld [vmem:[#allocation3 + $0x600] sm:$0xff]
  %v2915 = vld [vmem:[#allocation3 + $0x608] sm:$0xff]
  %v2916 = vld [vmem:[#allocation3 + $0x610] sm:$0xff]
  %v2917 = vld [vmem:[#allocation3 + $0x618] sm:$0xff]
  %v2918 = vld [vmem:[#allocation3 + $0x620] sm:$0xff]
  %v2919 = vld [vmem:[#allocation3 + $0x628] sm:$0xff]
  %v2920 = vld [vmem:[#allocation3 + $0x630] sm:$0xff]
  %v2921 = vld [vmem:[#allocation3 + $0x638] sm:$0xff]
  %v2922 = vld [vmem:[#allocation3 + $0x640] sm:$0xff]
  %v2923 = vld [vmem:[#allocation3 + $0x648] sm:$0xff]
  %v2924 = vld [vmem:[#allocation3 + $0x650] sm:$0xff]
  %v2925 = vld [vmem:[#allocation3 + $0x658] sm:$0xff]
  %v2926 = vld [vmem:[#allocation3 + $0x660] sm:$0xff]
  %v2927 = vld [vmem:[#allocation3 + $0x668] sm:$0xff]
  %v2928 = vld [vmem:[#allocation3 + $0x670] sm:$0xff]
  %v2929 = vld [vmem:[#allocation3 + $0x678] sm:$0xff]
  %v2930 = vld [vmem:[#allocation3 + $0x680] sm:$0xff]
  %v2931 = vld [vmem:[#allocation3 + $0x688] sm:$0xff]
  %v2932 = vld [vmem:[#allocation3 + $0x690] sm:$0xff]
  %v2933 = vld [vmem:[#allocation3 + $0x698] sm:$0xff]
  %v2934 = vld [vmem:[#allocation3 + $0x6a0] sm:$0xff]
  %v2935 = vld [vmem:[#allocation3 + $0x6a8] sm:$0xff]
  %v2936 = vld [vmem:[#allocation3 + $0x6b0] sm:$0xff]
  %v2937 = vld [vmem:[#allocation3 + $0x6b8] sm:$0xff]
  %v2938 = vld [vmem:[#allocation3 + $0x6c0] sm:$0xff]
  %v2939 = vld [vmem:[#allocation3 + $0x6c8] sm:$0xff]
  %v2940 = vld [vmem:[#allocation3 + $0x6d0] sm:$0xff]
  %v2941 = vld [vmem:[#allocation3 + $0x6d8] sm:$0xff]
  %v2943 = vsel %vm1710, %v2695, 0
  %v2946 = vsel %vm1710, %v2699, 0
  %v2949 = vsel %vm1710, %v2703, 0
  %v2952 = vsel %vm1710, %v2707, 0
  %v2955 = vsel %vm1710, %v2711, 0
  %v2958 = vsel %vm1710, %v2715, 0
  %v2961 = vsel %vm1710, %v2719, 0
  %2963 = vmatprep.subr.mxu0 %v2783
  %2964 = vmatpush1.msra.mxu0 %v2782
  %2965 = vmatprep.subr.mxu0 %v2779
  %2966 = vmatpush1.msra.mxu0 %v2778
  %2967 = vmatprep.subr.mxu0 %v2775
  %2968 = vmatpush1.msra.mxu0 %v2774
  %2969 = vmatprep.subr.mxu0 %v2771
  %2970 = vmatpush1.msra.mxu0 %v2770
  %2971 = vmatprep.subr.mxu0 %v2767
  %2972 = vmatpush1.msra.mxu0 %v2766
  %2973 = vmatprep.subr.mxu0 %v2763
  %2974 = vmatpush1.msra.mxu0 %v2762
  %2975 = vmatprep.subr.mxu0 %v2759
  %2976 = vmatpush1.msra.mxu0 %v2758
  %2977 = vmatprep.subr.mxu0 %v2755
  %2978 = vmatpush1.msra.mxu0 %v2754
  %2979 = vmatprep.subr.mxu0 %v2751
  %2980 = vmatpush1.msra.mxu0 %v2750
  %2981 = vmatprep.subr.mxu0 %v2747
  %2982 = vmatpush1.msra.mxu0 %v2746
  %2983 = vmatprep.subr.mxu0 %v2743
  %2984 = vmatpush1.msra.mxu0 %v2742
  %2985 = vmatprep.subr.mxu0 %v2739
  %2986 = vmatpush1.msra.mxu0 %v2738
  %2987 = vmatprep.subr.mxu0 %v2735
  %2988 = vmatpush1.msra.mxu0 %v2734
  %2989 = vmatprep.subr.mxu0 %v2731
  %2990 = vmatpush1.msra.mxu0 %v2730
  %2991 = vmatprep.subr.mxu0 %v2727
  %2992 = vmatpush1.msra.mxu0 %v2726
  %2993 = vmatprep.subr.mxu0 %v2723
  %2994 = vmatpush1.msra.mxu0 %v2722
  %2995 = vmatprep.subr.mxu0 %v2847
  %2996 = vmatpush2.msra.mxu0 %v2846
  %2997 = vmatprep.subr.mxu0 %v2843
  %2998 = vmatpush2.msra.mxu0 %v2842
  %2999 = vmatprep.subr.mxu0 %v2839
  %3000 = vmatpush2.msra.mxu0 %v2838
  %3001 = vmatprep.subr.mxu0 %v2835
  %3002 = vmatpush2.msra.mxu0 %v2834
  %3003 = vmatprep.subr.mxu0 %v2831
  %3004 = vmatpush2.msra.mxu0 %v2830
  %3005 = vmatprep.subr.mxu0 %v2827
  %3006 = vmatpush2.msra.mxu0 %v2826
  %3007 = vmatprep.subr.mxu0 %v2823
  %3008 = vmatpush2.msra.mxu0 %v2822
  %3009 = vmatprep.subr.mxu0 %v2819
  %3010 = vmatpush2.msra.mxu0 %v2818
  %3011 = vmatprep.subr.mxu0 %v2815
  %3012 = vmatpush2.msra.mxu0 %v2814
  %3013 = vmatprep.subr.mxu0 %v2811
  %3014 = vmatpush2.msra.mxu0 %v2810
  %3015 = vmatprep.subr.mxu0 %v2807
  %3016 = vmatpush2.msra.mxu0 %v2806
  %3017 = vmatprep.subr.mxu0 %v2803
  %3018 = vmatpush2.msra.mxu0 %v2802
  %3019 = vmatprep.subr.mxu0 %v2799
  %3020 = vmatpush2.msra.mxu0 %v2798
  %3021 = vmatprep.subr.mxu0 %v2795
  %3022 = vmatpush2.msra.mxu0 %v2794
  %3023 = vmatprep.subr.mxu0 %v2791
  %3024 = vmatpush2.msra.mxu0 %v2790
  %3025 = vmatprep.subr.mxu0 %v2787
  %3026 = vmatpush2.msra.mxu0 %v2786
  %3027 = vmatprep.mubr.f32.mxu0 %v2693
  %3028 = vmatmul.mubr.f32.gmra.mxu0 %v2692
  %v3029 = vpop.f32.mrf.mxu0
  %v3030 = vadd.f32 0.0, %v3029
  %v3031 = vpop.f32.mrf.mxu0
  %v3032 = vadd.f32 0.0, %v3031
  %3033 = vmatprep.mubr.f32.mxu0 %v2697
  %3034 = vmatmul.mubr.f32.gmra.mxu0 %v2696
  %v3035 = vpop.f32.mrf.mxu0
  %v3036 = vadd.f32 0.0, %v3035
  %v3037 = vpop.f32.mrf.mxu0
  %v3038 = vadd.f32 0.0, %v3037
  %3039 = vmatprep.mubr.f32.mxu0 %v2701
  %3040 = vmatmul.mubr.f32.gmra.mxu0 %v2700
  %v3041 = vpop.f32.mrf.mxu0
  %v3042 = vadd.f32 0.0, %v3041
  %v3043 = vpop.f32.mrf.mxu0
  %v3044 = vadd.f32 0.0, %v3043
  %3045 = vmatprep.mubr.f32.mxu0 %v2705
  %3046 = vmatmul.mubr.f32.gmra.mxu0 %v2704
  %v3047 = vpop.f32.mrf.mxu0
  %v3048 = vadd.f32 0.0, %v3047
  %v3049 = vpop.f32.mrf.mxu0
  %v3050 = vadd.f32 0.0, %v3049
  %3051 = vmatprep.mubr.f32.mxu0 %v2709
  %3052 = vmatmul.mubr.f32.gmra.mxu0 %v2708
  %v3053 = vpop.f32.mrf.mxu0
  %v3054 = vadd.f32 0.0, %v3053
  %v3055 = vpop.f32.mrf.mxu0
  %v3056 = vadd.f32 0.0, %v3055
  %3057 = vmatprep.mubr.f32.mxu0 %v2713
  %3058 = vmatmul.mubr.f32.gmra.mxu0 %v2712
  %v3059 = vpop.f32.mrf.mxu0
  %v3060 = vadd.f32 0.0, %v3059
  %v3061 = vpop.f32.mrf.mxu0
  %v3062 = vadd.f32 0.0, %v3061
  %3063 = vmatprep.mubr.f32.mxu0 %v2717
  %3064 = vmatmul.mubr.f32.gmra.mxu0 %v2716
  %v3065 = vpop.f32.mrf.mxu0
  %v3066 = vadd.f32 0.0, %v3065
  %v3067 = vpop.f32.mrf.mxu0
  %v3068 = vadd.f32 0.0, %v3067
  %3069 = vdwg.mxu0
  %3070 = vmatprep.subr.mxu0 %v2911
  %3071 = vmatpush1.msra.mxu0 %v2910
  %3072 = vmatprep.subr.mxu0 %v2907
  %3073 = vmatpush1.msra.mxu0 %v2906
  %3074 = vmatprep.subr.mxu0 %v2903
  %3075 = vmatpush1.msra.mxu0 %v2902
  %3076 = vmatprep.subr.mxu0 %v2899
  %3077 = vmatpush1.msra.mxu0 %v2898
  %3078 = vmatprep.subr.mxu0 %v2895
  %3079 = vmatpush1.msra.mxu0 %v2894
  %3080 = vmatprep.subr.mxu0 %v2891
  %3081 = vmatpush1.msra.mxu0 %v2890
  %3082 = vmatprep.subr.mxu0 %v2887
  %3083 = vmatpush1.msra.mxu0 %v2886
  %3084 = vmatprep.subr.mxu0 %v2883
  %3085 = vmatpush1.msra.mxu0 %v2882
  %3086 = vmatprep.subr.mxu0 %v2879
  %3087 = vmatpush1.msra.mxu0 %v2878
  %3088 = vmatprep.subr.mxu0 %v2875
  %3089 = vmatpush1.msra.mxu0 %v2874
  %3090 = vmatprep.subr.mxu0 %v2871
  %3091 = vmatpush1.msra.mxu0 %v2870
  %3092 = vmatprep.subr.mxu0 %v2867
  %3093 = vmatpush1.msra.mxu0 %v2866
  %3094 = vmatprep.subr.mxu0 %v2863
  %3095 = vmatpush1.msra.mxu0 %v2862
  %3096 = vmatprep.subr.mxu0 %v2859
  %3097 = vmatpush1.msra.mxu0 %v2858
  %3098 = vmatprep.subr.mxu0 %v2855
  %3099 = vmatpush1.msra.mxu0 %v2854
  %3100 = vmatprep.subr.mxu0 %v2851
  %3101 = vmatpush1.msra.mxu0 %v2850
  %3102 = vmatprep.subr.mxu0 0.0
  %3103 = vmatpush2.msra.mxu0 0.0
  %3104 = vmatprep.subr.mxu0 0.0
  %3105 = vmatpush2.msra.mxu0 0.0
  %3106 = vmatprep.subr.mxu0 0.0
  %3107 = vmatpush2.msra.mxu0 0.0
  %3108 = vmatprep.subr.mxu0 0.0
  %3109 = vmatpush2.msra.mxu0 0.0
  %3110 = vmatprep.subr.mxu0 0.0
  %3111 = vmatpush2.msra.mxu0 0.0
  %3112 = vmatprep.subr.mxu0 0.0
  %3113 = vmatpush2.msra.mxu0 0.0
  %3114 = vmatprep.subr.mxu0 0.0
  %3115 = vmatpush2.msra.mxu0 0.0
  %3116 = vmatprep.subr.mxu0 0.0
  %3117 = vmatpush2.msra.mxu0 0.0
  %3118 = vmatprep.subr.mxu0 0.0
  %3119 = vmatpush2.msra.mxu0 0.0
  %3120 = vmatprep.subr.mxu0 %v2939
  %3121 = vmatpush2.msra.mxu0 %v2938
  %3122 = vmatprep.subr.mxu0 %v2935
  %3123 = vmatpush2.msra.mxu0 %v2934
  %3124 = vmatprep.subr.mxu0 %v2931
  %3125 = vmatpush2.msra.mxu0 %v2930
  %3126 = vmatprep.subr.mxu0 %v2927
  %3127 = vmatpush2.msra.mxu0 %v2926
  %3128 = vmatprep.subr.mxu0 %v2923
  %3129 = vmatpush2.msra.mxu0 %v2922
  %3130 = vmatprep.subr.mxu0 %v2919
  %3131 = vmatpush2.msra.mxu0 %v2918
  %3132 = vmatprep.subr.mxu0 %v2915
  %3133 = vmatpush2.msra.mxu0 %v2914
  %3134 = vmatprep.mubr.f32.mxu0 %v2943
  %3135 = vmatmul.mubr.f32.gmra.mxu0 %v2694
  %v3136 = vpop.f32.mrf.mxu0
  %v3137 = vadd.f32 %v3030, %v3136
  %v3138 = vpop.f32.mrf.mxu0
  %v3139 = vadd.f32 %v3032, %v3138
  %3140 = vmatprep.mubr.f32.mxu0 %v2946
  %3141 = vmatmul.mubr.f32.gmra.mxu0 %v2698
  %v3142 = vpop.f32.mrf.mxu0
  %v3143 = vadd.f32 %v3036, %v3142
  %v3144 = vpop.f32.mrf.mxu0
  %v3145 = vadd.f32 %v3038, %v3144
  %3146 = vmatprep.mubr.f32.mxu0 %v2949
  %3147 = vmatmul.mubr.f32.gmra.mxu0 %v2702
  %v3148 = vpop.f32.mrf.mxu0
  %v3149 = vadd.f32 %v3042, %v3148
  %v3150 = vpop.f32.mrf.mxu0
  %v3151 = vadd.f32 %v3044, %v3150
  %3152 = vmatprep.mubr.f32.mxu0 %v2952
  %3153 = vmatmul.mubr.f32.gmra.mxu0 %v2706
  %v3154 = vpop.f32.mrf.mxu0
  %v3155 = vadd.f32 %v3048, %v3154
  %v3156 = vpop.f32.mrf.mxu0
  %v3157 = vadd.f32 %v3050, %v3156
  %3158 = vmatprep.mubr.f32.mxu0 %v2955
  %3159 = vmatmul.mubr.f32.gmra.mxu0 %v2710
  %v3160 = vpop.f32.mrf.mxu0
  %v3161 = vadd.f32 %v3054, %v3160
  %v3162 = vpop.f32.mrf.mxu0
  %v3163 = vadd.f32 %v3056, %v3162
  %3164 = vmatprep.mubr.f32.mxu0 %v2958
  %3165 = vmatmul.mubr.f32.gmra.mxu0 %v2714
  %v3166 = vpop.f32.mrf.mxu0
  %v3167 = vadd.f32 %v3060, %v3166
  %v3168 = vpop.f32.mrf.mxu0
  %v3169 = vadd.f32 %v3062, %v3168
  %3170 = vmatprep.mubr.f32.mxu0 %v2961
  %3171 = vmatmul.mubr.f32.gmra.mxu0 %v2718
  %v3172 = vpop.f32.mrf.mxu0
  %v3173 = vadd.f32 %v3066, %v3172
  %v3174 = vpop.f32.mrf.mxu0
  %v3175 = vadd.f32 %v3068, %v3174
  %3176 = vdwg.mxu0
  %3177 = vmatprep.subr.mxu0 %v2785
  %3178 = vmatpush1.msra.mxu0 %v2784
  %3179 = vmatprep.subr.mxu0 %v2781
  %3180 = vmatpush1.msra.mxu0 %v2780
  %3181 = vmatprep.subr.mxu0 %v2777
  %3182 = vmatpush1.msra.mxu0 %v2776
  %3183 = vmatprep.subr.mxu0 %v2773
  %3184 = vmatpush1.msra.mxu0 %v2772
  %3185 = vmatprep.subr.mxu0 %v2769
  %3186 = vmatpush1.msra.mxu0 %v2768
  %3187 = vmatprep.subr.mxu0 %v2765
  %3188 = vmatpush1.msra.mxu0 %v2764
  %3189 = vmatprep.subr.mxu0 %v2761
  %3190 = vmatpush1.msra.mxu0 %v2760
  %3191 = vmatprep.subr.mxu0 %v2757
  %3192 = vmatpush1.msra.mxu0 %v2756
  %3193 = vmatprep.subr.mxu0 %v2753
  %3194 = vmatpush1.msra.mxu0 %v2752
  %3195 = vmatprep.subr.mxu0 %v2749
  %3196 = vmatpush1.msra.mxu0 %v2748
  %3197 = vmatprep.subr.mxu0 %v2745
  %3198 = vmatpush1.msra.mxu0 %v2744
  %3199 = vmatprep.subr.mxu0 %v2741
  %3200 = vmatpush1.msra.mxu0 %v2740
  %3201 = vmatprep.subr.mxu0 %v2737
  %3202 = vmatpush1.msra.mxu0 %v2736
  %3203 = vmatprep.subr.mxu0 %v2733
  %3204 = vmatpush1.msra.mxu0 %v2732
  %3205 = vmatprep.subr.mxu0 %v2729
  %3206 = vmatpush1.msra.mxu0 %v2728
  %3207 = vmatprep.subr.mxu0 %v2725
  %3208 = vmatpush1.msra.mxu0 %v2724
  %3209 = vmatprep.subr.mxu0 %v2849
  %3210 = vmatpush2.msra.mxu0 %v2848
  %3211 = vmatprep.subr.mxu0 %v2845
  %3212 = vmatpush2.msra.mxu0 %v2844
  %3213 = vmatprep.subr.mxu0 %v2841
  %3214 = vmatpush2.msra.mxu0 %v2840
  %3215 = vmatprep.subr.mxu0 %v2837
  %3216 = vmatpush2.msra.mxu0 %v2836
  %3217 = vmatprep.subr.mxu0 %v2833
  %3218 = vmatpush2.msra.mxu0 %v2832
  %3219 = vmatprep.subr.mxu0 %v2829
  %3220 = vmatpush2.msra.mxu0 %v2828
  %3221 = vmatprep.subr.mxu0 %v2825
  %3222 = vmatpush2.msra.mxu0 %v2824
  %3223 = vmatprep.subr.mxu0 %v2821
  %3224 = vmatpush2.msra.mxu0 %v2820
  %3225 = vmatprep.subr.mxu0 %v2817
  %3226 = vmatpush2.msra.mxu0 %v2816
  %3227 = vmatprep.subr.mxu0 %v2813
  %3228 = vmatpush2.msra.mxu0 %v2812
  %3229 = vmatprep.subr.mxu0 %v2809
  %3230 = vmatpush2.msra.mxu0 %v2808
  %3231 = vmatprep.subr.mxu0 %v2805
  %3232 = vmatpush2.msra.mxu0 %v2804
  %3233 = vmatprep.subr.mxu0 %v2801
  %3234 = vmatpush2.msra.mxu0 %v2800
  %3235 = vmatprep.subr.mxu0 %v2797
  %3236 = vmatpush2.msra.mxu0 %v2796
  %3237 = vmatprep.subr.mxu0 %v2793
  %3238 = vmatpush2.msra.mxu0 %v2792
  %3239 = vmatprep.subr.mxu0 %v2789
  %3240 = vmatpush2.msra.mxu0 %v2788
  %3241 = vmatprep.mubr.f32.mxu0 %v2693
  %3242 = vmatmul.mubr.f32.gmra.mxu0 %v2692
  %v3243 = vpop.f32.mrf.mxu0
  %v3244 = vadd.f32 0.0, %v3243
  %v3245 = vpop.f32.mrf.mxu0
  %v3246 = vadd.f32 0.0, %v3245
  %3247 = vmatprep.mubr.f32.mxu0 %v2697
  %3248 = vmatmul.mubr.f32.gmra.mxu0 %v2696
  %v3249 = vpop.f32.mrf.mxu0
  %v3250 = vadd.f32 0.0, %v3249
  %v3251 = vpop.f32.mrf.mxu0
  %v3252 = vadd.f32 0.0, %v3251
  %3253 = vmatprep.mubr.f32.mxu0 %v2701
  %3254 = vmatmul.mubr.f32.gmra.mxu0 %v2700
  %v3255 = vpop.f32.mrf.mxu0
  %v3256 = vadd.f32 0.0, %v3255
  %v3257 = vpop.f32.mrf.mxu0
  %v3258 = vadd.f32 0.0, %v3257
  %3259 = vmatprep.mubr.f32.mxu0 %v2705
  %3260 = vmatmul.mubr.f32.gmra.mxu0 %v2704
  %v3261 = vpop.f32.mrf.mxu0
  %v3262 = vadd.f32 0.0, %v3261
  %v3263 = vpop.f32.mrf.mxu0
  %v3264 = vadd.f32 0.0, %v3263
  %3265 = vmatprep.mubr.f32.mxu0 %v2709
  %3266 = vmatmul.mubr.f32.gmra.mxu0 %v2708
  %v3267 = vpop.f32.mrf.mxu0
  %v3268 = vadd.f32 0.0, %v3267
  %v3269 = vpop.f32.mrf.mxu0
  %v3270 = vadd.f32 0.0, %v3269
  %3271 = vmatprep.mubr.f32.mxu0 %v2713
  %3272 = vmatmul.mubr.f32.gmra.mxu0 %v2712
  %v3273 = vpop.f32.mrf.mxu0
  %v3274 = vadd.f32 0.0, %v3273
  %v3275 = vpop.f32.mrf.mxu0
  %v3276 = vadd.f32 0.0, %v3275
  %3277 = vmatprep.mubr.f32.mxu0 %v2717
  %3278 = vmatmul.mubr.f32.gmra.mxu0 %v2716
  %v3279 = vpop.f32.mrf.mxu0
  %v3280 = vadd.f32 0.0, %v3279
  %v3281 = vpop.f32.mrf.mxu0
  %v3282 = vadd.f32 0.0, %v3281
  %3283 = vdwg.mxu0
  %3284 = vmatprep.subr.mxu0 %v2913
  %3285 = vmatpush1.msra.mxu0 %v2912
  %3286 = vmatprep.subr.mxu0 %v2909
  %3287 = vmatpush1.msra.mxu0 %v2908
  %3288 = vmatprep.subr.mxu0 %v2905
  %3289 = vmatpush1.msra.mxu0 %v2904
  %3290 = vmatprep.subr.mxu0 %v2901
  %3291 = vmatpush1.msra.mxu0 %v2900
  %3292 = vmatprep.subr.mxu0 %v2897
  %3293 = vmatpush1.msra.mxu0 %v2896
  %3294 = vmatprep.subr.mxu0 %v2893
  %3295 = vmatpush1.msra.mxu0 %v2892
  %3296 = vmatprep.subr.mxu0 %v2889
  %3297 = vmatpush1.msra.mxu0 %v2888
  %3298 = vmatprep.subr.mxu0 %v2885
  %3299 = vmatpush1.msra.mxu0 %v2884
  %3300 = vmatprep.subr.mxu0 %v2881
  %3301 = vmatpush1.msra.mxu0 %v2880
  %3302 = vmatprep.subr.mxu0 %v2877
  %3303 = vmatpush1.msra.mxu0 %v2876
  %3304 = vmatprep.subr.mxu0 %v2873
  %3305 = vmatpush1.msra.mxu0 %v2872
  %3306 = vmatprep.subr.mxu0 %v2869
  %3307 = vmatpush1.msra.mxu0 %v2868
  %3308 = vmatprep.subr.mxu0 %v2865
  %3309 = vmatpush1.msra.mxu0 %v2864
  %3310 = vmatprep.subr.mxu0 %v2861
  %3311 = vmatpush1.msra.mxu0 %v2860
  %3312 = vmatprep.subr.mxu0 %v2857
  %3313 = vmatpush1.msra.mxu0 %v2856
  %3314 = vmatprep.subr.mxu0 %v2853
  %3315 = vmatpush1.msra.mxu0 %v2852
  %3316 = vmatprep.subr.mxu0 0.0
  %3317 = vmatpush2.msra.mxu0 0.0
  %3318 = vmatprep.subr.mxu0 0.0
  %3319 = vmatpush2.msra.mxu0 0.0
  %3320 = vmatprep.subr.mxu0 0.0
  %3321 = vmatpush2.msra.mxu0 0.0
  %3322 = vmatprep.subr.mxu0 0.0
  %3323 = vmatpush2.msra.mxu0 0.0
  %3324 = vmatprep.subr.mxu0 0.0
  %3325 = vmatpush2.msra.mxu0 0.0
  %3326 = vmatprep.subr.mxu0 0.0
  %3327 = vmatpush2.msra.mxu0 0.0
  %3328 = vmatprep.subr.mxu0 0.0
  %3329 = vmatpush2.msra.mxu0 0.0
  %3330 = vmatprep.subr.mxu0 0.0
  %3331 = vmatpush2.msra.mxu0 0.0
  %3332 = vmatprep.subr.mxu0 0.0
  %3333 = vmatpush2.msra.mxu0 0.0
  %3334 = vmatprep.subr.mxu0 %v2941
  %3335 = vmatpush2.msra.mxu0 %v2940
  %3336 = vmatprep.subr.mxu0 %v2937
  %3337 = vmatpush2.msra.mxu0 %v2936
  %3338 = vmatprep.subr.mxu0 %v2933
  %3339 = vmatpush2.msra.mxu0 %v2932
  %3340 = vmatprep.subr.mxu0 %v2929
  %3341 = vmatpush2.msra.mxu0 %v2928
  %3342 = vmatprep.subr.mxu0 %v2925
  %3343 = vmatpush2.msra.mxu0 %v2924
  %3344 = vmatprep.subr.mxu0 %v2921
  %3345 = vmatpush2.msra.mxu0 %v2920
  %3346 = vmatprep.subr.mxu0 %v2917
  %3347 = vmatpush2.msra.mxu0 %v2916
  %3348 = vmatprep.mubr.f32.mxu0 %v2943
  %3349 = vmatmul.mubr.f32.gmra.mxu0 %v2694
  %v3350 = vpop.f32.mrf.mxu0
  %v3351 = vadd.f32 %v3244, %v3350
  %v3352 = vpop.f32.mrf.mxu0
  %v3353 = vadd.f32 %v3246, %v3352
  %3354 = vmatprep.mubr.f32.mxu0 %v2946
  %3355 = vmatmul.mubr.f32.gmra.mxu0 %v2698
  %v3356 = vpop.f32.mrf.mxu0
  %v3357 = vadd.f32 %v3250, %v3356
  %v3358 = vpop.f32.mrf.mxu0
  %v3359 = vadd.f32 %v3252, %v3358
  %3360 = vmatprep.mubr.f32.mxu0 %v2949
  %3361 = vmatmul.mubr.f32.gmra.mxu0 %v2702
  %v3362 = vpop.f32.mrf.mxu0
  %v3363 = vadd.f32 %v3256, %v3362
  %v3364 = vpop.f32.mrf.mxu0
  %v3365 = vadd.f32 %v3258, %v3364
  %3366 = vmatprep.mubr.f32.mxu0 %v2952
  %3367 = vmatmul.mubr.f32.gmra.mxu0 %v2706
  %v3368 = vpop.f32.mrf.mxu0
  %v3369 = vadd.f32 %v3262, %v3368
  %v3370 = vpop.f32.mrf.mxu0
  %v3371 = vadd.f32 %v3264, %v3370
  %3372 = vmatprep.mubr.f32.mxu0 %v2955
  %3373 = vmatmul.mubr.f32.gmra.mxu0 %v2710
  %v3374 = vpop.f32.mrf.mxu0
  %v3375 = vadd.f32 %v3268, %v3374
  %v3376 = vpop.f32.mrf.mxu0
  %v3377 = vadd.f32 %v3270, %v3376
  %3378 = vmatprep.mubr.f32.mxu0 %v2958
  %3379 = vmatmul.mubr.f32.gmra.mxu0 %v2714
  %v3380 = vpop.f32.mrf.mxu0
  %v3381 = vadd.f32 %v3274, %v3380
  %v3382 = vpop.f32.mrf.mxu0
  %v3383 = vadd.f32 %v3276, %v3382
  %3384 = vmatprep.mubr.f32.mxu0 %v2961
  %3385 = vmatmul.mubr.f32.gmra.mxu0 %v2718
  %v3386 = vpop.f32.mrf.mxu0
  %v3387 = vadd.f32 %v3280, %v3386
  %v3388 = vpop.f32.mrf.mxu0
  %v3389 = vadd.f32 %v3282, %v3388
  %3390 = vdwg.mxu0
  %v3391 = vld [vmem:[%s7] sm:$0xf]
  %v3392 = vld [vmem:[%s8] sm:$0xf]
  %v3393 = vadd.f32 %v3137, %v3143
  %v3394 = vadd.f32 %v3393, %v3149
  %v3395 = vadd.f32 %v3394, %v3155
  %v3396 = vadd.f32 %v3395, %v3161
  %v3397 = vadd.f32 %v3396, %v3167
  %v3398 = vsel %vm2167, %v3173, 0.0
  %v3399 = vadd.f32 %v3397, %v3398
  %v3400 = vrot.slane %v3399, 4
  %v3401 = vadd.f32 %v3399, %v3400
  %v3402 = vrot.slane %v3401, 2
  %v3403 = vadd.f32 %v3401, %v3402
  %v3404 = vrot.slane %v3403, 1
  %v3405 = vadd.f32 %v3403, %v3404
  %v3406 = vadd.f32 %v3139, %v3145
  %v3407 = vadd.f32 %v3406, %v3151
  %v3408 = vadd.f32 %v3407, %v3157
  %v3409 = vadd.f32 %v3408, %v3163
  %v3410 = vadd.f32 %v3409, %v3169
  %v3411 = vsel %vm2167, %v3175, 0.0
  %v3412 = vadd.f32 %v3410, %v3411
  %v3413 = vrot.slane %v3412, 4
  %v3414 = vadd.f32 %v3412, %v3413
  %v3415 = vrot.slane %v3414, 2
  %v3416 = vadd.f32 %v3414, %v3415
  %v3417 = vrot.slane %v3416, 1
  %v3418 = vadd.f32 %v3416, %v3417
  %v3419 = vadd.f32 %v3351, %v3357
  %v3420 = vadd.f32 %v3419, %v3363
  %v3421 = vadd.f32 %v3420, %v3369
  %v3422 = vadd.f32 %v3421, %v3375
  %v3423 = vadd.f32 %v3422, %v3381
  %v3424 = vsel %vm2167, %v3387, 0.0
  %v3425 = vadd.f32 %v3423, %v3424
  %v3426 = vrot.slane %v3425, 4
  %v3427 = vadd.f32 %v3425, %v3426
  %v3428 = vrot.slane %v3427, 2
  %v3429 = vadd.f32 %v3427, %v3428
  %v3430 = vrot.slane %v3429, 1
  %v3431 = vadd.f32 %v3429, %v3430
  %v3432 = vsel %vm1710, %v3353, 0.0
  %v3433 = vsel %vm1710, %v3359, 0.0
  %v3434 = vadd.f32 %v3432, %v3433
  %v3435 = vsel %vm1710, %v3365, 0.0
  %v3436 = vadd.f32 %v3434, %v3435
  %v3437 = vsel %vm1710, %v3371, 0.0
  %v3438 = vadd.f32 %v3436, %v3437
  %v3439 = vsel %vm1710, %v3377, 0.0
  %v3440 = vadd.f32 %v3438, %v3439
  %v3441 = vsel %vm1710, %v3383, 0.0
  %v3442 = vadd.f32 %v3440, %v3441
  %v3443 = vsel %vm2213, %v3389, 0.0
  %v3444 = vadd.f32 %v3442, %v3443
  %v3445 = vrot.slane %v3444, 4
  %v3446 = vadd.f32 %v3444, %v3445
  %v3447 = vrot.slane %v3446, 2
  %v3448 = vadd.f32 %v3446, %v3447
  %v3449 = vrot.slane %v3448, 1
  %v3450 = vadd.f32 %v3448, %v3449
  %v3451 = vmul.f32 %v3405, %v2222
  %v3452 = vmul.f32 %v3418, %v2222
  %v3453 = vmul.f32 %v3431, %v2222
  %v3454 = vmul.f32 %v3450, %v2222
  %v3455 = vsub.f32 %v3137, %v3451
  %v3456 = vsub.f32 %v3139, %v3452
  %v3457 = vsub.f32 %v3351, %v3453
  %v3458 = vsub.f32 %v3353, %v3454
  %v3459 = vsub.f32 %v3143, %v3451
  %v3460 = vsub.f32 %v3145, %v3452
  %v3461 = vsub.f32 %v3357, %v3453
  %v3462 = vsub.f32 %v3359, %v3454
  %v3463 = vsub.f32 %v3149, %v3451
  %v3464 = vsub.f32 %v3151, %v3452
  %v3465 = vsub.f32 %v3363, %v3453
  %v3466 = vsub.f32 %v3365, %v3454
  %v3467 = vsub.f32 %v3155, %v3451
  %v3468 = vsub.f32 %v3157, %v3452
  %v3469 = vsub.f32 %v3369, %v3453
  %v3470 = vsub.f32 %v3371, %v3454
  %v3471 = vsub.f32 %v3161, %v3451
  %v3472 = vsub.f32 %v3163, %v3452
  %v3473 = vsub.f32 %v3375, %v3453
  %v3474 = vsub.f32 %v3377, %v3454
  %v3475 = vsub.f32 %v3167, %v3451
  %v3476 = vsub.f32 %v3169, %v3452
  %v3477 = vsub.f32 %v3381, %v3453
  %v3478 = vsub.f32 %v3383, %v3454
  %v3479 = vsub.f32 %v3173, %v3451
  %v3480 = vsub.f32 %v3175, %v3452
  %v3481 = vsub.f32 %v3387, %v3453
  %v3482 = vsub.f32 %v3389, %v3454
  %v3483 = vmul.f32 %v3455, %v3455
  %v3484 = vmul.f32 %v3456, %v3456
  %v3485 = vmul.f32 %v3457, %v3457
  %v3486 = vmul.f32 %v3458, %v3458
  %v3487 = vmul.f32 %v3459, %v3459
  %v3488 = vmul.f32 %v3460, %v3460
  %v3489 = vmul.f32 %v3461, %v3461
  %v3490 = vmul.f32 %v3462, %v3462
  %v3491 = vmul.f32 %v3463, %v3463
  %v3492 = vmul.f32 %v3464, %v3464
  %v3493 = vmul.f32 %v3465, %v3465
  %v3494 = vmul.f32 %v3466, %v3466
  %v3495 = vmul.f32 %v3467, %v3467
  %v3496 = vmul.f32 %v3468, %v3468
  %v3497 = vmul.f32 %v3469, %v3469
  %v3498 = vmul.f32 %v3470, %v3470
  %v3499 = vmul.f32 %v3471, %v3471
  %v3500 = vmul.f32 %v3472, %v3472
  %v3501 = vmul.f32 %v3473, %v3473
  %v3502 = vmul.f32 %v3474, %v3474
  %v3503 = vmul.f32 %v3475, %v3475
  %v3504 = vmul.f32 %v3476, %v3476
  %v3505 = vmul.f32 %v3477, %v3477
  %v3506 = vmul.f32 %v3478, %v3478
  %v3507 = vmul.f32 %v3479, %v3479
  %v3508 = vmul.f32 %v3480, %v3480
  %v3509 = vmul.f32 %v3481, %v3481
  %v3510 = vmul.f32 %v3482, %v3482
  %v3511 = vadd.f32 %v3483, %v3487
  %v3512 = vadd.f32 %v3511, %v3491
  %v3513 = vadd.f32 %v3512, %v3495
  %v3514 = vadd.f32 %v3513, %v3499
  %v3515 = vadd.f32 %v3514, %v3503
  %v3516 = vsel %vm2167, %v3507, 0.0
  %v3517 = vadd.f32 %v3515, %v3516
  %v3518 = vrot.slane %v3517, 4
  %v3519 = vadd.f32 %v3517, %v3518
  %v3520 = vrot.slane %v3519, 2
  %v3521 = vadd.f32 %v3519, %v3520
  %v3522 = vrot.slane %v3521, 1
  %v3523 = vadd.f32 %v3521, %v3522
  %v3524 = vadd.f32 %v3484, %v3488
  %v3525 = vadd.f32 %v3524, %v3492
  %v3526 = vadd.f32 %v3525, %v3496
  %v3527 = vadd.f32 %v3526, %v3500
  %v3528 = vadd.f32 %v3527, %v3504
  %v3529 = vsel %vm2167, %v3508, 0.0
  %v3530 = vadd.f32 %v3528, %v3529
  %v3531 = vrot.slane %v3530, 4
  %v3532 = vadd.f32 %v3530, %v3531
  %v3533 = vrot.slane %v3532, 2
  %v3534 = vadd.f32 %v3532, %v3533
  %v3535 = vrot.slane %v3534, 1
  %v3536 = vadd.f32 %v3534, %v3535
  %v3537 = vadd.f32 %v3485, %v3489
  %v3538 = vadd.f32 %v3537, %v3493
  %v3539 = vadd.f32 %v3538, %v3497
  %v3540 = vadd.f32 %v3539, %v3501
  %v3541 = vadd.f32 %v3540, %v3505
  %v3542 = vsel %vm2167, %v3509, 0.0
  %v3543 = vadd.f32 %v3541, %v3542
  %v3544 = vrot.slane %v3543, 4
  %v3545 = vadd.f32 %v3543, %v3544
  %v3546 = vrot.slane %v3545, 2
  %v3547 = vadd.f32 %v3545, %v3546
  %v3548 = vrot.slane %v3547, 1
  %v3549 = vadd.f32 %v3547, %v3548
  %v3550 = vsel %vm1710, %v3486, 0.0
  %v3551 = vsel %vm1710, %v3490, 0.0
  %v3552 = vadd.f32 %v3550, %v3551
  %v3553 = vsel %vm1710, %v3494, 0.0
  %v3554 = vadd.f32 %v3552, %v3553
  %v3555 = vsel %vm1710, %v3498, 0.0
  %v3556 = vadd.f32 %v3554, %v3555
  %v3557 = vsel %vm1710, %v3502, 0.0
  %v3558 = vadd.f32 %v3556, %v3557
  %v3559 = vsel %vm1710, %v3506, 0.0
  %v3560 = vadd.f32 %v3558, %v3559
  %v3561 = vsel %vm2213, %v3510, 0.0
  %v3562 = vadd.f32 %v3560, %v3561
  %v3563 = vrot.slane %v3562, 4
  %v3564 = vadd.f32 %v3562, %v3563
  %v3565 = vrot.slane %v3564, 2
  %v3566 = vadd.f32 %v3564, %v3565
  %v3567 = vrot.slane %v3566, 1
  %v3568 = vadd.f32 %v3566, %v3567
  %v3569 = vmul.f32 %v3523, %v2222
  %v3570 = vmul.f32 %v3536, %v2222
  %v3571 = vmul.f32 %v3549, %v2222
  %v3572 = vmul.f32 %v3568, %v2222
  %v3573 = vadd.f32 %v3569, 1e-05
  %v3574 = vadd.f32 %v3570, 1e-05
  %v3575 = vadd.f32 %v3571, 1e-05
  %v3576 = vadd.f32 %v3572, 1e-05
  %v3577 = vrsqrt.pop %v3573
  %v3578 = vrsqrt.pop %v3574
  %v3579 = vrsqrt.pop %v3575
  %v3580 = vrsqrt.pop %v3576
  %v3585 = vcombine.low %v3577, %v3578
  %v3586 = vcombine.low %v3579, %v3580
  %v3588 = vunpack.c.l.s4 1966171168
  %v3589 = vunpack.c.0.s8 %v3588
  %v3590 = vlaneseq
  %v3591 = vshrl.u32 %v3590, 7
  %v3592 = vsub.s32 %v3589, %v3591
  %v3593 = vrot.slane %v3585, %v3592
  %v3595 = vunpack.c.l.s4 1966171168
  %v3596 = vunpack.c.0.s8 %v3595
  %v3597 = vlaneseq
  %v3598 = vshrl.u32 %v3597, 7
  %v3599 = vsub.s32 %v3596, %v3598
  %v3600 = vrot.slane %v3586, %v3599
  %v3601 = vcombine.low %v3593, %v3600
  %v3603 = vunpack.c.l.s4 1966171168
  %v3604 = vunpack.c.0.s8 %v3603
  %v3605 = vlaneseq
  %v3606 = vshrl.u32 %v3605, 7
  %v3607 = vsub.s32 %v3604, %v3606
  %v3608 = vrot.slane %v3601, %v3607
  %v3610 = vmul.f32 %v3391, %v3608
  %v3612 = vlaneseq
  %v3613 = vshrl.u32 %v3612, 7
  %v3614 = vsub.s32 0, %v3613
  %v3615 = vrot.slane %v3610, %v3614
  %v3616 = vlaneseq
  %v3617 = vshrl.u32 %v3616, 7
  %v3618 = vsub.s32 1, %v3617
  %v3619 = vrot.slane %v3610, %v3618
  %v3620 = vlaneseq
  %v3621 = vshrl.u32 %v3620, 7
  %v3622 = vsub.s32 2, %v3621
  %v3623 = vrot.slane %v3610, %v3622
  %v3624 = vlaneseq
  %v3625 = vshrl.u32 %v3624, 7
  %v3626 = vsub.s32 3, %v3625
  %v3627 = vrot.slane %v3610, %v3626
  %v3632 = vmul.f32 %v3455, %v3615
  %v3633 = vmul.f32 %v3456, %v3619
  %v3634 = vmul.f32 %v3457, %v3623
  %v3635 = vmul.f32 %v3458, %v3627
  %v3636 = vmul.f32 %v3459, %v3615
  %v3637 = vmul.f32 %v3460, %v3619
  %v3638 = vmul.f32 %v3461, %v3623
  %v3639 = vmul.f32 %v3462, %v3627
  %v3640 = vmul.f32 %v3463, %v3615
  %v3641 = vmul.f32 %v3464, %v3619
  %v3642 = vmul.f32 %v3465, %v3623
  %v3643 = vmul.f32 %v3466, %v3627
  %v3644 = vmul.f32 %v3467, %v3615
  %v3645 = vmul.f32 %v3468, %v3619
  %v3646 = vmul.f32 %v3469, %v3623
  %v3647 = vmul.f32 %v3470, %v3627
  %v3648 = vmul.f32 %v3471, %v3615
  %v3649 = vmul.f32 %v3472, %v3619
  %v3650 = vmul.f32 %v3473, %v3623
  %v3651 = vmul.f32 %v3474, %v3627
  %v3652 = vmul.f32 %v3475, %v3615
  %v3653 = vmul.f32 %v3476, %v3619
  %v3654 = vmul.f32 %v3477, %v3623
  %v3655 = vmul.f32 %v3478, %v3627
  %v3656 = vmul.f32 %v3479, %v3615
  %v3657 = vmul.f32 %v3480, %v3619
  %v3658 = vmul.f32 %v3481, %v3623
  %v3659 = vmul.f32 %v3482, %v3627
  %v3661 = vlaneseq
  %v3662 = vshrl.u32 %v3661, 7
  %v3663 = vsub.s32 0, %v3662
  %v3664 = vrot.slane %v3392, %v3663
  %v3665 = vlaneseq
  %v3666 = vshrl.u32 %v3665, 7
  %v3667 = vsub.s32 1, %v3666
  %v3668 = vrot.slane %v3392, %v3667
  %v3669 = vlaneseq
  %v3670 = vshrl.u32 %v3669, 7
  %v3671 = vsub.s32 2, %v3670
  %v3672 = vrot.slane %v3392, %v3671
  %v3673 = vlaneseq
  %v3674 = vshrl.u32 %v3673, 7
  %v3675 = vsub.s32 3, %v3674
  %v3676 = vrot.slane %v3392, %v3675
  %v3681 = vadd.f32 %v3632, %v3664
  %v3682 = vadd.f32 %v3633, %v3668
  %v3683 = vadd.f32 %v3634, %v3672
  %v3684 = vadd.f32 %v3635, %v3676
  %v3685 = vadd.f32 %v3636, %v3664
  %v3686 = vadd.f32 %v3637, %v3668
  %v3687 = vadd.f32 %v3638, %v3672
  %v3688 = vadd.f32 %v3639, %v3676
  %v3689 = vadd.f32 %v3640, %v3664
  %v3690 = vadd.f32 %v3641, %v3668
  %v3691 = vadd.f32 %v3642, %v3672
  %v3692 = vadd.f32 %v3643, %v3676
  %v3693 = vadd.f32 %v3644, %v3664
  %v3694 = vadd.f32 %v3645, %v3668
  %v3695 = vadd.f32 %v3646, %v3672
  %v3696 = vadd.f32 %v3647, %v3676
  %v3697 = vadd.f32 %v3648, %v3664
  %v3698 = vadd.f32 %v3649, %v3668
  %v3699 = vadd.f32 %v3650, %v3672
  %v3700 = vadd.f32 %v3651, %v3676
  %v3701 = vadd.f32 %v3652, %v3664
  %v3702 = vadd.f32 %v3653, %v3668
  %v3703 = vadd.f32 %v3654, %v3672
  %v3704 = vadd.f32 %v3655, %v3676
  %v3705 = vadd.f32 %v3656, %v3664
  %v3706 = vadd.f32 %v3657, %v3668
  %v3707 = vadd.f32 %v3658, %v3672
  %v3708 = vadd.f32 %v3659, %v3676
  %3709 = vxpose.xlu0.b32.start [1/16] %v3681, 128
  %3710 = vxpose.xlu0.b32.cont [2/16] %v3685, 128
  %3711 = vxpose.xlu0.b32.cont [3/16] %v3689, 128
  %3712 = vxpose.xlu0.b32.cont [4/16] %v3693, 128
  %3713 = vxpose.xlu0.b32.cont [5/16] %v3697, 128
  %3714 = vxpose.xlu0.b32.cont [6/16] %v3701, 128
  %3715 = vxpose.xlu0.b32.cont [7/16] %v3705, 128
  %3716 = vxpose.xlu0.b32.cont [8/16] 0.0, 128
  %3717 = vxpose.xlu0.b32.cont [9/16] 0.0, 128
  %3718 = vxpose.xlu0.b32.cont [10/16] 0.0, 128
  %3719 = vxpose.xlu0.b32.cont [11/16] 0.0, 128
  %3720 = vxpose.xlu0.b32.cont [12/16] 0.0, 128
  %3721 = vxpose.xlu0.b32.cont [13/16] 0.0, 128
  %3722 = vxpose.xlu0.b32.cont [14/16] 0.0, 128
  %3723 = vxpose.xlu0.b32.cont [15/16] 0.0, 128
  %3724 = vxpose.xlu0.b32.end [16/16] 0.0, 128
  %v3725 = vpop.trf.xlu0
  %v3726 = vpop.trf.xlu0
  %v3727 = vpop.trf.xlu0
  %v3728 = vpop.trf.xlu0
  %v3729 = vpop.trf.xlu0
  %v3730 = vpop.trf.xlu0
  %v3731 = vpop.trf.xlu0
  %v3732 = vpop.trf.xlu0
  %v3733 = vpop.trf.xlu0
  %v3734 = vpop.trf.xlu0
  %v3735 = vpop.trf.xlu0
  %v3736 = vpop.trf.xlu0
  %v3737 = vpop.trf.xlu0
  %v3738 = vpop.trf.xlu0
  %v3739 = vpop.trf.xlu0
  %v3740 = vpop.trf.xlu0
  %3741 = vxpose.xlu0.b32.start [1/16] %v3682, 128
  %3742 = vxpose.xlu0.b32.cont [2/16] %v3686, 128
  %3743 = vxpose.xlu0.b32.cont [3/16] %v3690, 128
  %3744 = vxpose.xlu0.b32.cont [4/16] %v3694, 128
  %3745 = vxpose.xlu0.b32.cont [5/16] %v3698, 128
  %3746 = vxpose.xlu0.b32.cont [6/16] %v3702, 128
  %3747 = vxpose.xlu0.b32.cont [7/16] %v3706, 128
  %3748 = vxpose.xlu0.b32.cont [8/16] 0.0, 128
  %3749 = vxpose.xlu0.b32.cont [9/16] 0.0, 128
  %3750 = vxpose.xlu0.b32.cont [10/16] 0.0, 128
  %3751 = vxpose.xlu0.b32.cont [11/16] 0.0, 128
  %3752 = vxpose.xlu0.b32.cont [12/16] 0.0, 128
  %3753 = vxpose.xlu0.b32.cont [13/16] 0.0, 128
  %3754 = vxpose.xlu0.b32.cont [14/16] 0.0, 128
  %3755 = vxpose.xlu0.b32.cont [15/16] 0.0, 128
  %3756 = vxpose.xlu0.b32.end [16/16] 0.0, 128
  %v3757 = vpop.trf.xlu0
  %v3758 = vpop.trf.xlu0
  %v3759 = vpop.trf.xlu0
  %v3760 = vpop.trf.xlu0
  %v3761 = vpop.trf.xlu0
  %v3762 = vpop.trf.xlu0
  %v3763 = vpop.trf.xlu0
  %v3764 = vpop.trf.xlu0
  %v3765 = vpop.trf.xlu0
  %v3766 = vpop.trf.xlu0
  %v3767 = vpop.trf.xlu0
  %v3768 = vpop.trf.xlu0
  %v3769 = vpop.trf.xlu0
  %v3770 = vpop.trf.xlu0
  %v3771 = vpop.trf.xlu0
  %v3772 = vpop.trf.xlu0
  %3773 = vxpose.xlu0.b32.start [1/16] %v3683, 128
  %3774 = vxpose.xlu0.b32.cont [2/16] %v3687, 128
  %3775 = vxpose.xlu0.b32.cont [3/16] %v3691, 128
  %3776 = vxpose.xlu0.b32.cont [4/16] %v3695, 128
  %3777 = vxpose.xlu0.b32.cont [5/16] %v3699, 128
  %3778 = vxpose.xlu0.b32.cont [6/16] %v3703, 128
  %3779 = vxpose.xlu0.b32.cont [7/16] %v3707, 128
  %3780 = vxpose.xlu0.b32.cont [8/16] 0.0, 128
  %3781 = vxpose.xlu0.b32.cont [9/16] 0.0, 128
  %3782 = vxpose.xlu0.b32.cont [10/16] 0.0, 128
  %3783 = vxpose.xlu0.b32.cont [11/16] 0.0, 128
  %3784 = vxpose.xlu0.b32.cont [12/16] 0.0, 128
  %3785 = vxpose.xlu0.b32.cont [13/16] 0.0, 128
  %3786 = vxpose.xlu0.b32.cont [14/16] 0.0, 128
  %3787 = vxpose.xlu0.b32.cont [15/16] 0.0, 128
  %3788 = vxpose.xlu0.b32.end [16/16] 0.0, 128
  %v3789 = vpop.trf.xlu0
  %v3790 = vpop.trf.xlu0
  %v3791 = vpop.trf.xlu0
  %v3792 = vpop.trf.xlu0
  %v3793 = vpop.trf.xlu0
  %v3794 = vpop.trf.xlu0
  %v3795 = vpop.trf.xlu0
  %v3796 = vpop.trf.xlu0
  %v3797 = vpop.trf.xlu0
  %v3798 = vpop.trf.xlu0
  %v3799 = vpop.trf.xlu0
  %v3800 = vpop.trf.xlu0
  %v3801 = vpop.trf.xlu0
  %v3802 = vpop.trf.xlu0
  %v3803 = vpop.trf.xlu0
  %v3804 = vpop.trf.xlu0
  %3805 = vxpose.xlu0.b32.start [1/16] %v3684, 128
  %3806 = vxpose.xlu0.b32.cont [2/16] %v3688, 128
  %3807 = vxpose.xlu0.b32.cont [3/16] %v3692, 128
  %3808 = vxpose.xlu0.b32.cont [4/16] %v3696, 128
  %3809 = vxpose.xlu0.b32.cont [5/16] %v3700, 128
  %3810 = vxpose.xlu0.b32.cont [6/16] %v3704, 128
  %3811 = vxpose.xlu0.b32.cont [7/16] %v3708, 128
  %3812 = vxpose.xlu0.b32.cont [8/16] 0.0, 128
  %3813 = vxpose.xlu0.b32.cont [9/16] 0.0, 128
  %3814 = vxpose.xlu0.b32.cont [10/16] 0.0, 128
  %3815 = vxpose.xlu0.b32.cont [11/16] 0.0, 128
  %3816 = vxpose.xlu0.b32.cont [12/16] 0.0, 128
  %3817 = vxpose.xlu0.b32.cont [13/16] 0.0, 128
  %3818 = vxpose.xlu0.b32.cont [14/16] 0.0, 128
  %3819 = vxpose.xlu0.b32.cont [15/16] 0.0, 128
  %3820 = vxpose.xlu0.b32.end [16/16] 0.0, 128
  %v3821 = vpop.trf.xlu0
  %v3822 = vpop.trf.xlu0
  %v3823 = vpop.trf.xlu0
  %v3824 = vpop.trf.xlu0
  %v3825 = vpop.trf.xlu0
  %v3826 = vpop.trf.xlu0
  %v3827 = vpop.trf.xlu0
  %v3828 = vpop.trf.xlu0
  %v3829 = vpop.trf.xlu0
  %v3830 = vpop.trf.xlu0
  %v3831 = vpop.trf.xlu0
  %v3832 = vpop.trf.xlu0
  %v3833 = vpop.trf.xlu0
  %v3834 = vpop.trf.xlu0
  %v3835 = vpop.trf.xlu0
  %v3836 = vpop.trf.xlu0
  %vm3837 = vcmask 400384
  %3838 = vst.msk [vmem:[%s11] sm:$0xff] %vm3837, %v3725
  %3839 = vst.msk [vmem:[%s11 + $0x8] sm:$0xff] %vm3837, %v3726
  %3840 = vst.msk [vmem:[%s11 + $0x10] sm:$0xff] %vm3837, %v3727
  %3841 = vst.msk [vmem:[%s11 + $0x18] sm:$0xff] %vm3837, %v3728
  %3842 = vst.msk [vmem:[%s11 + $0x20] sm:$0xff] %vm3837, %v3729
  %3843 = vst.msk [vmem:[%s11 + $0x28] sm:$0xff] %vm3837, %v3730
  %3844 = vst.msk [vmem:[%s11 + $0x30] sm:$0xff] %vm3837, %v3731
  %3845 = vst.msk [vmem:[%s11 + $0x38] sm:$0xff] %vm3837, %v3732
  %3846 = vst.msk [vmem:[%s11 + $0x40] sm:$0xff] %vm3837, %v3733
  %3847 = vst.msk [vmem:[%s11 + $0x48] sm:$0xff] %vm3837, %v3734
  %3848 = vst.msk [vmem:[%s11 + $0x50] sm:$0xff] %vm3837, %v3735
  %3849 = vst.msk [vmem:[%s11 + $0x58] sm:$0xff] %vm3837, %v3736
  %3850 = vst.msk [vmem:[%s11 + $0x60] sm:$0xff] %vm3837, %v3737
  %3851 = vst.msk [vmem:[%s11 + $0x68] sm:$0xff] %vm3837, %v3738
  %3852 = vst.msk [vmem:[%s11 + $0x70] sm:$0xff] %vm3837, %v3739
  %3853 = vst.msk [vmem:[%s11 + $0x78] sm:$0xff] %vm3837, %v3740
  %3854 = vst.msk [vmem:[%s11 + $0x80] sm:$0xff] %vm3837, %v3757
  %3855 = vst.msk [vmem:[%s11 + $0x88] sm:$0xff] %vm3837, %v3758
  %3856 = vst.msk [vmem:[%s11 + $0x90] sm:$0xff] %vm3837, %v3759
  %3857 = vst.msk [vmem:[%s11 + $0x98] sm:$0xff] %vm3837, %v3760
  %3858 = vst.msk [vmem:[%s11 + $0xa0] sm:$0xff] %vm3837, %v3761
  %3859 = vst.msk [vmem:[%s11 + $0xa8] sm:$0xff] %vm3837, %v3762
  %3860 = vst.msk [vmem:[%s11 + $0xb0] sm:$0xff] %vm3837, %v3763
  %3861 = vst.msk [vmem:[%s11 + $0xb8] sm:$0xff] %vm3837, %v3764
  %3862 = vst.msk [vmem:[%s11 + $0xc0] sm:$0xff] %vm3837, %v3765
  %3863 = vst.msk [vmem:[%s11 + $0xc8] sm:$0xff] %vm3837, %v3766
  %3864 = vst.msk [vmem:[%s11 + $0xd0] sm:$0xff] %vm3837, %v3767
  %3865 = vst.msk [vmem:[%s11 + $0xd8] sm:$0xff] %vm3837, %v3768
  %3866 = vst.msk [vmem:[%s11 + $0xe0] sm:$0xff] %vm3837, %v3769
  %3867 = vst.msk [vmem:[%s11 + $0xe8] sm:$0xff] %vm3837, %v3770
  %3868 = vst.msk [vmem:[%s11 + $0xf0] sm:$0xff] %vm3837, %v3771
  %3869 = vst.msk [vmem:[%s11 + $0xf8] sm:$0xff] %vm3837, %v3772
  %3870 = vst.msk [vmem:[%s11 + $0x100] sm:$0xff] %vm3837, %v3789
  %3871 = vst.msk [vmem:[%s11 + $0x108] sm:$0xff] %vm3837, %v3790
  %3872 = vst.msk [vmem:[%s11 + $0x110] sm:$0xff] %vm3837, %v3791
  %3873 = vst.msk [vmem:[%s11 + $0x118] sm:$0xff] %vm3837, %v3792
  %3874 = vst.msk [vmem:[%s11 + $0x120] sm:$0xff] %vm3837, %v3793
  %3875 = vst.msk [vmem:[%s11 + $0x128] sm:$0xff] %vm3837, %v3794
  %3876 = vst.msk [vmem:[%s11 + $0x130] sm:$0xff] %vm3837, %v3795
  %3877 = vst.msk [vmem:[%s11 + $0x138] sm:$0xff] %vm3837, %v3796
  %3878 = vst.msk [vmem:[%s11 + $0x140] sm:$0xff] %vm3837, %v3797
  %3879 = vst.msk [vmem:[%s11 + $0x148] sm:$0xff] %vm3837, %v3798
  %3880 = vst.msk [vmem:[%s11 + $0x150] sm:$0xff] %vm3837, %v3799
  %3881 = vst.msk [vmem:[%s11 + $0x158] sm:$0xff] %vm3837, %v3800
  %3882 = vst.msk [vmem:[%s11 + $0x160] sm:$0xff] %vm3837, %v3801
  %3883 = vst.msk [vmem:[%s11 + $0x168] sm:$0xff] %vm3837, %v3802
  %3884 = vst.msk [vmem:[%s11 + $0x170] sm:$0xff] %vm3837, %v3803
  %3885 = vst.msk [vmem:[%s11 + $0x178] sm:$0xff] %vm3837, %v3804
  %3886 = vst.msk [vmem:[%s11 + $0x180] sm:$0xff] %vm3837, %v3821
  %3887 = vst.msk [vmem:[%s11 + $0x188] sm:$0xff] %vm3837, %v3822
  %3888 = vst.msk [vmem:[%s11 + $0x190] sm:$0xff] %vm3837, %v3823
  %3889 = vst.msk [vmem:[%s11 + $0x198] sm:$0xff] %vm3837, %v3824
  %3890 = vst.msk [vmem:[%s11 + $0x1a0] sm:$0xff] %vm3837, %v3825
  %3891 = vst.msk [vmem:[%s11 + $0x1a8] sm:$0xff] %vm3837, %v3826
  %3892 = vst.msk [vmem:[%s11 + $0x1b0] sm:$0xff] %vm3837, %v3827
  // Predicated region
  $region106: #{se_block_forward.1} parent=0 // pred_check
    _
  $region107: #{se_block_forward.1} parent=0 // pred_check_branch
    %3894 = sbr.rel (0) target = $region109
  $region108: #{se_block_forward.1} parent=0 // pred_region
    _
  $region109: #{se_block_forward.1} parent=0 // pred_fallthru
    _
  // Predicated region
  $region110: #{se_block_forward.1} parent=0 // pred_check
    _
  $region111: #{se_block_forward.1} parent=0 // pred_check_branch
    %3896 = sbr.rel (0) target = $region113
  $region112: #{se_block_forward.1} parent=0 // pred_region
    _
  $region113: #{se_block_forward.1} parent=0 // pred_fallthru
    _
  %3897 = vsyncmov [#allocation4]
  %s3898 = vpop.sfrf %3897
  %p3899 = scmp.eq.s32.totalorder %s3898, 0
  %p3900 = pneg %p3899
  %3902 = shalt.err (%p3900)
  %s3903 = scalar_lea.sflag [#allocation4], 1
  %3904 = vsyncmov %s3903
  %s3905 = vpop.sfrf %3904
  %p3906 = scmp.eq.s32.totalorder %s3905, 0
  %p3907 = pneg %p3906
  %3909 = shalt.err (%p3907)

</llo_original>
